<compile_context>
chip_gen: v6e
topology: v6e:2x2x1
jax: 0.10.0
libtpu: 0.0.40
codegen_flags: <defaults>
</compile_context>

<pallas_src>
import math
import functools

import jax
import jax.numpy as jnp
from jax import lax
from jax.experimental import pallas as pl
from jax.experimental.pallas import tpu as pltpu

_FALLBACK_VMEM = 48 * 1024 * 1024   # safe on all generations (v7x has 64 MiB/TC)


@functools.lru_cache(maxsize=None)
def _vmem_limit():
    """~70% of physical VMEM, capped: ~90 MiB on v5e/v6e (128 MiB), ~45 MiB on v7x."""
    try:
        cap = getattr(pltpu.get_tpu_info(), "vmem_capacity_bytes", None)
    except Exception:
        cap = None
    if not cap:
        return _FALLBACK_VMEM
    return max(32 * 1024 * 1024, min(int(cap * 0.7), 100 * 1024 * 1024))


def _tile_last(dim, preferred):
    """Last-dim tile: a multiple of 128 that divides `dim`, else the full dim."""
    if dim <= preferred:
        return dim
    best = 0
    for cand in range(128, preferred + 1, 128):
        if dim % cand == 0:
            best = cand
    return best if best else dim


def _tile_penult(dim, preferred):
    """Second-to-last-dim tile: a multiple of 8 that divides `dim`, else full dim."""
    if dim <= preferred:
        return dim
    best = 0
    for cand in range(8, preferred + 1, 8):
        if dim % cand == 0:
            best = cand
    return best if best else dim


# ----------------------------- RMSNorm kernel ------------------------------ #
def _rmsnorm_kernel(x_ref, w_ref, o_ref, *, eps):
    x = x_ref[...].astype(jnp.float32)
    var = jnp.mean(x * x, axis=-1, keepdims=True)
    inv = lax.rsqrt(var + eps)
    o_ref[...] = (x * inv * w_ref[...].astype(jnp.float32)).astype(o_ref.dtype)


def rmsnorm(x2d, w, eps, out_dtype=jnp.bfloat16, rows=512):
    M, D = x2d.shape
    tm = _tile_penult(M, rows)
    return pl.pallas_call(
        functools.partial(_rmsnorm_kernel, eps=eps),
        out_shape=jax.ShapeDtypeStruct((M, D), out_dtype),
        grid=(M // tm,),
        in_specs=[pl.BlockSpec((tm, D), lambda i: (i, 0)),
                  pl.BlockSpec((1, D), lambda i: (0, 0))],
        out_specs=pl.BlockSpec((tm, D), lambda i: (i, 0)),
        compiler_params=pltpu.CompilerParams(
            dimension_semantics=("parallel",),
            vmem_limit_bytes=_vmem_limit()),
    )(x2d, w.reshape(1, D))


# -------- Tiled (grouped) matmul + bias (+GELU) (+fp32 residual + RMSNorm) -- #
def _matmul_kernel(x_ref, w_ref, b_ref, *rest, act, nk, fuse_ln, eps):
    if fuse_ln:
        r_ref, g_ref, res_ref, norm_ref, acc_ref = rest
    else:
        o_ref, acc_ref = rest

    @pl.when(pl.program_id(3) == 0)
    def _():
        acc_ref[...] = jnp.zeros_like(acc_ref)

    acc_ref[...] += jnp.dot(x_ref[...], w_ref[0],
                            preferred_element_type=jnp.float32)

    @pl.when(pl.program_id(3) == nk - 1)
    def _():
        out = acc_ref[...] + b_ref[0].astype(jnp.float32)
        if act == "gelu":
            out = jax.nn.gelu(out, approximate=True)   # flash-attn fused_mlp gelu_approx
        if fuse_ln:
            out = out + r_ref[...]                     # fp32 residual add (residual_in_fp32)
            res_ref[...] = out
            var = jnp.mean(out * out, axis=-1, keepdims=True)
            inv = lax.rsqrt(var + eps)
            norm_ref[...] = (out * inv
                             * g_ref[...].astype(jnp.float32)).astype(norm_ref.dtype)
        else:
            o_ref[0] = out.astype(o_ref.dtype)


def matmul_bias(x, w, b, act=None, residual=None, ln_w=None, eps=1e-5,
                out_dtype=jnp.bfloat16, norm_dtype=jnp.bfloat16,
                tm=512, tn=512, tk=512):
    """Plain:   out[g] = act(x @ w[g] + b[g])                       -> (G, M, N)
       Fused:   res = x @ w[0] + b[0] + residual (fp32);
                normed = RMSNorm(res, ln_w)                         -> (res, normed)
    x: (M, K);  w: (G, K, N) bf16;  b: (G, N);  residual: (M, N) fp32.
    """
    M, K = x.shape
    G, K2, N = w.shape
    assert K2 == K
    fuse_ln = ln_w is not None

    tm = _tile_penult(M, tm)
    tk = _tile_last(K, tk)
    if fuse_ln:
        assert residual is not None and G == 1 and residual.shape == (M, N)
        tn = N                                   # fused RMSNorm needs the full row
    else:
        tn = _tile_last(N, tn)
    nk = K // tk
    grid = (G, M // tm, N // tn, nk)

    in_specs = [
        pl.BlockSpec((tm, tk), lambda g, i, j, k: (i, k)),
        pl.BlockSpec((1, tk, tn), lambda g, i, j, k: (g, k, j)),
        pl.BlockSpec((1, 1, tn), lambda g, i, j, k: (g, 0, j)),
    ]
    args = [x, w, b.reshape(G, 1, N)]
    if fuse_ln:
        in_specs += [
            pl.BlockSpec((tm, tn), lambda g, i, j, k: (i, j)),
            pl.BlockSpec((1, tn), lambda g, i, j, k: (0, j)),
        ]
        args += [residual, ln_w.reshape(1, N)]
        out_shape = (jax.ShapeDtypeStruct((M, N), jnp.float32),
                     jax.ShapeDtypeStruct((M, N), norm_dtype))
        out_specs = (pl.BlockSpec((tm, tn), lambda g, i, j, k: (i, j)),
                     pl.BlockSpec((tm, tn), lambda g, i, j, k: (i, j)))
    else:
        out_shape = jax.ShapeDtypeStruct((G, M, N), out_dtype)
        out_specs = pl.BlockSpec((1, tm, tn), lambda g, i, j, k: (g, i, j))

    return pl.pallas_call(
        functools.partial(_matmul_kernel, act=act, nk=nk, fuse_ln=fuse_ln, eps=eps),
        out_shape=out_shape,
        grid=grid,
        in_specs=in_specs,
        out_specs=out_specs,
        scratch_shapes=[pltpu.VMEM((tm, tn), jnp.float32)],
        compiler_params=pltpu.CompilerParams(
            dimension_semantics=("parallel", "parallel", "parallel", "arbitrary"),
            vmem_limit_bytes=_vmem_limit()),
    )(*args)


# ------------------- ALiBi causal flash attention kernel -------------------- #
def _attn_kernel(slopes_ref, q_ref, k_ref, v_ref, o_ref,
                 m_sc, l_sc, acc_sc, dist_sc, *, tq, tkv):
    h = pl.program_id(1)
    qi = pl.program_id(2)
    ki = pl.program_id(3)
    slope = slopes_ref[h]

    @pl.when(ki == 0)
    def _init():
        m_sc[...] = jnp.full_like(m_sc, -1e30)
        l_sc[...] = jnp.zeros_like(l_sc)
        acc_sc[...] = jnp.zeros_like(acc_sc)
        row = lax.broadcasted_iota(jnp.int32, (tq, tkv), 0)
        col = lax.broadcasted_iota(jnp.int32, (tq, tkv), 1)
        dist_sc[...] = (row - col).astype(jnp.float32)

    def scores():
        # softmax scale already folded into the q projection weights
        return lax.dot_general(q_ref[0, 0, 0], k_ref[0, 0, 0],
                               (((1,), (1,)), ((), ())),
                               preferred_element_type=jnp.float32)

    def online_update(s):
        m_prev = m_sc[...]
        m_new = jnp.maximum(m_prev, jnp.max(s, axis=-1, keepdims=True))
        alpha = jnp.exp(m_prev - m_new)
        p = jnp.exp(s - m_new)
        l_sc[...] = alpha * l_sc[...] + jnp.sum(p, axis=-1, keepdims=True)
        acc_sc[...] = alpha * acc_sc[...] + jnp.dot(
            p.astype(jnp.bfloat16), v_ref[0, 0, 0],
            preferred_element_type=jnp.float32)
        m_sc[...] = m_new

    @pl.when(ki < qi)                  # fully-visible tile: no causal select needed
    def _off_diag():
        offset = ((qi - ki) * tq).astype(jnp.float32)
        online_update(scores() - slope * (dist_sc[...] + offset))

    @pl.when(ki == qi)                 # diagonal tile: apply causal mask (finite)
    def _diag():
        d = dist_sc[...]
        online_update(jnp.where(d >= 0.0, scores() - slope * d, -1e30))

    @pl.when(ki == qi)                 # last visible tile for this q block
    def _finalize():
        inv = pl.reciprocal(l_sc[...], approx=True)
        o_ref[0, 0] = (acc_sc[...] * inv).astype(o_ref.dtype)


def alibi_flash_attention(qkv, slopes, tile=512):
    """qkv: (3, B, H, S, Dh) bf16 -> (B, H, S, Dh) bf16; causal, ALiBi per head."""
    _, B, H, S, Dh = qkv.shape
    t = _tile_penult(S, tile)
    nq = S // t
    kernel = functools.partial(_attn_kernel, tq=t, tkv=t)

    # index_maps receive the scalar-prefetch (slopes) ref as a trailing arg.
    # k/v indices are clamped to min(ki, qi): upper-triangle (causally skipped)
    # tiles re-use the previous block, so no K/V DMA is issued for them.
    grid_spec = pltpu.PrefetchScalarGridSpec(
        num_scalar_prefetch=1,
        grid=(B, H, nq, nq),
        in_specs=[
            pl.BlockSpec((1, 1, 1, t, Dh),
                         lambda b, h, qi, ki, sl: (0, b, h, qi, 0)),
            pl.BlockSpec((1, 1, 1, t, Dh),
                         lambda b, h, qi, ki, sl: (1, b, h, jnp.minimum(ki, qi), 0)),
            pl.BlockSpec((1, 1, 1, t, Dh),
                         lambda b, h, qi, ki, sl: (2, b, h, jnp.minimum(ki, qi), 0)),
        ],
        out_specs=pl.BlockSpec((1, 1, t, Dh),
                               lambda b, h, qi, ki, sl: (b, h, qi, 0)),
        scratch_shapes=[
            pltpu.VMEM((t, 1), jnp.float32),    # running max
            pltpu.VMEM((t, 1), jnp.float32),    # running sum
            pltpu.VMEM((t, Dh), jnp.float32),   # output accumulator
            pltpu.VMEM((t, t), jnp.float32),    # cached local (row - col) tile
        ])
    return pl.pallas_call(
        kernel,
        out_shape=jax.ShapeDtypeStruct((B, H, S, Dh), jnp.bfloat16),
        grid_spec=grid_spec,
        compiler_params=pltpu.CompilerParams(
            dimension_semantics=("parallel", "parallel", "parallel", "arbitrary"),
            vmem_limit_bytes=_vmem_limit()),
    )(slopes, qkv, qkv, qkv)


# ------------------------------- Model glue -------------------------------- #
def get_alibi_slopes(nheads):
    def pow2(n):
        start = 2.0 ** (-(2.0 ** -(math.log2(n) - 3)))
        return [start * (start ** i) for i in range(n)]
    if math.log2(nheads).is_integer():
        return pow2(nheads)
    closest = 2 ** math.floor(math.log2(nheads))
    return pow2(closest) + get_alibi_slopes(2 * closest)[0::2][: nheads - closest]


def init_params(key, ndim, nhead, nlayer):
    """Raw fp32 parameters matching the torch module layout."""
    std = 0.02
    keys = jax.random.split(key, nlayer * 4)
    layers = []
    for l in range(nlayer):
        k0, k1, k2, k3 = keys[4 * l: 4 * l + 4]
        layers.append(dict(
            ln1_w=jnp.ones((ndim,), jnp.float32),
            ln2_w=jnp.ones((ndim,), jnp.float32),
            # Wqkv stored as (3, D, D): torch's (D, 3D) Wqkv reshaped so q/k/v are groups.
            Wqkv=std * jax.random.normal(k0, (3, ndim, ndim), jnp.float32),
            bqkv=jnp.zeros((3, ndim), jnp.float32),
            Wout=(std / math.sqrt(2 * nlayer))
                 * jax.random.normal(k1, (ndim, ndim), jnp.float32),
            bout=jnp.zeros((ndim,), jnp.float32),
            Wfc1=std * jax.random.normal(k2, (ndim, 4 * ndim), jnp.float32),
            bfc1=jnp.zeros((4 * ndim,), jnp.float32),
            Wfc2=(std / math.sqrt(2 * nlayer))
                 * jax.random.normal(k3, (4 * ndim, ndim), jnp.float32),
            bfc2=jnp.zeros((ndim,), jnp.float32),
        ))
    return dict(layers=layers, lnf_w=jnp.ones((ndim,), jnp.float32))


def prepare_params(raw, nhead):
    """One-time prep: cast weights to bf16 (autocast), fold the 1/sqrt(Dh)
    softmax scale into the q projection, add group dims, build ALiBi slopes."""
    D = raw["lnf_w"].shape[0]
    Dh = D // nhead
    scale = 1.0 / math.sqrt(Dh)
    qscale = jnp.array([scale, 1.0, 1.0], jnp.float32)
    layers = []
    for p in raw["layers"]:
        layers.append(dict(
            ln1_w=p["ln1_w"],
            ln2_w=p["ln2_w"],
            Wqkv=(p["Wqkv"] * qscale.reshape(3, 1, 1)).astype(jnp.bfloat16),
            bqkv=p["bqkv"] * qscale.reshape(3, 1),
            Wout=p["Wout"][None].astype(jnp.bfloat16),
            bout=p["bout"][None],
            Wfc1=p["Wfc1"][None].astype(jnp.bfloat16),
            bfc1=p["bfc1"][None],
            Wfc2=p["Wfc2"][None].astype(jnp.bfloat16),
            bfc2=p["bfc2"][None],
        ))
    return dict(layers=layers, lnf_w=raw["lnf_w"],
                slopes=jnp.asarray(get_alibi_slopes(nhead), jnp.float32))


def gpt_layer_forward(hidden_states, params, nhead, eps=1e-5):
    orig_dtype = hidden_states.dtype
    B, S, D = hidden_states.shape
    H = nhead
    Dh = D // H
    M = B * S
    layers = params["layers"]
    L = len(layers)

    # fp32 residual stream (residual_in_fp32=True); dropout = identity (eval).
    residual = hidden_states.astype(jnp.float32).reshape(M, D)
    normed = rmsnorm(residual, layers[0]["ln1_w"], eps)                       # (M, D) bf16

    for l, p in enumerate(layers):
        # ---- attention sub-block (pre-norm) ----
        qkv = matmul_bias(normed, p["Wqkv"], p["bqkv"])                       # (3, M, D) bf16
        qkv = qkv.reshape(3, B, S, H, Dh).transpose(0, 1, 3, 2, 4)            # (3, B, H, S, Dh)
        ctx = alibi_flash_attention(qkv, params["slopes"])                    # (B, H, S, Dh) bf16
        ctx = ctx.transpose(0, 2, 1, 3).reshape(M, D)
        # out-projection + fp32 residual add + fused ln2
        residual, normed = matmul_bias(ctx, p["Wout"], p["bout"],
                                       residual=residual, ln_w=p["ln2_w"], eps=eps)
        # ---- MLP sub-block (pre-norm) ----
        h1 = matmul_bias(normed, p["Wfc1"], p["bfc1"], act="gelu")[0]         # (M, 4D) bf16
        last = (l == L - 1)
        next_ln = params["lnf_w"] if last else layers[l + 1]["ln1_w"]
        # fc2 + fp32 residual add + fused next-ln (ln1 of next layer, or ln_f)
        residual, normed = matmul_bias(
            h1, p["Wfc2"], p["bfc2"], residual=residual, ln_w=next_ln, eps=eps,
            norm_dtype=jnp.float32 if last else jnp.bfloat16)

    # `normed` after the last layer is ln_f(residual) in fp32.
    # TODO(synk): attention_mask_in_length / inference_params (KV-cache decode)
    # paths are not implemented; this is the full-sequence causal forward.
    return normed.reshape(B, S, D).astype(orig_dtype)


if __name__ == "__main__":
    ndim, nhead, nlayer = 64, 4, 2        # small config consistent with GPTLayer(ndim, nhead, nlayer)
    B, S = 2, 16
    key = jax.random.PRNGKey(0)
    kx, kp = jax.random.split(key)
    x = jax.random.normal(kx, (B, S, ndim), dtype=jnp.float32)
    params = prepare_params(init_params(kp, ndim, nhead, nlayer), nhead)

    fwd = jax.jit(functools.partial(gpt_layer_forward, nhead=nhead))
    out = fwd(x, params)
    jax.block_until_ready(out)
    assert out.shape == (B, S, ndim)
    assert out.dtype == jnp.float32
    assert bool(jnp.all(jnp.isfinite(out)))
    print("KERNEL_OK")
</pallas_src>

<mosaic_0001>
module attributes {stable_mosaic.version = 11 : i64} {
  func.func @_rmsnorm_kernel(%arg0: i32, %arg1: memref<32x64xf32, #tpu.memory_space<vmem>>, %arg2: memref<1x64xf32, #tpu.memory_space<vmem>>, %arg3: memref<32x64xbf16, #tpu.memory_space<vmem>>) attributes {dimension_semantics = [#tpu.dimension_semantics<parallel>], iteration_bounds = array<i64: 1>, scalar_prefetch = 0 : i64, scratch_operands = 0 : i64, tpu.core_type = #tpu.core_type<tc>, window_params = [{transform_indices = @transform_0, window_bounds = array<i64: 32, 64>}, {pipeline_mode = #tpu.pipeline_mode<synchronous>, transform_indices = @transform_1, window_bounds = array<i64: 1, 64>}, {transform_indices = @transform_2, window_bounds = array<i64: 32, 64>}]} {
    %c0 = arith.constant 0 : index
    %c0_0 = arith.constant 0 : index
    %0 = vector.load %arg1[%c0, %c0_0] : memref<32x64xf32, #tpu.memory_space<vmem>>, vector<32x64xf32>
    %1 = arith.mulf %0, %0 : vector<32x64xf32>
    %cst = arith.constant dense<0.000000e+00> : vector<32xf32>
    %2 = vector.multi_reduction <add>, %1, %cst [1] : vector<32x64xf32> to vector<32xf32>
    %3 = vector.shape_cast %2 : vector<32xf32> to vector<32x1xf32>
    %cst_1 = arith.constant 6.400000e+01 : f32
    %4 = vector.broadcast %cst_1 : f32 to vector<32x1xf32>
    %5 = arith.divf %3, %4 : vector<32x1xf32>
    %cst_2 = arith.constant 9.99999974E-6 : f32
    %6 = vector.broadcast %cst_2 : f32 to vector<32x1xf32>
    %7 = arith.addf %5, %6 : vector<32x1xf32>
    %8 = math.rsqrt %7 : vector<32x1xf32>
    %9 = vector.broadcast %8 : vector<32x1xf32> to vector<32x64xf32>
    %10 = arith.mulf %0, %9 : vector<32x64xf32>
    %c0_3 = arith.constant 0 : index
    %c0_4 = arith.constant 0 : index
    %11 = vector.load %arg2[%c0_3, %c0_4] : memref<1x64xf32, #tpu.memory_space<vmem>>, vector<1x64xf32>
    %12 = vector.broadcast %11 : vector<1x64xf32> to vector<32x64xf32>
    %13 = arith.mulf %10, %12 : vector<32x64xf32>
    %14 = arith.truncf %13 : vector<32x64xf32> to vector<32x64xbf16>
    %c0_5 = arith.constant 0 : index
    %c0_6 = arith.constant 0 : index
    %15 = vector.load %arg3[%c0_5, %c0_6] : memref<32x64xbf16, #tpu.memory_space<vmem>>, vector<32x64xbf16>
    tpu.vector_store %arg3[%c0_5, %c0_6], %14 {strides = array<i32>} : memref<32x64xbf16, #tpu.memory_space<vmem>>, vector<32x64xbf16>,
    return
  }
  func.func @transform_0(%arg0: i32) -> (i32, i32) {
    %c0_i32 = arith.constant 0 : i32
    %c0_i32_0 = arith.constant 0 : i32
    return %arg0, %c0_i32 : i32, i32
  }
  func.func @transform_1(%arg0: i32) -> (i32, i32) {
    %c0_i32 = arith.constant 0 : i32
    %c0_i32_0 = arith.constant 0 : i32
    %c0_i32_1 = arith.constant 0 : i32
    return %c0_i32, %c0_i32_0 : i32, i32
  }
  func.func @transform_2(%arg0: i32) -> (i32, i32) {
    %c0_i32 = arith.constant 0 : i32
    %c0_i32_0 = arith.constant 0 : i32
    return %arg0, %c0_i32 : i32, i32
  }
}

module attributes {stable_mosaic.version = 11 : i64} {
  func.func @_matmul_kernel(%arg0: i32, %arg1: i32, %arg2: i32, %arg3: i32, %arg4: memref<32x64xbf16, #tpu.memory_space<vmem>>, %arg5: memref<1x64x64xbf16, #tpu.memory_space<vmem>>, %arg6: memref<1x1x64xf32, #tpu.memory_space<vmem>>, %arg7: memref<1x32x64xbf16, #tpu.memory_space<vmem>>, %arg8: memref<32x64xf32, #tpu.memory_space<vmem>>) attributes {dimension_semantics = [#tpu.dimension_semantics<parallel>, #tpu.dimension_semantics<parallel>, #tpu.dimension_semantics<parallel>, #tpu.dimension_semantics<arbitrary>], iteration_bounds = array<i64: 3, 1, 1, 1>, scalar_prefetch = 0 : i64, scratch_operands = 1 : i64, tpu.core_type = #tpu.core_type<tc>, window_params = [{transform_indices = @transform_0, window_bounds = array<i64: 32, 64>}, {transform_indices = @transform_1, window_bounds = array<i64: 1, 64, 64>}, {transform_indices = @transform_2, window_bounds = array<i64: 1, 1, 64>}, {transform_indices = @transform_3, window_bounds = array<i64: 1, 32, 64>}]} {
    %c0_i32 = arith.constant 0 : i32
    %0 = arith.cmpi eq, %arg3, %c0_i32 : i32
    %1 = arith.extui %0 : i1 to i32
    %c0_i32_0 = arith.constant 0 : i32
    %2 = arith.cmpi ne, %1, %c0_i32_0 : i32
    scf.if %2 {
      %cst_11 = arith.constant 0.000000e+00 : f32
      %13 = vector.broadcast %cst_11 : f32 to vector<32x64xf32>
      %c0_12 = arith.constant 0 : index
      %c0_13 = arith.constant 0 : index
      %14 = vector.load %arg8[%c0_12, %c0_13] : memref<32x64xf32, #tpu.memory_space<vmem>>, vector<32x64xf32>
      tpu.vector_store %arg8[%c0_12, %c0_13], %13 {strides = array<i32>} : memref<32x64xf32, #tpu.memory_space<vmem>>, vector<32x64xf32>,
    } else {
    }
    %c0 = arith.constant 0 : index
    %c0_1 = arith.constant 0 : index
    %3 = vector.load %arg8[%c0, %c0_1] : memref<32x64xf32, #tpu.memory_space<vmem>>, vector<32x64xf32>
    %c0_2 = arith.constant 0 : index
    %c0_3 = arith.constant 0 : index
    %4 = vector.load %arg4[%c0_2, %c0_3] : memref<32x64xbf16, #tpu.memory_space<vmem>>, vector<32x64xbf16>
    %c0_4 = arith.constant 0 : index
    %c0_5 = arith.constant 0 : index
    %c0_6 = arith.constant 0 : index
    %5 = vector.load %arg5[%c0_4, %c0_5, %c0_6] : memref<1x64x64xbf16, #tpu.memory_space<vmem>>, vector<1x64x64xbf16>
    %6 = vector.shape_cast %5 : vector<1x64x64xbf16> to vector<64x64xbf16>
    %cst = arith.constant dense<0.000000e+00> : vector<32x64xf32>
    %7 = tpu.matmul %4, %6, %cst {dimension_numbers = #tpu.dot_dimension_numbers<[1], [0], [0], [1], [0, 0, 1, 1], [], []>} : vector<32x64xbf16>, vector<64x64xbf16>, vector<32x64xf32> -> vector<32x64xf32>
    %8 = arith.addf %3, %7 : vector<32x64xf32>
    %c0_7 = arith.constant 0 : index
    %c0_8 = arith.constant 0 : index
    %9 = vector.load %arg8[%c0_7, %c0_8] : memref<32x64xf32, #tpu.memory_space<vmem>>, vector<32x64xf32>
    tpu.vector_store %arg8[%c0_7, %c0_8], %8 {strides = array<i32>} : memref<32x64xf32, #tpu.memory_space<vmem>>, vector<32x64xf32>,
    %c0_i32_9 = arith.constant 0 : i32
    %10 = arith.cmpi eq, %arg3, %c0_i32_9 : i32
    %11 = arith.extui %10 : i1 to i32
    %c0_i32_10 = arith.constant 0 : i32
    %12 = arith.cmpi ne, %11, %c0_i32_10 : i32
    scf.if %12 {
      %c0_11 = arith.constant 0 : index
      %c0_12 = arith.constant 0 : index
      %13 = vector.load %arg8[%c0_11, %c0_12] : memref<32x64xf32, #tpu.memory_space<vmem>>, vector<32x64xf32>
      %c0_13 = arith.constant 0 : index
      %c0_14 = arith.constant 0 : index
      %c0_15 = arith.constant 0 : index
      %14 = vector.load %arg6[%c0_13, %c0_14, %c0_15] : memref<1x1x64xf32, #tpu.memory_space<vmem>>, vector<1x1x64xf32>
      %15 = vector.shape_cast %14 : vector<1x1x64xf32> to vector<1x64xf32>
      %16 = vector.broadcast %15 : vector<1x64xf32> to vector<32x64xf32>
      %17 = arith.addf %13, %16 : vector<32x64xf32>
      %18 = arith.truncf %17 : vector<32x64xf32> to vector<32x64xbf16>
      %c0_16 = arith.constant 0 : index
      %c0_17 = arith.constant 0 : index
      %c0_18 = arith.constant 0 : index
      %19 = vector.load %arg7[%c0_16, %c0_17, %c0_18] : memref<1x32x64xbf16, #tpu.memory_space<vmem>>, vector<1x32x64xbf16>
      %20 = vector.shape_cast %19 : vector<1x32x64xbf16> to vector<32x64xbf16>
      %21 = vector.shape_cast %18 : vector<32x64xbf16> to vector<1x32x64xbf16>
      tpu.vector_store %arg7[%c0_16, %c0_17, %c0_18], %21 {strides = array<i32>} : memref<1x32x64xbf16, #tpu.memory_space<vmem>>, vector<1x32x64xbf16>,
    } else {
    }
    return
  }
  func.func @transform_0(%arg0: i32, %arg1: i32, %arg2: i32, %arg3: i32) -> (i32, i32) {
    %c0_i32 = arith.constant 0 : i32
    return %arg1, %arg3 : i32, i32
  }
  func.func @transform_1(%arg0: i32, %arg1: i32, %arg2: i32, %arg3: i32) -> (i32, i32, i32) {
    %c0_i32 = arith.constant 0 : i32
    return %arg0, %arg3, %arg2 : i32, i32, i32
  }
  func.func @transform_2(%arg0: i32, %arg1: i32, %arg2: i32, %arg3: i32) -> (i32, i32, i32) {
    %c0_i32 = arith.constant 0 : i32
    %c0_i32_0 = arith.constant 0 : i32
    return %arg0, %c0_i32, %arg2 : i32, i32, i32
  }
  func.func @transform_3(%arg0: i32, %arg1: i32, %arg2: i32, %arg3: i32) -> (i32, i32, i32) {
    %c0_i32 = arith.constant 0 : i32
    return %arg0, %arg1, %arg2 : i32, i32, i32
  }
}

module attributes {stable_mosaic.version = 11 : i64} {
  func.func @_attn_kernel(%arg0: i32, %arg1: i32, %arg2: i32, %arg3: i32, %arg4: memref<4xf32, #tpu.memory_space<smem>>, %arg5: memref<1x1x1x16x16xbf16, #tpu.memory_space<vmem>>, %arg6: memref<1x1x1x16x16xbf16, #tpu.memory_space<vmem>>, %arg7: memref<1x1x1x16x16xbf16, #tpu.memory_space<vmem>>, %arg8: memref<1x1x16x16xbf16, #tpu.memory_space<vmem>>, %arg9: memref<16x1xf32, #tpu.memory_space<vmem>>, %arg10: memref<16x1xf32, #tpu.memory_space<vmem>>, %arg11: memref<16x16xf32, #tpu.memory_space<vmem>>, %arg12: memref<16x16xf32, #tpu.memory_space<vmem>>) attributes {dimension_semantics = [#tpu.dimension_semantics<parallel>, #tpu.dimension_semantics<parallel>, #tpu.dimension_semantics<parallel>, #tpu.dimension_semantics<arbitrary>], iteration_bounds = array<i64: 2, 4, 1, 1>, scalar_prefetch = 1 : i64, scratch_operands = 4 : i64, tpu.core_type = #tpu.core_type<tc>, window_params = [{transform_indices = @transform_0, window_bounds = array<i64: 1, 1, 1, 16, 16>}, {transform_indices = @transform_1, window_bounds = array<i64: 1, 1, 1, 16, 16>}, {transform_indices = @transform_2, window_bounds = array<i64: 1, 1, 1, 16, 16>}, {transform_indices = @transform_3, window_bounds = array<i64: 1, 1, 16, 16>}]} {
    %0 = arith.index_cast %arg1 : i32 to index
    %1 = memref.load %arg4[%0] : memref<4xf32, #tpu.memory_space<smem>>
    %c0_i32 = arith.constant 0 : i32
    %2 = arith.cmpi eq, %arg3, %c0_i32 : i32
    %3 = arith.extui %2 : i1 to i32
    %c0_i32_0 = arith.constant 0 : i32
    %4 = arith.cmpi ne, %3, %c0_i32_0 : i32
    scf.if %4 {
      %cst = arith.constant -1.000000e+30 : f32
      %14 = vector.broadcast %cst : f32 to vector<16x1xf32>
      %c0 = arith.constant 0 : index
      %c0_4 = arith.constant 0 : index
      %15 = vector.load %arg9[%c0, %c0_4] : memref<16x1xf32, #tpu.memory_space<vmem>>, vector<16x1xf32>
      tpu.vector_store %arg9[%c0, %c0_4], %14 {strides = array<i32>} : memref<16x1xf32, #tpu.memory_space<vmem>>, vector<16x1xf32>,
      %cst_5 = arith.constant 0.000000e+00 : f32
      %16 = vector.broadcast %cst_5 : f32 to vector<16x1xf32>
      %c0_6 = arith.constant 0 : index
      %c0_7 = arith.constant 0 : index
      %17 = vector.load %arg10[%c0_6, %c0_7] : memref<16x1xf32, #tpu.memory_space<vmem>>, vector<16x1xf32>
      tpu.vector_store %arg10[%c0_6, %c0_7], %16 {strides = array<i32>} : memref<16x1xf32, #tpu.memory_space<vmem>>, vector<16x1xf32>,
      %cst_8 = arith.constant 0.000000e+00 : f32
      %18 = vector.broadcast %cst_8 : f32 to vector<16x16xf32>
      %c0_9 = arith.constant 0 : index
      %c0_10 = arith.constant 0 : index
      %19 = vector.load %arg11[%c0_9, %c0_10] : memref<16x16xf32, #tpu.memory_space<vmem>>, vector<16x16xf32>
      tpu.vector_store %arg11[%c0_9, %c0_10], %18 {strides = array<i32>} : memref<16x16xf32, #tpu.memory_space<vmem>>, vector<16x16xf32>,
      %20 = tpu.iota {dimensions = array<i32: 0>} : vector<16x16xi32>
      %21 = tpu.iota {dimensions = array<i32: 1>} : vector<16x16xi32>
      %22 = arith.subi %20, %21 : vector<16x16xi32>
      %23 = arith.sitofp %22 : vector<16x16xi32> to vector<16x16xf32>
      %c0_11 = arith.constant 0 : index
      %c0_12 = arith.constant 0 : index
      %24 = vector.load %arg12[%c0_11, %c0_12] : memref<16x16xf32, #tpu.memory_space<vmem>>, vector<16x16xf32>
      tpu.vector_store %arg12[%c0_11, %c0_12], %23 {strides = array<i32>} : memref<16x16xf32, #tpu.memory_space<vmem>>, vector<16x16xf32>,
    } else {
    }
    %5 = arith.cmpi slt, %arg3, %arg2 : i32
    %6 = arith.extui %5 : i1 to i32
    %c0_i32_1 = arith.constant 0 : i32
    %7 = arith.cmpi ne, %6, %c0_i32_1 : i32
    scf.if %7 {
      %14 = arith.subi %arg2, %arg3 : i32
      %c16_i32 = arith.constant 16 : i32
      %15 = arith.muli %14, %c16_i32 : i32
      %16 = arith.sitofp %15 : i32 to f32
      %c0 = arith.constant 0 : index
      %c0_4 = arith.constant 0 : index
      %c0_5 = arith.constant 0 : index
      %c0_6 = arith.constant 0 : index
      %c0_7 = arith.constant 0 : index
      %17 = vector.load %arg5[%c0, %c0_4, %c0_5, %c0_6, %c0_7] : memref<1x1x1x16x16xbf16, #tpu.memory_space<vmem>>, vector<1x1x1x16x16xbf16>
      %18 = vector.shape_cast %17 : vector<1x1x1x16x16xbf16> to vector<16x16xbf16>
      %c0_8 = arith.constant 0 : index
      %c0_9 = arith.constant 0 : index
      %c0_10 = arith.constant 0 : index
      %c0_11 = arith.constant 0 : index
      %c0_12 = arith.constant 0 : index
      %19 = vector.load %arg6[%c0_8, %c0_9, %c0_10, %c0_11, %c0_12] : memref<1x1x1x16x16xbf16, #tpu.memory_space<vmem>>, vector<1x1x1x16x16xbf16>
      %20 = vector.shape_cast %19 : vector<1x1x1x16x16xbf16> to vector<16x16xbf16>
      %cst = arith.constant dense<0.000000e+00> : vector<16x16xf32>
      %21 = tpu.matmul %18, %20, %cst {dimension_numbers = #tpu.dot_dimension_numbers<[1], [1], [0], [0], [0, 0, 1, 0], [], []>} : vector<16x16xbf16>, vector<16x16xbf16>, vector<16x16xf32> -> vector<16x16xf32>
      %c0_13 = arith.constant 0 : index
      %c0_14 = arith.constant 0 : index
      %22 = vector.load %arg12[%c0_13, %c0_14] : memref<16x16xf32, #tpu.memory_space<vmem>>, vector<16x16xf32>
      %23 = vector.broadcast %16 : f32 to vector<16x16xf32>
      %24 = arith.addf %22, %23 : vector<16x16xf32>
      %25 = vector.broadcast %1 : f32 to vector<16x16xf32>
      %26 = arith.mulf %25, %24 : vector<16x16xf32>
      %27 = arith.subf %21, %26 : vector<16x16xf32>
      %c0_15 = arith.constant 0 : index
      %c0_16 = arith.constant 0 : index
      %28 = vector.load %arg9[%c0_15, %c0_16] : memref<16x1xf32, #tpu.memory_space<vmem>>, vector<16x1xf32>
      %cst_17 = arith.constant dense<0xFF800000> : vector<16xf32>
      %29 = vector.multi_reduction <maximumf>, %27, %cst_17 [1] : vector<16x16xf32> to vector<16xf32>
      %30 = vector.shape_cast %29 : vector<16xf32> to vector<16x1xf32>
      %31 = arith.maximumf %28, %30 : vector<16x1xf32>
      %32 = arith.subf %28, %31 : vector<16x1xf32>
      %33 = math.exp %32 : vector<16x1xf32>
      %34 = vector.broadcast %31 : vector<16x1xf32> to vector<16x16xf32>
      %35 = arith.subf %27, %34 : vector<16x16xf32>
      %36 = math.exp %35 : vector<16x16xf32>
      %c0_18 = arith.constant 0 : index
      %c0_19 = arith.constant 0 : index
      %37 = vector.load %arg10[%c0_18, %c0_19] : memref<16x1xf32, #tpu.memory_space<vmem>>, vector<16x1xf32>
      %38 = arith.mulf %33, %37 : vector<16x1xf32>
      %cst_20 = arith.constant dense<0.000000e+00> : vector<16xf32>
      %39 = vector.multi_reduction <add>, %36, %cst_20 [1] : vector<16x16xf32> to vector<16xf32>
      %40 = vector.shape_cast %39 : vector<16xf32> to vector<16x1xf32>
      %41 = arith.addf %38, %40 : vector<16x1xf32>
      %c0_21 = arith.constant 0 : index
      %c0_22 = arith.constant 0 : index
      %42 = vector.load %arg10[%c0_21, %c0_22] : memref<16x1xf32, #tpu.memory_space<vmem>>, vector<16x1xf32>
      tpu.vector_store %arg10[%c0_21, %c0_22], %41 {strides = array<i32>} : memref<16x1xf32, #tpu.memory_space<vmem>>, vector<16x1xf32>,
      %c0_23 = arith.constant 0 : index
      %c0_24 = arith.constant 0 : index
      %43 = vector.load %arg11[%c0_23, %c0_24] : memref<16x16xf32, #tpu.memory_space<vmem>>, vector<16x16xf32>
      %44 = vector.broadcast %33 : vector<16x1xf32> to vector<16x16xf32>
      %45 = arith.mulf %44, %43 : vector<16x16xf32>
      %46 = arith.truncf %36 : vector<16x16xf32> to vector<16x16xbf16>
      %c0_25 = arith.constant 0 : index
      %c0_26 = arith.constant 0 : index
      %c0_27 = arith.constant 0 : index
      %c0_28 = arith.constant 0 : index
      %c0_29 = arith.constant 0 : index
      %47 = vector.load %arg7[%c0_25, %c0_26, %c0_27, %c0_28, %c0_29] : memref<1x1x1x16x16xbf16, #tpu.memory_space<vmem>>, vector<1x1x1x16x16xbf16>
      %48 = vector.shape_cast %47 : vector<1x1x1x16x16xbf16> to vector<16x16xbf16>
      %cst_30 = arith.constant dense<0.000000e+00> : vector<16x16xf32>
      %49 = tpu.matmul %46, %48, %cst_30 {dimension_numbers = #tpu.dot_dimension_numbers<[1], [0], [0], [1], [0, 0, 1, 1], [], []>} : vector<16x16xbf16>, vector<16x16xbf16>, vector<16x16xf32> -> vector<16x16xf32>
      %50 = arith.addf %45, %49 : vector<16x16xf32>
      %c0_31 = arith.constant 0 : index
      %c0_32 = arith.constant 0 : index
      %51 = vector.load %arg11[%c0_31, %c0_32] : memref<16x16xf32, #tpu.memory_space<vmem>>, vector<16x16xf32>
      tpu.vector_store %arg11[%c0_31, %c0_32], %50 {strides = array<i32>} : memref<16x16xf32, #tpu.memory_space<vmem>>, vector<16x16xf32>,
      %c0_33 = arith.constant 0 : index
      %c0_34 = arith.constant 0 : index
      %52 = vector.load %arg9[%c0_33, %c0_34] : memref<16x1xf32, #tpu.memory_space<vmem>>, vector<16x1xf32>
      tpu.vector_store %arg9[%c0_33, %c0_34], %31 {strides = array<i32>} : memref<16x1xf32, #tpu.memory_space<vmem>>, vector<16x1xf32>,
    } else {
    }
    %8 = arith.cmpi eq, %arg3, %arg2 : i32
    %9 = arith.extui %8 : i1 to i32
    %c0_i32_2 = arith.constant 0 : i32
    %10 = arith.cmpi ne, %9, %c0_i32_2 : i32
    scf.if %10 {
      %c0 = arith.constant 0 : index
      %c0_4 = arith.constant 0 : index
      %14 = vector.load %arg12[%c0, %c0_4] : memref<16x16xf32, #tpu.memory_space<vmem>>, vector<16x16xf32>
      %cst = arith.constant 0.000000e+00 : f32
      %15 = vector.broadcast %cst : f32 to vector<16x16xf32>
      %16 = arith.cmpf oge, %14, %15 : vector<16x16xf32>
      %c0_5 = arith.constant 0 : index
      %c0_6 = arith.constant 0 : index
      %c0_7 = arith.constant 0 : index
      %c0_8 = arith.constant 0 : index
      %c0_9 = arith.constant 0 : index
      %17 = vector.load %arg5[%c0_5, %c0_6, %c0_7, %c0_8, %c0_9] : memref<1x1x1x16x16xbf16, #tpu.memory_space<vmem>>, vector<1x1x1x16x16xbf16>
      %18 = vector.shape_cast %17 : vector<1x1x1x16x16xbf16> to vector<16x16xbf16>
      %c0_10 = arith.constant 0 : index
      %c0_11 = arith.constant 0 : index
      %c0_12 = arith.constant 0 : index
      %c0_13 = arith.constant 0 : index
      %c0_14 = arith.constant 0 : index
      %19 = vector.load %arg6[%c0_10, %c0_11, %c0_12, %c0_13, %c0_14] : memref<1x1x1x16x16xbf16, #tpu.memory_space<vmem>>, vector<1x1x1x16x16xbf16>
      %20 = vector.shape_cast %19 : vector<1x1x1x16x16xbf16> to vector<16x16xbf16>
      %cst_15 = arith.constant dense<0.000000e+00> : vector<16x16xf32>
      %21 = tpu.matmul %18, %20, %cst_15 {dimension_numbers = #tpu.dot_dimension_numbers<[1], [1], [0], [0], [0, 0, 1, 0], [], []>} : vector<16x16xbf16>, vector<16x16xbf16>, vector<16x16xf32> -> vector<16x16xf32>
      %22 = vector.broadcast %1 : f32 to vector<16x16xf32>
      %23 = arith.mulf %22, %14 : vector<16x16xf32>
      %24 = arith.subf %21, %23 : vector<16x16xf32>
      %cst_16 = arith.constant -1.000000e+30 : f32
      %25 = vector.broadcast %cst_16 : f32 to vector<16x16xf32>
      %26 = arith.select %16, %24, %25 : vector<16x16xi1>, vector<16x16xf32>
      %c0_17 = arith.constant 0 : index
      %c0_18 = arith.constant 0 : index
      %27 = vector.load %arg9[%c0_17, %c0_18] : memref<16x1xf32, #tpu.memory_space<vmem>>, vector<16x1xf32>
      %cst_19 = arith.constant dense<0xFF800000> : vector<16xf32>
      %28 = vector.multi_reduction <maximumf>, %26, %cst_19 [1] : vector<16x16xf32> to vector<16xf32>
      %29 = vector.shape_cast %28 : vector<16xf32> to vector<16x1xf32>
      %30 = arith.maximumf %27, %29 : vector<16x1xf32>
      %31 = arith.subf %27, %30 : vector<16x1xf32>
      %32 = math.exp %31 : vector<16x1xf32>
      %33 = vector.broadcast %30 : vector<16x1xf32> to vector<16x16xf32>
      %34 = arith.subf %26, %33 : vector<16x16xf32>
      %35 = math.exp %34 : vector<16x16xf32>
      %c0_20 = arith.constant 0 : index
      %c0_21 = arith.constant 0 : index
      %36 = vector.load %arg10[%c0_20, %c0_21] : memref<16x1xf32, #tpu.memory_space<vmem>>, vector<16x1xf32>
      %37 = arith.mulf %32, %36 : vector<16x1xf32>
      %cst_22 = arith.constant dense<0.000000e+00> : vector<16xf32>
      %38 = vector.multi_reduction <add>, %35, %cst_22 [1] : vector<16x16xf32> to vector<16xf32>
      %39 = vector.shape_cast %38 : vector<16xf32> to vector<16x1xf32>
      %40 = arith.addf %37, %39 : vector<16x1xf32>
      %c0_23 = arith.constant 0 : index
      %c0_24 = arith.constant 0 : index
      %41 = vector.load %arg10[%c0_23, %c0_24] : memref<16x1xf32, #tpu.memory_space<vmem>>, vector<16x1xf32>
      tpu.vector_store %arg10[%c0_23, %c0_24], %40 {strides = array<i32>} : memref<16x1xf32, #tpu.memory_space<vmem>>, vector<16x1xf32>,
      %c0_25 = arith.constant 0 : index
      %c0_26 = arith.constant 0 : index
      %42 = vector.load %arg11[%c0_25, %c0_26] : memref<16x16xf32, #tpu.memory_space<vmem>>, vector<16x16xf32>
      %43 = vector.broadcast %32 : vector<16x1xf32> to vector<16x16xf32>
      %44 = arith.mulf %43, %42 : vector<16x16xf32>
      %45 = arith.truncf %35 : vector<16x16xf32> to vector<16x16xbf16>
      %c0_27 = arith.constant 0 : index
      %c0_28 = arith.constant 0 : index
      %c0_29 = arith.constant 0 : index
      %c0_30 = arith.constant 0 : index
      %c0_31 = arith.constant 0 : index
      %46 = vector.load %arg7[%c0_27, %c0_28, %c0_29, %c0_30, %c0_31] : memref<1x1x1x16x16xbf16, #tpu.memory_space<vmem>>, vector<1x1x1x16x16xbf16>
      %47 = vector.shape_cast %46 : vector<1x1x1x16x16xbf16> to vector<16x16xbf16>
      %cst_32 = arith.constant dense<0.000000e+00> : vector<16x16xf32>
      %48 = tpu.matmul %45, %47, %cst_32 {dimension_numbers = #tpu.dot_dimension_numbers<[1], [0], [0], [1], [0, 0, 1, 1], [], []>} : vector<16x16xbf16>, vector<16x16xbf16>, vector<16x16xf32> -> vector<16x16xf32>
      %49 = arith.addf %44, %48 : vector<16x16xf32>
      %c0_33 = arith.constant 0 : index
      %c0_34 = arith.constant 0 : index
      %50 = vector.load %arg11[%c0_33, %c0_34] : memref<16x16xf32, #tpu.memory_space<vmem>>, vector<16x16xf32>
      tpu.vector_store %arg11[%c0_33, %c0_34], %49 {strides = array<i32>} : memref<16x16xf32, #tpu.memory_space<vmem>>, vector<16x16xf32>,
      %c0_35 = arith.constant 0 : index
      %c0_36 = arith.constant 0 : index
      %51 = vector.load %arg9[%c0_35, %c0_36] : memref<16x1xf32, #tpu.memory_space<vmem>>, vector<16x1xf32>
      tpu.vector_store %arg9[%c0_35, %c0_36], %30 {strides = array<i32>} : memref<16x1xf32, #tpu.memory_space<vmem>>, vector<16x1xf32>,
    } else {
    }
    %11 = arith.cmpi eq, %arg3, %arg2 : i32
    %12 = arith.extui %11 : i1 to i32
    %c0_i32_3 = arith.constant 0 : i32
    %13 = arith.cmpi ne, %12, %c0_i32_3 : i32
    scf.if %13 {
      %c0 = arith.constant 0 : index
      %c0_4 = arith.constant 0 : index
      %14 = vector.load %arg10[%c0, %c0_4] : memref<16x1xf32, #tpu.memory_space<vmem>>, vector<16x1xf32>
      %15 = tpu.reciprocal %14 {approx = true} : vector<16x1xf32> -> vector<16x1xf32>
      %c0_5 = arith.constant 0 : index
      %c0_6 = arith.constant 0 : index
      %16 = vector.load %arg11[%c0_5, %c0_6] : memref<16x16xf32, #tpu.memory_space<vmem>>, vector<16x16xf32>
      %17 = vector.broadcast %15 : vector<16x1xf32> to vector<16x16xf32>
      %18 = arith.mulf %16, %17 : vector<16x16xf32>
      %19 = arith.truncf %18 : vector<16x16xf32> to vector<16x16xbf16>
      %c0_7 = arith.constant 0 : index
      %c0_8 = arith.constant 0 : index
      %c0_9 = arith.constant 0 : index
      %c0_10 = arith.constant 0 : index
      %20 = vector.load %arg8[%c0_7, %c0_8, %c0_9, %c0_10] : memref<1x1x16x16xbf16, #tpu.memory_space<vmem>>, vector<1x1x16x16xbf16>
      %21 = vector.shape_cast %20 : vector<1x1x16x16xbf16> to vector<16x16xbf16>
      %22 = vector.shape_cast %19 : vector<16x16xbf16> to vector<1x1x16x16xbf16>
      tpu.vector_store %arg8[%c0_7, %c0_8, %c0_9, %c0_10], %22 {strides = array<i32>} : memref<1x1x16x16xbf16, #tpu.memory_space<vmem>>, vector<1x1x16x16xbf16>,
    } else {
    }
    return
  }
  func.func @transform_0(%arg0: i32, %arg1: i32, %arg2: i32, %arg3: i32, %arg4: memref<4xf32, #tpu.memory_space<smem>>) -> (i32, i32, i32, i32, i32) {
    %c0_i32 = arith.constant 0 : i32
    %c0_i32_0 = arith.constant 0 : i32
    %c0_i32_1 = arith.constant 0 : i32
    return %c0_i32, %arg0, %arg1, %arg2, %c0_i32_0 : i32, i32, i32, i32, i32
  }
  func.func @transform_1(%arg0: i32, %arg1: i32, %arg2: i32, %arg3: i32, %arg4: memref<4xf32, #tpu.memory_space<smem>>) -> (i32, i32, i32, i32, i32) {
    %0 = arith.minsi %arg3, %arg2 : i32
    %c1_i32 = arith.constant 1 : i32
    %c0_i32 = arith.constant 0 : i32
    %c0_i32_0 = arith.constant 0 : i32
    return %c1_i32, %arg0, %arg1, %0, %c0_i32 : i32, i32, i32, i32, i32
  }
  func.func @transform_2(%arg0: i32, %arg1: i32, %arg2: i32, %arg3: i32, %arg4: memref<4xf32, #tpu.memory_space<smem>>) -> (i32, i32, i32, i32, i32) {
    %0 = arith.minsi %arg3, %arg2 : i32
    %c2_i32 = arith.constant 2 : i32
    %c0_i32 = arith.constant 0 : i32
    %c0_i32_0 = arith.constant 0 : i32
    return %c2_i32, %arg0, %arg1, %0, %c0_i32 : i32, i32, i32, i32, i32
  }
  func.func @transform_3(%arg0: i32, %arg1: i32, %arg2: i32, %arg3: i32, %arg4: memref<4xf32, #tpu.memory_space<smem>>) -> (i32, i32, i32, i32) {
    %c0_i32 = arith.constant 0 : i32
    %c0_i32_0 = arith.constant 0 : i32
    return %arg0, %arg1, %arg2, %c0_i32 : i32, i32, i32, i32
  }
}

module attributes {stable_mosaic.version = 11 : i64} {
  func.func @_matmul_kernel(%arg0: i32, %arg1: i32, %arg2: i32, %arg3: i32, %arg4: memref<32x64xbf16, #tpu.memory_space<vmem>>, %arg5: memref<1x64x256xbf16, #tpu.memory_space<vmem>>, %arg6: memref<1x1x256xf32, #tpu.memory_space<vmem>>, %arg7: memref<1x32x256xbf16, #tpu.memory_space<vmem>>, %arg8: memref<32x256xf32, #tpu.memory_space<vmem>>) attributes {dimension_semantics = [#tpu.dimension_semantics<parallel>, #tpu.dimension_semantics<parallel>, #tpu.dimension_semantics<parallel>, #tpu.dimension_semantics<arbitrary>], iteration_bounds = array<i64: 1, 1, 1, 1>, scalar_prefetch = 0 : i64, scratch_operands = 1 : i64, tpu.core_type = #tpu.core_type<tc>, window_params = [{transform_indices = @transform_0, window_bounds = array<i64: 32, 64>}, {transform_indices = @transform_1, window_bounds = array<i64: 1, 64, 256>}, {transform_indices = @transform_2, window_bounds = array<i64: 1, 1, 256>}, {transform_indices = @transform_3, window_bounds = array<i64: 1, 32, 256>}]} {
    %c0_i32 = arith.constant 0 : i32
    %0 = arith.cmpi eq, %arg3, %c0_i32 : i32
    %1 = arith.extui %0 : i1 to i32
    %c0_i32_0 = arith.constant 0 : i32
    %2 = arith.cmpi ne, %1, %c0_i32_0 : i32
    scf.if %2 {
      %cst_11 = arith.constant 0.000000e+00 : f32
      %13 = vector.broadcast %cst_11 : f32 to vector<32x256xf32>
      %c0_12 = arith.constant 0 : index
      %c0_13 = arith.constant 0 : index
      %14 = vector.load %arg8[%c0_12, %c0_13] : memref<32x256xf32, #tpu.memory_space<vmem>>, vector<32x256xf32>
      tpu.vector_store %arg8[%c0_12, %c0_13], %13 {strides = array<i32>} : memref<32x256xf32, #tpu.memory_space<vmem>>, vector<32x256xf32>,
    } else {
    }
    %c0 = arith.constant 0 : index
    %c0_1 = arith.constant 0 : index
    %3 = vector.load %arg8[%c0, %c0_1] : memref<32x256xf32, #tpu.memory_space<vmem>>, vector<32x256xf32>
    %c0_2 = arith.constant 0 : index
    %c0_3 = arith.constant 0 : index
    %4 = vector.load %arg4[%c0_2, %c0_3] : memref<32x64xbf16, #tpu.memory_space<vmem>>, vector<32x64xbf16>
    %c0_4 = arith.constant 0 : index
    %c0_5 = arith.constant 0 : index
    %c0_6 = arith.constant 0 : index
    %5 = vector.load %arg5[%c0_4, %c0_5, %c0_6] : memref<1x64x256xbf16, #tpu.memory_space<vmem>>, vector<1x64x256xbf16>
    %6 = vector.shape_cast %5 : vector<1x64x256xbf16> to vector<64x256xbf16>
    %cst = arith.constant dense<0.000000e+00> : vector<32x256xf32>
    %7 = tpu.matmul %4, %6, %cst {dimension_numbers = #tpu.dot_dimension_numbers<[1], [0], [0], [1], [0, 0, 1, 1], [], []>} : vector<32x64xbf16>, vector<64x256xbf16>, vector<32x256xf32> -> vector<32x256xf32>
    %8 = arith.addf %3, %7 : vector<32x256xf32>
    %c0_7 = arith.constant 0 : index
    %c0_8 = arith.constant 0 : index
    %9 = vector.load %arg8[%c0_7, %c0_8] : memref<32x256xf32, #tpu.memory_space<vmem>>, vector<32x256xf32>
    tpu.vector_store %arg8[%c0_7, %c0_8], %8 {strides = array<i32>} : memref<32x256xf32, #tpu.memory_space<vmem>>, vector<32x256xf32>,
    %c0_i32_9 = arith.constant 0 : i32
    %10 = arith.cmpi eq, %arg3, %c0_i32_9 : i32
    %11 = arith.extui %10 : i1 to i32
    %c0_i32_10 = arith.constant 0 : i32
    %12 = arith.cmpi ne, %11, %c0_i32_10 : i32
    scf.if %12 {
      %c0_11 = arith.constant 0 : index
      %c0_12 = arith.constant 0 : index
      %13 = vector.load %arg8[%c0_11, %c0_12] : memref<32x256xf32, #tpu.memory_space<vmem>>, vector<32x256xf32>
      %c0_13 = arith.constant 0 : index
      %c0_14 = arith.constant 0 : index
      %c0_15 = arith.constant 0 : index
      %14 = vector.load %arg6[%c0_13, %c0_14, %c0_15] : memref<1x1x256xf32, #tpu.memory_space<vmem>>, vector<1x1x256xf32>
      %15 = vector.shape_cast %14 : vector<1x1x256xf32> to vector<1x256xf32>
      %16 = vector.broadcast %15 : vector<1x256xf32> to vector<32x256xf32>
      %17 = arith.addf %13, %16 : vector<32x256xf32>
      %18 = arith.mulf %17, %17 : vector<32x256xf32>
      %19 = arith.mulf %17, %18 : vector<32x256xf32>
      %cst_16 = arith.constant 4.471500e-02 : f32
      %20 = vector.broadcast %cst_16 : f32 to vector<32x256xf32>
      %21 = arith.mulf %20, %19 : vector<32x256xf32>
      %22 = arith.addf %17, %21 : vector<32x256xf32>
      %cst_17 = arith.constant 0.797884583 : f32
      %23 = vector.broadcast %cst_17 : f32 to vector<32x256xf32>
      %24 = arith.mulf %23, %22 : vector<32x256xf32>
      %25 = math.tanh %24 : vector<32x256xf32>
      %cst_18 = arith.constant 1.000000e+00 : f32
      %26 = vector.broadcast %cst_18 : f32 to vector<32x256xf32>
      %27 = arith.addf %26, %25 : vector<32x256xf32>
      %cst_19 = arith.constant 5.000000e-01 : f32
      %28 = vector.broadcast %cst_19 : f32 to vector<32x256xf32>
      %29 = arith.mulf %28, %27 : vector<32x256xf32>
      %30 = arith.mulf %17, %29 : vector<32x256xf32>
      %31 = arith.truncf %30 : vector<32x256xf32> to vector<32x256xbf16>
      %c0_20 = arith.constant 0 : index
      %c0_21 = arith.constant 0 : index
      %c0_22 = arith.constant 0 : index
      %32 = vector.load %arg7[%c0_20, %c0_21, %c0_22] : memref<1x32x256xbf16, #tpu.memory_space<vmem>>, vector<1x32x256xbf16>
      %33 = vector.shape_cast %32 : vector<1x32x256xbf16> to vector<32x256xbf16>
      %34 = vector.shape_cast %31 : vector<32x256xbf16> to vector<1x32x256xbf16>
      tpu.vector_store %arg7[%c0_20, %c0_21, %c0_22], %34 {strides = array<i32>} : memref<1x32x256xbf16, #tpu.memory_space<vmem>>, vector<1x32x256xbf16>,
    } else {
    }
    return
  }
  func.func @transform_0(%arg0: i32, %arg1: i32, %arg2: i32, %arg3: i32) -> (i32, i32) {
    %c0_i32 = arith.constant 0 : i32
    return %arg1, %arg3 : i32, i32
  }
  func.func @transform_1(%arg0: i32, %arg1: i32, %arg2: i32, %arg3: i32) -> (i32, i32, i32) {
    %c0_i32 = arith.constant 0 : i32
    return %arg0, %arg3, %arg2 : i32, i32, i32
  }
  func.func @transform_2(%arg0: i32, %arg1: i32, %arg2: i32, %arg3: i32) -> (i32, i32, i32) {
    %c0_i32 = arith.constant 0 : i32
    %c0_i32_0 = arith.constant 0 : i32
    return %arg0, %c0_i32, %arg2 : i32, i32, i32
  }
  func.func @transform_3(%arg0: i32, %arg1: i32, %arg2: i32, %arg3: i32) -> (i32, i32, i32) {
    %c0_i32 = arith.constant 0 : i32
    return %arg0, %arg1, %arg2 : i32, i32, i32
  }
}

module attributes {stable_mosaic.version = 11 : i64} {
  func.func @_matmul_kernel(%arg0: i32, %arg1: i32, %arg2: i32, %arg3: i32, %arg4: memref<32x64xbf16, #tpu.memory_space<vmem>>, %arg5: memref<1x64x64xbf16, #tpu.memory_space<vmem>>, %arg6: memref<1x1x64xf32, #tpu.memory_space<vmem>>, %arg7: memref<32x64xf32, #tpu.memory_space<vmem>>, %arg8: memref<1x64xf32, #tpu.memory_space<vmem>>, %arg9: memref<32x64xf32, #tpu.memory_space<vmem>>, %arg10: memref<32x64xbf16, #tpu.memory_space<vmem>>, %arg11: memref<32x64xf32, #tpu.memory_space<vmem>>) attributes {dimension_semantics = [#tpu.dimension_semantics<parallel>, #tpu.dimension_semantics<parallel>, #tpu.dimension_semantics<parallel>, #tpu.dimension_semantics<arbitrary>], iteration_bounds = array<i64: 1, 1, 1, 1>, scalar_prefetch = 0 : i64, scratch_operands = 1 : i64, tpu.core_type = #tpu.core_type<tc>, window_params = [{transform_indices = @transform_0, window_bounds = array<i64: 32, 64>}, {transform_indices = @transform_1, window_bounds = array<i64: 1, 64, 64>}, {transform_indices = @transform_2, window_bounds = array<i64: 1, 1, 64>}, {transform_indices = @transform_3, window_bounds = array<i64: 32, 64>}, {transform_indices = @transform_4, window_bounds = array<i64: 1, 64>}, {transform_indices = @transform_5, window_bounds = array<i64: 32, 64>}, {transform_indices = @transform_6, window_bounds = array<i64: 32, 64>}]} {
    %c0_i32 = arith.constant 0 : i32
    %0 = arith.cmpi eq, %arg3, %c0_i32 : i32
    %1 = arith.extui %0 : i1 to i32
    %c0_i32_0 = arith.constant 0 : i32
    %2 = arith.cmpi ne, %1, %c0_i32_0 : i32
    scf.if %2 {
      %cst_11 = arith.constant 0.000000e+00 : f32
      %13 = vector.broadcast %cst_11 : f32 to vector<32x64xf32>
      %c0_12 = arith.constant 0 : index
      %c0_13 = arith.constant 0 : index
      %14 = vector.load %arg11[%c0_12, %c0_13] : memref<32x64xf32, #tpu.memory_space<vmem>>, vector<32x64xf32>
      tpu.vector_store %arg11[%c0_12, %c0_13], %13 {strides = array<i32>} : memref<32x64xf32, #tpu.memory_space<vmem>>, vector<32x64xf32>,
    } else {
    }
    %c0 = arith.constant 0 : index
    %c0_1 = arith.constant 0 : index
    %3 = vector.load %arg11[%c0, %c0_1] : memref<32x64xf32, #tpu.memory_space<vmem>>, vector<32x64xf32>
    %c0_2 = arith.constant 0 : index
    %c0_3 = arith.constant 0 : index
    %4 = vector.load %arg4[%c0_2, %c0_3] : memref<32x64xbf16, #tpu.memory_space<vmem>>, vector<32x64xbf16>
    %c0_4 = arith.constant 0 : index
    %c0_5 = arith.constant 0 : index
    %c0_6 = arith.constant 0 : index
    %5 = vector.load %arg5[%c0_4, %c0_5, %c0_6] : memref<1x64x64xbf16, #tpu.memory_space<vmem>>, vector<1x64x64xbf16>
    %6 = vector.shape_cast %5 : vector<1x64x64xbf16> to vector<64x64xbf16>
    %cst = arith.constant dense<0.000000e+00> : vector<32x64xf32>
    %7 = tpu.matmul %4, %6, %cst {dimension_numbers = #tpu.dot_dimension_numbers<[1], [0], [0], [1], [0, 0, 1, 1], [], []>} : vector<32x64xbf16>, vector<64x64xbf16>, vector<32x64xf32> -> vector<32x64xf32>
    %8 = arith.addf %3, %7 : vector<32x64xf32>
    %c0_7 = arith.constant 0 : index
    %c0_8 = arith.constant 0 : index
    %9 = vector.load %arg11[%c0_7, %c0_8] : memref<32x64xf32, #tpu.memory_space<vmem>>, vector<32x64xf32>
    tpu.vector_store %arg11[%c0_7, %c0_8], %8 {strides = array<i32>} : memref<32x64xf32, #tpu.memory_space<vmem>>, vector<32x64xf32>,
    %c0_i32_9 = arith.constant 0 : i32
    %10 = arith.cmpi eq, %arg3, %c0_i32_9 : i32
    %11 = arith.extui %10 : i1 to i32
    %c0_i32_10 = arith.constant 0 : i32
    %12 = arith.cmpi ne, %11, %c0_i32_10 : i32
    scf.if %12 {
      %c0_11 = arith.constant 0 : index
      %c0_12 = arith.constant 0 : index
      %13 = vector.load %arg11[%c0_11, %c0_12] : memref<32x64xf32, #tpu.memory_space<vmem>>, vector<32x64xf32>
      %c0_13 = arith.constant 0 : index
      %c0_14 = arith.constant 0 : index
      %c0_15 = arith.constant 0 : index
      %14 = vector.load %arg6[%c0_13, %c0_14, %c0_15] : memref<1x1x64xf32, #tpu.memory_space<vmem>>, vector<1x1x64xf32>
      %15 = vector.shape_cast %14 : vector<1x1x64xf32> to vector<1x64xf32>
      %16 = vector.broadcast %15 : vector<1x64xf32> to vector<32x64xf32>
      %17 = arith.addf %13, %16 : vector<32x64xf32>
      %c0_16 = arith.constant 0 : index
      %c0_17 = arith.constant 0 : index
      %18 = vector.load %arg7[%c0_16, %c0_17] : memref<32x64xf32, #tpu.memory_space<vmem>>, vector<32x64xf32>
      %19 = arith.addf %17, %18 : vector<32x64xf32>
      %c0_18 = arith.constant 0 : index
      %c0_19 = arith.constant 0 : index
      %20 = vector.load %arg9[%c0_18, %c0_19] : memref<32x64xf32, #tpu.memory_space<vmem>>, vector<32x64xf32>
      tpu.vector_store %arg9[%c0_18, %c0_19], %19 {strides = array<i32>} : memref<32x64xf32, #tpu.memory_space<vmem>>, vector<32x64xf32>,
      %21 = arith.mulf %19, %19 : vector<32x64xf32>
      %cst_20 = arith.constant dense<0.000000e+00> : vector<32xf32>
      %22 = vector.multi_reduction <add>, %21, %cst_20 [1] : vector<32x64xf32> to vector<32xf32>
      %23 = vector.shape_cast %22 : vector<32xf32> to vector<32x1xf32>
      %cst_21 = arith.constant 6.400000e+01 : f32
      %24 = vector.broadcast %cst_21 : f32 to vector<32x1xf32>
      %25 = arith.divf %23, %24 : vector<32x1xf32>
      %cst_22 = arith.constant 9.99999974E-6 : f32
      %26 = vector.broadcast %cst_22 : f32 to vector<32x1xf32>
      %27 = arith.addf %25, %26 : vector<32x1xf32>
      %28 = math.rsqrt %27 : vector<32x1xf32>
      %29 = vector.broadcast %28 : vector<32x1xf32> to vector<32x64xf32>
      %30 = arith.mulf %19, %29 : vector<32x64xf32>
      %c0_23 = arith.constant 0 : index
      %c0_24 = arith.constant 0 : index
      %31 = vector.load %arg8[%c0_23, %c0_24] : memref<1x64xf32, #tpu.memory_space<vmem>>, vector<1x64xf32>
      %32 = vector.broadcast %31 : vector<1x64xf32> to vector<32x64xf32>
      %33 = arith.mulf %30, %32 : vector<32x64xf32>
      %34 = arith.truncf %33 : vector<32x64xf32> to vector<32x64xbf16>
      %c0_25 = arith.constant 0 : index
      %c0_26 = arith.constant 0 : index
      %35 = vector.load %arg10[%c0_25, %c0_26] : memref<32x64xbf16, #tpu.memory_space<vmem>>, vector<32x64xbf16>
      tpu.vector_store %arg10[%c0_25, %c0_26], %34 {strides = array<i32>} : memref<32x64xbf16, #tpu.memory_space<vmem>>, vector<32x64xbf16>,
    } else {
    }
    return
  }
  func.func @transform_0(%arg0: i32, %arg1: i32, %arg2: i32, %arg3: i32) -> (i32, i32) {
    %c0_i32 = arith.constant 0 : i32
    return %arg1, %arg3 : i32, i32
  }
  func.func @transform_1(%arg0: i32, %arg1: i32, %arg2: i32, %arg3: i32) -> (i32, i32, i32) {
    %c0_i32 = arith.constant 0 : i32
    return %arg0, %arg3, %arg2 : i32, i32, i32
  }
  func.func @transform_2(%arg0: i32, %arg1: i32, %arg2: i32, %arg3: i32) -> (i32, i32, i32) {
    %c0_i32 = arith.constant 0 : i32
    %c0_i32_0 = arith.constant 0 : i32
    return %arg0, %c0_i32, %arg2 : i32, i32, i32
  }
  func.func @transform_3(%arg0: i32, %arg1: i32, %arg2: i32, %arg3: i32) -> (i32, i32) {
    %c0_i32 = arith.constant 0 : i32
    return %arg1, %arg2 : i32, i32
  }
  func.func @transform_4(%arg0: i32, %arg1: i32, %arg2: i32, %arg3: i32) -> (i32, i32) {
    %c0_i32 = arith.constant 0 : i32
    %c0_i32_0 = arith.constant 0 : i32
    return %c0_i32, %arg2 : i32, i32
  }
  func.func @transform_5(%arg0: i32, %arg1: i32, %arg2: i32, %arg3: i32) -> (i32, i32) {
    %c0_i32 = arith.constant 0 : i32
    return %arg1, %arg2 : i32, i32
  }
  func.func @transform_6(%arg0: i32, %arg1: i32, %arg2: i32, %arg3: i32) -> (i32, i32) {
    %c0_i32 = arith.constant 0 : i32
    return %arg1, %arg2 : i32, i32
  }
}

module attributes {stable_mosaic.version = 11 : i64} {
  func.func @_matmul_kernel(%arg0: i32, %arg1: i32, %arg2: i32, %arg3: i32, %arg4: memref<32x256xbf16, #tpu.memory_space<vmem>>, %arg5: memref<1x256x64xbf16, #tpu.memory_space<vmem>>, %arg6: memref<1x1x64xf32, #tpu.memory_space<vmem>>, %arg7: memref<32x64xf32, #tpu.memory_space<vmem>>, %arg8: memref<1x64xf32, #tpu.memory_space<vmem>>, %arg9: memref<32x64xf32, #tpu.memory_space<vmem>>, %arg10: memref<32x64xbf16, #tpu.memory_space<vmem>>, %arg11: memref<32x64xf32, #tpu.memory_space<vmem>>) attributes {dimension_semantics = [#tpu.dimension_semantics<parallel>, #tpu.dimension_semantics<parallel>, #tpu.dimension_semantics<parallel>, #tpu.dimension_semantics<arbitrary>], iteration_bounds = array<i64: 1, 1, 1, 1>, scalar_prefetch = 0 : i64, scratch_operands = 1 : i64, tpu.core_type = #tpu.core_type<tc>, window_params = [{transform_indices = @transform_0, window_bounds = array<i64: 32, 256>}, {transform_indices = @transform_1, window_bounds = array<i64: 1, 256, 64>}, {transform_indices = @transform_2, window_bounds = array<i64: 1, 1, 64>}, {transform_indices = @transform_3, window_bounds = array<i64: 32, 64>}, {transform_indices = @transform_4, window_bounds = array<i64: 1, 64>}, {transform_indices = @transform_5, window_bounds = array<i64: 32, 64>}, {transform_indices = @transform_6, window_bounds = array<i64: 32, 64>}]} {
    %c0_i32 = arith.constant 0 : i32
    %0 = arith.cmpi eq, %arg3, %c0_i32 : i32
    %1 = arith.extui %0 : i1 to i32
    %c0_i32_0 = arith.constant 0 : i32
    %2 = arith.cmpi ne, %1, %c0_i32_0 : i32
    scf.if %2 {
      %cst_11 = arith.constant 0.000000e+00 : f32
      %13 = vector.broadcast %cst_11 : f32 to vector<32x64xf32>
      %c0_12 = arith.constant 0 : index
      %c0_13 = arith.constant 0 : index
      %14 = vector.load %arg11[%c0_12, %c0_13] : memref<32x64xf32, #tpu.memory_space<vmem>>, vector<32x64xf32>
      tpu.vector_store %arg11[%c0_12, %c0_13], %13 {strides = array<i32>} : memref<32x64xf32, #tpu.memory_space<vmem>>, vector<32x64xf32>,
    } else {
    }
    %c0 = arith.constant 0 : index
    %c0_1 = arith.constant 0 : index
    %3 = vector.load %arg11[%c0, %c0_1] : memref<32x64xf32, #tpu.memory_space<vmem>>, vector<32x64xf32>
    %c0_2 = arith.constant 0 : index
    %c0_3 = arith.constant 0 : index
    %4 = vector.load %arg4[%c0_2, %c0_3] : memref<32x256xbf16, #tpu.memory_space<vmem>>, vector<32x256xbf16>
    %c0_4 = arith.constant 0 : index
    %c0_5 = arith.constant 0 : index
    %c0_6 = arith.constant 0 : index
    %5 = vector.load %arg5[%c0_4, %c0_5, %c0_6] : memref<1x256x64xbf16, #tpu.memory_space<vmem>>, vector<1x256x64xbf16>
    %6 = vector.shape_cast %5 : vector<1x256x64xbf16> to vector<256x64xbf16>
    %cst = arith.constant dense<0.000000e+00> : vector<32x64xf32>
    %7 = tpu.matmul %4, %6, %cst {dimension_numbers = #tpu.dot_dimension_numbers<[1], [0], [0], [1], [0, 0, 1, 1], [], []>} : vector<32x256xbf16>, vector<256x64xbf16>, vector<32x64xf32> -> vector<32x64xf32>
    %8 = arith.addf %3, %7 : vector<32x64xf32>
    %c0_7 = arith.constant 0 : index
    %c0_8 = arith.constant 0 : index
    %9 = vector.load %arg11[%c0_7, %c0_8] : memref<32x64xf32, #tpu.memory_space<vmem>>, vector<32x64xf32>
    tpu.vector_store %arg11[%c0_7, %c0_8], %8 {strides = array<i32>} : memref<32x64xf32, #tpu.memory_space<vmem>>, vector<32x64xf32>,
    %c0_i32_9 = arith.constant 0 : i32
    %10 = arith.cmpi eq, %arg3, %c0_i32_9 : i32
    %11 = arith.extui %10 : i1 to i32
    %c0_i32_10 = arith.constant 0 : i32
    %12 = arith.cmpi ne, %11, %c0_i32_10 : i32
    scf.if %12 {
      %c0_11 = arith.constant 0 : index
      %c0_12 = arith.constant 0 : index
      %13 = vector.load %arg11[%c0_11, %c0_12] : memref<32x64xf32, #tpu.memory_space<vmem>>, vector<32x64xf32>
      %c0_13 = arith.constant 0 : index
      %c0_14 = arith.constant 0 : index
      %c0_15 = arith.constant 0 : index
      %14 = vector.load %arg6[%c0_13, %c0_14, %c0_15] : memref<1x1x64xf32, #tpu.memory_space<vmem>>, vector<1x1x64xf32>
      %15 = vector.shape_cast %14 : vector<1x1x64xf32> to vector<1x64xf32>
      %16 = vector.broadcast %15 : vector<1x64xf32> to vector<32x64xf32>
      %17 = arith.addf %13, %16 : vector<32x64xf32>
      %c0_16 = arith.constant 0 : index
      %c0_17 = arith.constant 0 : index
      %18 = vector.load %arg7[%c0_16, %c0_17] : memref<32x64xf32, #tpu.memory_space<vmem>>, vector<32x64xf32>
      %19 = arith.addf %17, %18 : vector<32x64xf32>
      %c0_18 = arith.constant 0 : index
      %c0_19 = arith.constant 0 : index
      %20 = vector.load %arg9[%c0_18, %c0_19] : memref<32x64xf32, #tpu.memory_space<vmem>>, vector<32x64xf32>
      tpu.vector_store %arg9[%c0_18, %c0_19], %19 {strides = array<i32>} : memref<32x64xf32, #tpu.memory_space<vmem>>, vector<32x64xf32>,
      %21 = arith.mulf %19, %19 : vector<32x64xf32>
      %cst_20 = arith.constant dense<0.000000e+00> : vector<32xf32>
      %22 = vector.multi_reduction <add>, %21, %cst_20 [1] : vector<32x64xf32> to vector<32xf32>
      %23 = vector.shape_cast %22 : vector<32xf32> to vector<32x1xf32>
      %cst_21 = arith.constant 6.400000e+01 : f32
      %24 = vector.broadcast %cst_21 : f32 to vector<32x1xf32>
      %25 = arith.divf %23, %24 : vector<32x1xf32>
      %cst_22 = arith.constant 9.99999974E-6 : f32
      %26 = vector.broadcast %cst_22 : f32 to vector<32x1xf32>
      %27 = arith.addf %25, %26 : vector<32x1xf32>
      %28 = math.rsqrt %27 : vector<32x1xf32>
      %29 = vector.broadcast %28 : vector<32x1xf32> to vector<32x64xf32>
      %30 = arith.mulf %19, %29 : vector<32x64xf32>
      %c0_23 = arith.constant 0 : index
      %c0_24 = arith.constant 0 : index
      %31 = vector.load %arg8[%c0_23, %c0_24] : memref<1x64xf32, #tpu.memory_space<vmem>>, vector<1x64xf32>
      %32 = vector.broadcast %31 : vector<1x64xf32> to vector<32x64xf32>
      %33 = arith.mulf %30, %32 : vector<32x64xf32>
      %34 = arith.truncf %33 : vector<32x64xf32> to vector<32x64xbf16>
      %c0_25 = arith.constant 0 : index
      %c0_26 = arith.constant 0 : index
      %35 = vector.load %arg10[%c0_25, %c0_26] : memref<32x64xbf16, #tpu.memory_space<vmem>>, vector<32x64xbf16>
      tpu.vector_store %arg10[%c0_25, %c0_26], %34 {strides = array<i32>} : memref<32x64xbf16, #tpu.memory_space<vmem>>, vector<32x64xbf16>,
    } else {
    }
    return
  }
  func.func @transform_0(%arg0: i32, %arg1: i32, %arg2: i32, %arg3: i32) -> (i32, i32) {
    %c0_i32 = arith.constant 0 : i32
    return %arg1, %arg3 : i32, i32
  }
  func.func @transform_1(%arg0: i32, %arg1: i32, %arg2: i32, %arg3: i32) -> (i32, i32, i32) {
    %c0_i32 = arith.constant 0 : i32
    return %arg0, %arg3, %arg2 : i32, i32, i32
  }
  func.func @transform_2(%arg0: i32, %arg1: i32, %arg2: i32, %arg3: i32) -> (i32, i32, i32) {
    %c0_i32 = arith.constant 0 : i32
    %c0_i32_0 = arith.constant 0 : i32
    return %arg0, %c0_i32, %arg2 : i32, i32, i32
  }
  func.func @transform_3(%arg0: i32, %arg1: i32, %arg2: i32, %arg3: i32) -> (i32, i32) {
    %c0_i32 = arith.constant 0 : i32
    return %arg1, %arg2 : i32, i32
  }
  func.func @transform_4(%arg0: i32, %arg1: i32, %arg2: i32, %arg3: i32) -> (i32, i32) {
    %c0_i32 = arith.constant 0 : i32
    %c0_i32_0 = arith.constant 0 : i32
    return %c0_i32, %arg2 : i32, i32
  }
  func.func @transform_5(%arg0: i32, %arg1: i32, %arg2: i32, %arg3: i32) -> (i32, i32) {
    %c0_i32 = arith.constant 0 : i32
    return %arg1, %arg2 : i32, i32
  }
  func.func @transform_6(%arg0: i32, %arg1: i32, %arg2: i32, %arg3: i32) -> (i32, i32) {
    %c0_i32 = arith.constant 0 : i32
    return %arg1, %arg2 : i32, i32
  }
}

module attributes {stable_mosaic.version = 11 : i64} {
  func.func @_matmul_kernel(%arg0: i32, %arg1: i32, %arg2: i32, %arg3: i32, %arg4: memref<32x64xbf16, #tpu.memory_space<vmem>>, %arg5: memref<1x64x64xbf16, #tpu.memory_space<vmem>>, %arg6: memref<1x1x64xf32, #tpu.memory_space<vmem>>, %arg7: memref<1x32x64xbf16, #tpu.memory_space<vmem>>, %arg8: memref<32x64xf32, #tpu.memory_space<vmem>>) attributes {dimension_semantics = [#tpu.dimension_semantics<parallel>, #tpu.dimension_semantics<parallel>, #tpu.dimension_semantics<parallel>, #tpu.dimension_semantics<arbitrary>], iteration_bounds = array<i64: 3, 1, 1, 1>, scalar_prefetch = 0 : i64, scratch_operands = 1 : i64, tpu.core_type = #tpu.core_type<tc>, window_params = [{transform_indices = @transform_0, window_bounds = array<i64: 32, 64>}, {transform_indices = @transform_1, window_bounds = array<i64: 1, 64, 64>}, {transform_indices = @transform_2, window_bounds = array<i64: 1, 1, 64>}, {transform_indices = @transform_3, window_bounds = array<i64: 1, 32, 64>}]} {
    %c0_i32 = arith.constant 0 : i32
    %0 = arith.cmpi eq, %arg3, %c0_i32 : i32
    %1 = arith.extui %0 : i1 to i32
    %c0_i32_0 = arith.constant 0 : i32
    %2 = arith.cmpi ne, %1, %c0_i32_0 : i32
    scf.if %2 {
      %cst_11 = arith.constant 0.000000e+00 : f32
      %13 = vector.broadcast %cst_11 : f32 to vector<32x64xf32>
      %c0_12 = arith.constant 0 : index
      %c0_13 = arith.constant 0 : index
      %14 = vector.load %arg8[%c0_12, %c0_13] : memref<32x64xf32, #tpu.memory_space<vmem>>, vector<32x64xf32>
      tpu.vector_store %arg8[%c0_12, %c0_13], %13 {strides = array<i32>} : memref<32x64xf32, #tpu.memory_space<vmem>>, vector<32x64xf32>,
    } else {
    }
    %c0 = arith.constant 0 : index
    %c0_1 = arith.constant 0 : index
    %3 = vector.load %arg8[%c0, %c0_1] : memref<32x64xf32, #tpu.memory_space<vmem>>, vector<32x64xf32>
    %c0_2 = arith.constant 0 : index
    %c0_3 = arith.constant 0 : index
    %4 = vector.load %arg4[%c0_2, %c0_3] : memref<32x64xbf16, #tpu.memory_space<vmem>>, vector<32x64xbf16>
    %c0_4 = arith.constant 0 : index
    %c0_5 = arith.constant 0 : index
    %c0_6 = arith.constant 0 : index
    %5 = vector.load %arg5[%c0_4, %c0_5, %c0_6] : memref<1x64x64xbf16, #tpu.memory_space<vmem>>, vector<1x64x64xbf16>
    %6 = vector.shape_cast %5 : vector<1x64x64xbf16> to vector<64x64xbf16>
    %cst = arith.constant dense<0.000000e+00> : vector<32x64xf32>
    %7 = tpu.matmul %4, %6, %cst {dimension_numbers = #tpu.dot_dimension_numbers<[1], [0], [0], [1], [0, 0, 1, 1], [], []>} : vector<32x64xbf16>, vector<64x64xbf16>, vector<32x64xf32> -> vector<32x64xf32>
    %8 = arith.addf %3, %7 : vector<32x64xf32>
    %c0_7 = arith.constant 0 : index
    %c0_8 = arith.constant 0 : index
    %9 = vector.load %arg8[%c0_7, %c0_8] : memref<32x64xf32, #tpu.memory_space<vmem>>, vector<32x64xf32>
    tpu.vector_store %arg8[%c0_7, %c0_8], %8 {strides = array<i32>} : memref<32x64xf32, #tpu.memory_space<vmem>>, vector<32x64xf32>,
    %c0_i32_9 = arith.constant 0 : i32
    %10 = arith.cmpi eq, %arg3, %c0_i32_9 : i32
    %11 = arith.extui %10 : i1 to i32
    %c0_i32_10 = arith.constant 0 : i32
    %12 = arith.cmpi ne, %11, %c0_i32_10 : i32
    scf.if %12 {
      %c0_11 = arith.constant 0 : index
      %c0_12 = arith.constant 0 : index
      %13 = vector.load %arg8[%c0_11, %c0_12] : memref<32x64xf32, #tpu.memory_space<vmem>>, vector<32x64xf32>
      %c0_13 = arith.constant 0 : index
      %c0_14 = arith.constant 0 : index
      %c0_15 = arith.constant 0 : index
      %14 = vector.load %arg6[%c0_13, %c0_14, %c0_15] : memref<1x1x64xf32, #tpu.memory_space<vmem>>, vector<1x1x64xf32>
      %15 = vector.shape_cast %14 : vector<1x1x64xf32> to vector<1x64xf32>
      %16 = vector.broadcast %15 : vector<1x64xf32> to vector<32x64xf32>
      %17 = arith.addf %13, %16 : vector<32x64xf32>
      %18 = arith.truncf %17 : vector<32x64xf32> to vector<32x64xbf16>
      %c0_16 = arith.constant 0 : index
      %c0_17 = arith.constant 0 : index
      %c0_18 = arith.constant 0 : index
      %19 = vector.load %arg7[%c0_16, %c0_17, %c0_18] : memref<1x32x64xbf16, #tpu.memory_space<vmem>>, vector<1x32x64xbf16>
      %20 = vector.shape_cast %19 : vector<1x32x64xbf16> to vector<32x64xbf16>
      %21 = vector.shape_cast %18 : vector<32x64xbf16> to vector<1x32x64xbf16>
      tpu.vector_store %arg7[%c0_16, %c0_17, %c0_18], %21 {strides = array<i32>} : memref<1x32x64xbf16, #tpu.memory_space<vmem>>, vector<1x32x64xbf16>,
    } else {
    }
    return
  }
  func.func @transform_0(%arg0: i32, %arg1: i32, %arg2: i32, %arg3: i32) -> (i32, i32) {
    %c0_i32 = arith.constant 0 : i32
    return %arg1, %arg3 : i32, i32
  }
  func.func @transform_1(%arg0: i32, %arg1: i32, %arg2: i32, %arg3: i32) -> (i32, i32, i32) {
    %c0_i32 = arith.constant 0 : i32
    return %arg0, %arg3, %arg2 : i32, i32, i32
  }
  func.func @transform_2(%arg0: i32, %arg1: i32, %arg2: i32, %arg3: i32) -> (i32, i32, i32) {
    %c0_i32 = arith.constant 0 : i32
    %c0_i32_0 = arith.constant 0 : i32
    return %arg0, %c0_i32, %arg2 : i32, i32, i32
  }
  func.func @transform_3(%arg0: i32, %arg1: i32, %arg2: i32, %arg3: i32) -> (i32, i32, i32) {
    %c0_i32 = arith.constant 0 : i32
    return %arg0, %arg1, %arg2 : i32, i32, i32
  }
}

module attributes {stable_mosaic.version = 11 : i64} {
  func.func @_matmul_kernel(%arg0: i32, %arg1: i32, %arg2: i32, %arg3: i32, %arg4: memref<32x256xbf16, #tpu.memory_space<vmem>>, %arg5: memref<1x256x64xbf16, #tpu.memory_space<vmem>>, %arg6: memref<1x1x64xf32, #tpu.memory_space<vmem>>, %arg7: memref<32x64xf32, #tpu.memory_space<vmem>>, %arg8: memref<1x64xf32, #tpu.memory_space<vmem>>, %arg9: memref<32x64xf32, #tpu.memory_space<vmem>>, %arg10: memref<32x64xf32, #tpu.memory_space<vmem>>, %arg11: memref<32x64xf32, #tpu.memory_space<vmem>>) attributes {dimension_semantics = [#tpu.dimension_semantics<parallel>, #tpu.dimension_semantics<parallel>, #tpu.dimension_semantics<parallel>, #tpu.dimension_semantics<arbitrary>], iteration_bounds = array<i64: 1, 1, 1, 1>, scalar_prefetch = 0 : i64, scratch_operands = 1 : i64, tpu.core_type = #tpu.core_type<tc>, window_params = [{transform_indices = @transform_0, window_bounds = array<i64: 32, 256>}, {transform_indices = @transform_1, window_bounds = array<i64: 1, 256, 64>}, {transform_indices = @transform_2, window_bounds = array<i64: 1, 1, 64>}, {transform_indices = @transform_3, window_bounds = array<i64: 32, 64>}, {transform_indices = @transform_4, window_bounds = array<i64: 1, 64>}, {transform_indices = @transform_5, window_bounds = array<i64: 32, 64>}, {transform_indices = @transform_6, window_bounds = array<i64: 32, 64>}]} {
    %c0_i32 = arith.constant 0 : i32
    %0 = arith.cmpi eq, %arg3, %c0_i32 : i32
    %1 = arith.extui %0 : i1 to i32
    %c0_i32_0 = arith.constant 0 : i32
    %2 = arith.cmpi ne, %1, %c0_i32_0 : i32
    scf.if %2 {
      %cst_11 = arith.constant 0.000000e+00 : f32
      %13 = vector.broadcast %cst_11 : f32 to vector<32x64xf32>
      %c0_12 = arith.constant 0 : index
      %c0_13 = arith.constant 0 : index
      %14 = vector.load %arg11[%c0_12, %c0_13] : memref<32x64xf32, #tpu.memory_space<vmem>>, vector<32x64xf32>
      tpu.vector_store %arg11[%c0_12, %c0_13], %13 {strides = array<i32>} : memref<32x64xf32, #tpu.memory_space<vmem>>, vector<32x64xf32>,
    } else {
    }
    %c0 = arith.constant 0 : index
    %c0_1 = arith.constant 0 : index
    %3 = vector.load %arg11[%c0, %c0_1] : memref<32x64xf32, #tpu.memory_space<vmem>>, vector<32x64xf32>
    %c0_2 = arith.constant 0 : index
    %c0_3 = arith.constant 0 : index
    %4 = vector.load %arg4[%c0_2, %c0_3] : memref<32x256xbf16, #tpu.memory_space<vmem>>, vector<32x256xbf16>
    %c0_4 = arith.constant 0 : index
    %c0_5 = arith.constant 0 : index
    %c0_6 = arith.constant 0 : index
    %5 = vector.load %arg5[%c0_4, %c0_5, %c0_6] : memref<1x256x64xbf16, #tpu.memory_space<vmem>>, vector<1x256x64xbf16>
    %6 = vector.shape_cast %5 : vector<1x256x64xbf16> to vector<256x64xbf16>
    %cst = arith.constant dense<0.000000e+00> : vector<32x64xf32>
    %7 = tpu.matmul %4, %6, %cst {dimension_numbers = #tpu.dot_dimension_numbers<[1], [0], [0], [1], [0, 0, 1, 1], [], []>} : vector<32x256xbf16>, vector<256x64xbf16>, vector<32x64xf32> -> vector<32x64xf32>
    %8 = arith.addf %3, %7 : vector<32x64xf32>
    %c0_7 = arith.constant 0 : index
    %c0_8 = arith.constant 0 : index
    %9 = vector.load %arg11[%c0_7, %c0_8] : memref<32x64xf32, #tpu.memory_space<vmem>>, vector<32x64xf32>
    tpu.vector_store %arg11[%c0_7, %c0_8], %8 {strides = array<i32>} : memref<32x64xf32, #tpu.memory_space<vmem>>, vector<32x64xf32>,
    %c0_i32_9 = arith.constant 0 : i32
    %10 = arith.cmpi eq, %arg3, %c0_i32_9 : i32
    %11 = arith.extui %10 : i1 to i32
    %c0_i32_10 = arith.constant 0 : i32
    %12 = arith.cmpi ne, %11, %c0_i32_10 : i32
    scf.if %12 {
      %c0_11 = arith.constant 0 : index
      %c0_12 = arith.constant 0 : index
      %13 = vector.load %arg11[%c0_11, %c0_12] : memref<32x64xf32, #tpu.memory_space<vmem>>, vector<32x64xf32>
      %c0_13 = arith.constant 0 : index
      %c0_14 = arith.constant 0 : index
      %c0_15 = arith.constant 0 : index
      %14 = vector.load %arg6[%c0_13, %c0_14, %c0_15] : memref<1x1x64xf32, #tpu.memory_space<vmem>>, vector<1x1x64xf32>
      %15 = vector.shape_cast %14 : vector<1x1x64xf32> to vector<1x64xf32>
      %16 = vector.broadcast %15 : vector<1x64xf32> to vector<32x64xf32>
      %17 = arith.addf %13, %16 : vector<32x64xf32>
      %c0_16 = arith.constant 0 : index
      %c0_17 = arith.constant 0 : index
      %18 = vector.load %arg7[%c0_16, %c0_17] : memref<32x64xf32, #tpu.memory_space<vmem>>, vector<32x64xf32>
      %19 = arith.addf %17, %18 : vector<32x64xf32>
      %c0_18 = arith.constant 0 : index
      %c0_19 = arith.constant 0 : index
      %20 = vector.load %arg9[%c0_18, %c0_19] : memref<32x64xf32, #tpu.memory_space<vmem>>, vector<32x64xf32>
      tpu.vector_store %arg9[%c0_18, %c0_19], %19 {strides = array<i32>} : memref<32x64xf32, #tpu.memory_space<vmem>>, vector<32x64xf32>,
      %21 = arith.mulf %19, %19 : vector<32x64xf32>
      %cst_20 = arith.constant dense<0.000000e+00> : vector<32xf32>
      %22 = vector.multi_reduction <add>, %21, %cst_20 [1] : vector<32x64xf32> to vector<32xf32>
      %23 = vector.shape_cast %22 : vector<32xf32> to vector<32x1xf32>
      %cst_21 = arith.constant 6.400000e+01 : f32
      %24 = vector.broadcast %cst_21 : f32 to vector<32x1xf32>
      %25 = arith.divf %23, %24 : vector<32x1xf32>
      %cst_22 = arith.constant 9.99999974E-6 : f32
      %26 = vector.broadcast %cst_22 : f32 to vector<32x1xf32>
      %27 = arith.addf %25, %26 : vector<32x1xf32>
      %28 = math.rsqrt %27 : vector<32x1xf32>
      %29 = vector.broadcast %28 : vector<32x1xf32> to vector<32x64xf32>
      %30 = arith.mulf %19, %29 : vector<32x64xf32>
      %c0_23 = arith.constant 0 : index
      %c0_24 = arith.constant 0 : index
      %31 = vector.load %arg8[%c0_23, %c0_24] : memref<1x64xf32, #tpu.memory_space<vmem>>, vector<1x64xf32>
      %32 = vector.broadcast %31 : vector<1x64xf32> to vector<32x64xf32>
      %33 = arith.mulf %30, %32 : vector<32x64xf32>
      %c0_25 = arith.constant 0 : index
      %c0_26 = arith.constant 0 : index
      %34 = vector.load %arg10[%c0_25, %c0_26] : memref<32x64xf32, #tpu.memory_space<vmem>>, vector<32x64xf32>
      tpu.vector_store %arg10[%c0_25, %c0_26], %33 {strides = array<i32>} : memref<32x64xf32, #tpu.memory_space<vmem>>, vector<32x64xf32>,
    } else {
    }
    return
  }
  func.func @transform_0(%arg0: i32, %arg1: i32, %arg2: i32, %arg3: i32) -> (i32, i32) {
    %c0_i32 = arith.constant 0 : i32
    return %arg1, %arg3 : i32, i32
  }
  func.func @transform_1(%arg0: i32, %arg1: i32, %arg2: i32, %arg3: i32) -> (i32, i32, i32) {
    %c0_i32 = arith.constant 0 : i32
    return %arg0, %arg3, %arg2 : i32, i32, i32
  }
  func.func @transform_2(%arg0: i32, %arg1: i32, %arg2: i32, %arg3: i32) -> (i32, i32, i32) {
    %c0_i32 = arith.constant 0 : i32
    %c0_i32_0 = arith.constant 0 : i32
    return %arg0, %c0_i32, %arg2 : i32, i32, i32
  }
  func.func @transform_3(%arg0: i32, %arg1: i32, %arg2: i32, %arg3: i32) -> (i32, i32) {
    %c0_i32 = arith.constant 0 : i32
    return %arg1, %arg2 : i32, i32
  }
  func.func @transform_4(%arg0: i32, %arg1: i32, %arg2: i32, %arg3: i32) -> (i32, i32) {
    %c0_i32 = arith.constant 0 : i32
    %c0_i32_0 = arith.constant 0 : i32
    return %c0_i32, %arg2 : i32, i32
  }
  func.func @transform_5(%arg0: i32, %arg1: i32, %arg2: i32, %arg3: i32) -> (i32, i32) {
    %c0_i32 = arith.constant 0 : i32
    return %arg1, %arg2 : i32, i32
  }
  func.func @transform_6(%arg0: i32, %arg1: i32, %arg2: i32, %arg3: i32) -> (i32, i32) {
    %c0_i32 = arith.constant 0 : i32
    return %arg1, %arg2 : i32, i32
  }
}

</mosaic_0001>

<llo_original>
// kernel: gpt_layer_forward.11
$region0: #{gpt_layer_forward.11}
  #allocation0 [shape = 'u32[]', space=smem, size = 0x4, offset = 0x4, fixed_abs, tag = 'smem constant byte address 0x4 - core index']
  #allocation1 [shape = 'u32[144,128]{1,0:T(1,128)}', space=vmem, size = 0x12000, scoped, tag = 'internal scratch']
  %s0 = inlined_call_operand.vmem [shape: f32[32,64], index: 0, kind: input, shape index: {}]
  %s1 = inlined_call_operand.vmem [shape: f32[1,64], index: 1, kind: input, shape index: {}]
  %s2 = inlined_call_operand.vmem [shape: bf16[32,64], index: 2, kind: output, shape index: {}]
  %s3 = sld [smem:[#allocation0]]
  $region18: #{gpt_layer_forward.11} parent=0
    _
  %s5 = ssub.s32 1, %s3
  %s6 = scalar_select 0, %s5, %s3
  // Predicated region
  $region2: #{gpt_layer_forward.11} parent=0 // pred_check
    _
  $region3: #{gpt_layer_forward.11} parent=0 // pred_check_branch
    %8 = sbr.rel (0) target = $region5
  $region4: #{gpt_layer_forward.11} parent=0 // pred_region
    _
  $region5: #{gpt_layer_forward.11} parent=0 // pred_fallthru
    _
  // Predicated region
  $region6: #{gpt_layer_forward.11} parent=0 // pred_check
    _
  $region7: #{gpt_layer_forward.11} parent=0 // pred_check_branch
    %10 = sbr.rel (0) target = $region9
  $region8: #{gpt_layer_forward.11} parent=0 // pred_region
    _
  $region9: #{gpt_layer_forward.11} parent=0 // pred_fallthru
    _
  %v11 = vld [vmem:[%s0] sm:$0xff]
  %v12 = vld [vmem:[%s0 + $0x8] sm:$0xff]
  %v13 = vld [vmem:[%s0 + $0x10] sm:$0xff]
  %v14 = vld [vmem:[%s0 + $0x18] sm:$0xff]
  %v15 = vmul.f32 %v11, %v11
  %v16 = vmul.f32 %v12, %v12
  %v17 = vmul.f32 %v13, %v13
  %v18 = vmul.f32 %v14, %v14
  %vm19 = vcmask 523264
  %v20 = vsel %vm19, %v15, 0.0
  %21 = vadd.xlane.f32.xlu0 %v20
  %v22 = vpop.xlane.xlu0 %21
  %v23 = vsel %vm19, %v16, 0.0
  %24 = vadd.xlane.f32.xlu0 %v23
  %v25 = vpop.xlane.xlu0 %24
  %v26 = vsel %vm19, %v17, 0.0
  %27 = vadd.xlane.f32.xlu0 %v26
  %v28 = vpop.xlane.xlu0 %27
  %v29 = vsel %vm19, %v18, 0.0
  %30 = vadd.xlane.f32.xlu0 %v29
  %v31 = vpop.xlane.xlu0 %30
  %v32 = vrcp.pop 64.0
  %v33 = vmul.f32 %v22, %v32
  %v34 = vmul.f32 %v25, %v32
  %v35 = vmul.f32 %v28, %v32
  %v36 = vmul.f32 %v31, %v32
  %v37 = vadd.f32 %v33, 1e-05
  %v38 = vadd.f32 %v34, 1e-05
  %v39 = vadd.f32 %v35, 1e-05
  %v40 = vadd.f32 %v36, 1e-05
  %v41 = vrsqrt.pop %v37
  %v42 = vrsqrt.pop %v38
  %v43 = vrsqrt.pop %v39
  %v44 = vrsqrt.pop %v40
  %v45 = vmul.f32 %v11, %v41
  %v46 = vmul.f32 %v12, %v42
  %v47 = vmul.f32 %v13, %v43
  %v48 = vmul.f32 %v14, %v44
  %v49 = vld [vmem:[%s1] sm:$0x1]
  %v51 = vlaneseq
  %v52 = vshrl.u32 %v51, 7
  %v53 = vsub.s32 0, %v52
  %v54 = vrot.slane %v49, %v53
  %v56 = vmul.f32 %v45, %v54
  %v57 = vmul.f32 %v46, %v54
  %v58 = vmul.f32 %v47, %v54
  %v59 = vmul.f32 %v48, %v54
  %v60 = vpack.c.bf16 %v57, %v56
  %v61 = vpack.c.bf16 %v59, %v58
  %v64 = vunpack.c.l.b16 %v60
  %v65 = vunpack.c.h.b16 %v60
  %v66 = vunpack.c.l.b16 %v61
  %v67 = vunpack.c.h.b16 %v61
  %v68 = vpack.c.b16 %v64, %v64
  %v69 = vpack.c.b16 %v65, %v65
  %v70 = vpack.c.b16 %v66, %v66
  %v71 = vpack.c.b16 %v67, %v67
  %vm76 = vcmask 519168
  %77 = vst.msk [vmem:[%s2] sm:$0xf] %vm76, %v68
  %78 = vst.msk [vmem:[%s2 + $0x4] sm:$0xf] %vm76, %v69
  %79 = vst.msk [vmem:[%s2 + $0x8] sm:$0xf] %vm76, %v70
  %80 = vst.msk [vmem:[%s2 + $0xc] sm:$0xf] %vm76, %v71
  // Predicated region
  $region10: #{gpt_layer_forward.11} parent=0 // pred_check
    _
  $region11: #{gpt_layer_forward.11} parent=0 // pred_check_branch
    %82 = sbr.rel (0) target = $region13
  $region12: #{gpt_layer_forward.11} parent=0 // pred_region
    _
  $region13: #{gpt_layer_forward.11} parent=0 // pred_fallthru
    _
  // Predicated region
  $region14: #{gpt_layer_forward.11} parent=0 // pred_check
    _
  $region15: #{gpt_layer_forward.11} parent=0 // pred_check_branch
    %84 = sbr.rel (0) target = $region17
  $region16: #{gpt_layer_forward.11} parent=0 // pred_region
    _
  $region17: #{gpt_layer_forward.11} parent=0 // pred_fallthru
    _

// kernel: gpt_layer_forward.12
$region0: #{gpt_layer_forward.12}
  #allocation0 [shape = 'u32[]', space=smem, size = 0x4, offset = 0x4, fixed_abs, tag = 'smem constant byte address 0x4 - core index']
  #allocation1 [shape = 'u32[144,128]{1,0:T(1,128)}', space=vmem, size = 0x12000, scoped, tag = 'internal scratch']
  #allocation2 [shape = 'f32[32,64]{1,0:T(8,128)}', space=vmem, size = 0x4000, scoped, tag = 'scratch operand']
  %s0 = inlined_call_operand.vmem [shape: bf16[32,64], index: 0, kind: input, shape index: {}]
  %s1 = inlined_call_operand.hbm [shape: bf16[3,64,64], index: 1, kind: input, shape index: {}]
  %s2 = inlined_call_operand.vmem [shape: f32[3,1,64], index: 2, kind: input, shape index: {}]
  %s3 = inlined_call_operand.vmem [shape: bf16[3,32,64], index: 3, kind: output, shape index: {}]
  %s4 = sld [smem:[#allocation0]]
  $region57: #{gpt_layer_forward.12} parent=0
    _
  %s6 = ssub.s32 1, %s4
  %s7 = scalar_select 0, %s6, %s4
  $region1: #{gpt_layer_forward.12} parent=0
    #allocation3 [shape = 'u8[32768]{0}', space=vmem, size = 0x8000, scoped, tag = 'input window, operand 1']
    #allocation4 [shape = 's32[2]{0}', space=sflag, size = 0x8, scoped, tag = 'scoped memory for gpt_layer_forward.12']
    %8 = vsyncpa [#allocation4], 0
    %s9 = scalar_lea.sflag [#allocation4], 1
    %10 = vsyncpa %s9, 0
    loop: start=0, step=1, limit=5
    $region2: #{gpt_layer_forward.12} parent=1 // loop_pre_header
      _
    $region3: #{gpt_layer_forward.12} parent=1 // loop_header
      %s12 = sphi 0, %s16
      %p13 = scmp.ge.s32.totalorder %s12, 5
      %s19 = sphi 0, %s45
      %s20 = sphi 0, %s41
      %s21 = sphi 0, %s37
      %s22 = sphi 0, %s33
      %s23 = sphi 0, %s19
      %s24 = sphi 0, %s20
      %s25 = sphi 0, %s21
      %s26 = sphi 0, %s22
      %s27 = sphi 0, %s23
      %s28 = sphi 0, %s24
      %s29 = sphi 0, %s25
      %s30 = sphi 0, %s26
      %s50 = sphi 0, %s52
      %s53 = sphi 0, %s50
      %s54 = sphi 0, %s53
      %s70 = sphi 0, %s54
      %s80 = sphi 0, %s82
      %s83 = sphi 0, %s80
      %s84 = sphi 0, %s83
      %s100 = sphi 0, %s84
      %s108 = sphi 0, %s110
      %s111 = sphi 0, %s108
      %s112 = sphi 0, %s111
      %s128 = sphi 0, %s112
      %s138 = sphi 0, %s140
      %s141 = sphi 0, %s138
      %s142 = sphi 0, %s141
      %s158 = sphi 0, %s142
    $region4: #{gpt_layer_forward.12} parent=1 // loop_header_branch
      %15 = sbr.rel (%p13) target = $region8
    $region5: #{gpt_layer_forward.12} parent=1 // loop_body
      %s17 = ssub.s32 %s12, 1
      %s18 = ssub.s32 %s12, 2
      %s31 = sadd.s32 1, %s22
      %p32 = scmp.ge.s32.totalorder %s31, 1
      %s33 = scalar_select %p32, 0, %s31
      %s34 = sadd.s32 1, %s21
      %s35 = scalar_select %p32, %s34, %s21
      %p36 = scmp.ge.s32.totalorder %s35, 1
      %s37 = scalar_select %p36, 0, %s35
      %s38 = sadd.s32 1, %s20
      %s39 = scalar_select %p36, %s38, %s20
      %p40 = scmp.ge.s32.totalorder %s39, 1
      %s41 = scalar_select %p40, 0, %s39
      %s42 = sadd.s32 1, %s19
      %s43 = scalar_select %p40, %s42, %s19
      %p44 = scmp.ge.s32.totalorder %s43, 3
      %s45 = scalar_select %p44, 0, %s43
      %s46 = ssub.s32 %s20, %s41
      %s47 = ssub.s32 %s22, %s33
      %s48 = sor.u32 %s46, %s47
      %p49 = scmp.eq.s32.totalorder %s48, 0
      %s51 = sadd.s32 %s50, 1
      %s52 = scalar_select %p49, %s50, %s51
      %p55 = pneg %p49
      %p56 = scmp.eq.s32.totalorder %s12, 2
      %p57 = por %p55, %p56
      %p58 = scmp.ne.s32.totalorder %s50, %s53
      %p59 = scmp.eq.s32.totalorder %s12, 0
      %p60 = por %p58, %p59
      %p61 = scmp.ne.s32.totalorder %s50, %s53
      %p62 = scmp.eq.s32.totalorder %s17, 2
      %p63 = por %p61, %p62
      %p64 = scmp.ne.s32.totalorder %s53, %s54
      %p65 = scmp.eq.s32.totalorder %s17, 0
      %p66 = por %p64, %p65
      %p67 = scmp.ne.s32.totalorder %s53, %s54
      %p68 = scmp.eq.s32.totalorder %s18, 2
      %p69 = por %p67, %p68
      %p71 = scmp.ne.s32.totalorder %s54, %s70
      %p72 = scmp.eq.s32.totalorder %s18, 0
      %p73 = por %p71, %p72
      %s74 = ssub.s32 %s19, %s45
      %s75 = ssub.s32 %s22, %s33
      %s76 = sor.u32 %s74, %s75
      %s77 = ssub.s32 %s21, %s37
      %s78 = sor.u32 %s76, %s77
      %p79 = scmp.eq.s32.totalorder %s78, 0
      %s81 = sadd.s32 %s80, 1
      %s82 = scalar_select %p79, %s80, %s81
      %p85 = pneg %p79
      %p86 = scmp.eq.s32.totalorder %s12, 2
      %p87 = por %p85, %p86
      %p88 = scmp.ne.s32.totalorder %s80, %s83
      %p89 = scmp.eq.s32.totalorder %s12, 0
      %p90 = por %p88, %p89
      %p91 = scmp.ne.s32.totalorder %s80, %s83
      %p92 = scmp.eq.s32.totalorder %s17, 2
      %p93 = por %p91, %p92
      %p94 = scmp.ne.s32.totalorder %s83, %s84
      %p95 = scmp.eq.s32.totalorder %s17, 0
      %p96 = por %p94, %p95
      %p97 = scmp.ne.s32.totalorder %s83, %s84
      %p98 = scmp.eq.s32.totalorder %s18, 2
      %p99 = por %p97, %p98
      %p101 = scmp.ne.s32.totalorder %s84, %s100
      %p102 = scmp.eq.s32.totalorder %s18, 0
      %p103 = por %p101, %p102
      %s104 = ssub.s32 %s19, %s45
      %s105 = ssub.s32 %s21, %s37
      %s106 = sor.u32 %s104, %s105
      %p107 = scmp.eq.s32.totalorder %s106, 0
      %s109 = sadd.s32 %s108, 1
      %s110 = scalar_select %p107, %s108, %s109
      %p113 = pneg %p107
      %p114 = scmp.eq.s32.totalorder %s12, 2
      %p115 = por %p113, %p114
      %p116 = scmp.ne.s32.totalorder %s108, %s111
      %p117 = scmp.eq.s32.totalorder %s12, 0
      %p118 = por %p116, %p117
      %p119 = scmp.ne.s32.totalorder %s108, %s111
      %p120 = scmp.eq.s32.totalorder %s17, 2
      %p121 = por %p119, %p120
      %p122 = scmp.ne.s32.totalorder %s111, %s112
      %p123 = scmp.eq.s32.totalorder %s17, 0
      %p124 = por %p122, %p123
      %p125 = scmp.ne.s32.totalorder %s111, %s112
      %p126 = scmp.eq.s32.totalorder %s18, 2
      %p127 = por %p125, %p126
      %p129 = scmp.ne.s32.totalorder %s112, %s128
      %p130 = scmp.eq.s32.totalorder %s18, 0
      %p131 = por %p129, %p130
      %s132 = ssub.s32 %s19, %s45
      %s133 = ssub.s32 %s20, %s41
      %s134 = sor.u32 %s132, %s133
      %s135 = ssub.s32 %s21, %s37
      %s136 = sor.u32 %s134, %s135
      %p137 = scmp.eq.s32.totalorder %s136, 0
      %s139 = sadd.s32 %s138, 1
      %s140 = scalar_select %p137, %s138, %s139
      %p143 = pneg %p137
      %p144 = scmp.eq.s32.totalorder %s12, 2
      %p145 = por %p143, %p144
      %p146 = scmp.ne.s32.totalorder %s138, %s141
      %p147 = scmp.eq.s32.totalorder %s12, 0
      %p148 = por %p146, %p147
      %p149 = scmp.ne.s32.totalorder %s138, %s141
      %p150 = scmp.eq.s32.totalorder %s17, 2
      %p151 = por %p149, %p150
      %p152 = scmp.ne.s32.totalorder %s141, %s142
      %p153 = scmp.eq.s32.totalorder %s17, 0
      %p154 = por %p152, %p153
      %p155 = scmp.ne.s32.totalorder %s141, %s142
      %p156 = scmp.eq.s32.totalorder %s18, 2
      %p157 = por %p155, %p156
      %p159 = scmp.ne.s32.totalorder %s142, %s158
      %p160 = scmp.eq.s32.totalorder %s18, 0
      %p161 = por %p159, %p160
      %p162 = scmp.le.s32.totalorder 1, %s12
      %p163 = scmp.lt.s32.totalorder %s12, 4
      %p164 = pnand %p162, %p163
      %p165 = pneg %p164
      // Predicated region
      $region9: #{gpt_layer_forward.12} parent=5 // pred_check
        _
      $region10: #{gpt_layer_forward.12} parent=5 // pred_check_branch
        %167 = sbr.rel (%p164) target = $region12
      $region11: #{gpt_layer_forward.12} parent=5 // pred_region
        %s168 = ssub.s32 %s12, 1
        // Predicated region
        $region13: #{gpt_layer_forward.12} parent=11 // pred_check
          %p169 = pneg %p66
        $region14: #{gpt_layer_forward.12} parent=11 // pred_check_branch
          %171 = sbr.rel (%p169) target = $region16
        $region15: #{gpt_layer_forward.12} parent=11 // pred_region
          %s172 = smul.u32 4, %s24
          %p173 = scmp.lt.s32.totalorder %s172, 3
          %s174 = scalar_select %p173, %s172, 3
          %p175 = scmp.lt.s32.totalorder %s26, 0
          %s176 = scalar_select %p175, %s26, 0
          %s177 = sadd.s32 %s176, %s174
          %s178 = smul.addr %s177, 4
          %s179 = scalar_lea.vmem %s0, %s178
          %s180 = smul.u32 4, %s24
        $region16: #{gpt_layer_forward.12} parent=11 // pred_fallthru
          _
      $region12: #{gpt_layer_forward.12} parent=5 // pred_fallthru
        _
      %p181 = scmp.lt.s32.totalorder %s12, 3
      // Predicated region
      $region17: #{gpt_layer_forward.12} parent=5 // pred_check
        %p182 = pneg %p181
      $region18: #{gpt_layer_forward.12} parent=5 // pred_check_branch
        %184 = sbr.rel (%p182) target = $region20
      $region19: #{gpt_layer_forward.12} parent=5 // pred_region
        // Predicated region
        $region21: #{gpt_layer_forward.12} parent=19 // pred_check
          %p185 = pneg %p90
        $region22: #{gpt_layer_forward.12} parent=19 // pred_check_branch
          %187 = sbr.rel (%p185) target = $region24
        $region23: #{gpt_layer_forward.12} parent=19 // pred_region
          %s188 = sand.u32 %s80, 1
          %s189 = scalar_lea.sflag [#allocation4], %s188
          %s190 = sand.u32 %s80, 1
          %s191 = smul.addr %s190, 32
          %s192 = scalar_lea.vmem [#allocation3], %s191
          %s193 = smul.u32 8, %s22
          %s195 = ssub.s32 512, 512
          %196 = vsyncadd %s189, %s195
          %s197 = sadd.s32 %s21, %s193
          %s198 = smul.addr %s19, 8
          %s199 = sadd.s32 %s197, %s198
          %s200 = smul.addr %s199, 64
          %s201 = scalar_lea.hbm %s1, %s200
          %s202 = sshll.u32 %s192, 4
          %s203 = int_to_ptr.vmem [resolvable:$true] %s202
          %208 = dma.hbm_to_vmem [thread:$0]  %s201, 512, %s203, %s189, 64, 64, 4
        $region24: #{gpt_layer_forward.12} parent=19 // pred_fallthru
          _
        // Predicated region
        $region25: #{gpt_layer_forward.12} parent=19 // pred_check
          %p209 = pneg %p118
        $region26: #{gpt_layer_forward.12} parent=19 // pred_check_branch
          %211 = sbr.rel (%p209) target = $region28
        $region27: #{gpt_layer_forward.12} parent=19 // pred_region
          %p212 = scmp.lt.s32.totalorder %s19, 2
          %s213 = scalar_select %p212, %s19, 2
          %p214 = scmp.lt.s32.totalorder %s21, 0
          %s215 = scalar_select %p214, %s21, 0
          %s216 = sadd.s32 %s215, %s213
          %s217 = scalar_lea.vmem %s2, %s216
        $region28: #{gpt_layer_forward.12} parent=19 // pred_fallthru
          _
      $region20: #{gpt_layer_forward.12} parent=5 // pred_fallthru
        _
      %p218 = scmp.le.s32.totalorder 1, %s12
      %p219 = scmp.lt.s32.totalorder %s12, 4
      %p220 = pnand %p218, %p219
      %p221 = pneg %p220
      // Predicated region
      $region29: #{gpt_layer_forward.12} parent=5 // pred_check
        _
      $region30: #{gpt_layer_forward.12} parent=5 // pred_check_branch
        %223 = sbr.rel (%p220) target = $region32
      $region31: #{gpt_layer_forward.12} parent=5 // pred_region
        %s224 = ssub.s32 %s12, 1
        %s225 = sand.u32 %s83, 1
        %s226 = scalar_lea.sflag [#allocation4], %s225
        %s227 = sand.u32 %s83, 1
        %s228 = smul.addr %s227, 32
        %s229 = scalar_lea.vmem [#allocation3], %s228
        // Predicated region
        $region33: #{gpt_layer_forward.12} parent=31 // pred_check
          %p230 = pneg %p96
        $region34: #{gpt_layer_forward.12} parent=31 // pred_check_branch
          %232 = sbr.rel (%p230) target = $region36
        $region35: #{gpt_layer_forward.12} parent=31 // pred_region
          %233 = dma.done %s226, 512
        $region36: #{gpt_layer_forward.12} parent=31 // pred_fallthru
          _
        %s234 = smul.u32 4, %s24
        %p235 = scmp.lt.s32.totalorder %s234, 3
        %s236 = scalar_select %p235, %s234, 3
        %p237 = scmp.lt.s32.totalorder %s26, 0
        %s238 = scalar_select %p237, %s26, 0
        %s239 = sadd.s32 %s238, %s236
        %s240 = smul.addr %s239, 4
        %s241 = scalar_lea.vmem %s0, %s240
        %p242 = pneg %p66
        %p243 = pneg %p63
        %s244 = sand.u32 %s83, 1
        %s245 = scalar_lea.sflag [#allocation4], %s244
        %s246 = sand.u32 %s83, 1
        %s247 = smul.addr %s246, 32
        %s248 = scalar_lea.vmem [#allocation3], %s247
        %p249 = pneg %p96
        %p250 = pneg %p93
        %p251 = scmp.lt.s32.totalorder %s23, 2
        %s252 = scalar_select %p251, %s23, 2
        %p253 = scmp.lt.s32.totalorder %s25, 0
        %s254 = scalar_select %p253, %s25, 0
        %s255 = sadd.s32 %s254, %s252
        %s256 = scalar_lea.vmem %s2, %s255
        %p257 = pneg %p124
        %p258 = pneg %p121
        %p259 = pneg %p154
        %p260 = pneg %p151
        %s261 = smul.u32 4, %s24
        %p262 = scmp.lt.s32.totalorder %s23, 2
        %s263 = scalar_select %p262, %s23, 2
        %p264 = scmp.lt.s32.totalorder %s261, 3
        %s265 = scalar_select %p264, %s261, 3
        %p266 = scmp.lt.s32.totalorder %s25, 0
        %s267 = scalar_select %p266, %s25, 0
        %s268 = sadd.s32 %s267, %s265
        %s269 = smul.addr %s263, 4
        %s270 = sadd.s32 %s268, %s269
        %s271 = smul.addr %s270, 4
        %s272 = scalar_lea.vmem %s3, %s271
        %s273 = smul.u32 4, %s24
        %p274 = scmp.lt.s32.totalorder %s273, 3
        %s275 = scalar_select %p274, %s273, 3
        %p276 = scmp.lt.s32.totalorder %s26, 0
        %s277 = scalar_select %p276, %s26, 0
        %s278 = sadd.s32 %s277, %s275
        %s279 = smul.addr %s278, 4
        %s280 = scalar_lea.vmem %s0, %s279
        %s281 = smul.u32 4, %s24
        %s282 = smul.u32 8, %s26
        %p283 = scmp.lt.s32.totalorder %s23, 2
        %s284 = scalar_select %p283, %s23, 2
        %p285 = scmp.lt.s32.totalorder %s25, 0
        %s286 = scalar_select %p285, %s25, 0
        %s287 = sadd.s32 %s286, %s284
        %s288 = scalar_lea.vmem %s2, %s287
        %s289 = smul.u32 4, %s24
        %p290 = scmp.lt.s32.totalorder %s23, 2
        %s291 = scalar_select %p290, %s23, 2
        %p292 = scmp.lt.s32.totalorder %s289, 3
        %s293 = scalar_select %p292, %s289, 3
        %p294 = scmp.lt.s32.totalorder %s25, 0
        %s295 = scalar_select %p294, %s25, 0
        %s296 = sadd.s32 %s295, %s293
        %s297 = smul.addr %s291, 4
        %s298 = sadd.s32 %s296, %s297
        %s299 = smul.addr %s298, 4
        %s300 = scalar_lea.vmem %s3, %s299
        %s301 = smul.u32 4, %s24
        %p303 = scmp.eq.s32.totalorder %s26, 0
        // Predicated region
        $region37: #{gpt_layer_forward.12} parent=31 // pred_check
          %p304 = pneg %p303
        $region38: #{gpt_layer_forward.12} parent=31 // pred_check_branch
          %306 = sbr.rel (%p304) target = $region40
        $region39: #{gpt_layer_forward.12} parent=31 // pred_region
          %vm307 = vcmask 523264
          %308 = vst.msk [vmem:[#allocation2] sm:$0xff] %vm307, 0.0
          %309 = vst.msk [vmem:[#allocation2 + $0x8] sm:$0xff] %vm307, 0.0
          %310 = vst.msk [vmem:[#allocation2 + $0x10] sm:$0xff] %vm307, 0.0
          %311 = vst.msk [vmem:[#allocation2 + $0x18] sm:$0xff] %vm307, 0.0
        $region40: #{gpt_layer_forward.12} parent=31 // pred_fallthru
          _
        %v312 = vld [vmem:[#allocation2] sm:$0xff]
        %v313 = vld [vmem:[#allocation2 + $0x8] sm:$0xff]
        %v314 = vld [vmem:[#allocation2 + $0x10] sm:$0xff]
        %v315 = vld [vmem:[#allocation2 + $0x18] sm:$0xff]
        %v316 = vld [vmem:[%s280] sm:$0xf]
        %v317 = vld [vmem:[%s280 + $0x4] sm:$0xf]
        %v318 = vld [vmem:[%s280 + $0x8] sm:$0xf]
        %v319 = vld [vmem:[%s280 + $0xc] sm:$0xf]
        %v320 = vld [vmem:[%s229] sm:$0xf]
        %v321 = vld [vmem:[%s229 + $0x4] sm:$0xf]
        %v322 = vld [vmem:[%s229 + $0x8] sm:$0xf]
        %v323 = vld [vmem:[%s229 + $0xc] sm:$0xf]
        %v324 = vld [vmem:[%s229 + $0x10] sm:$0xf]
        %v325 = vld [vmem:[%s229 + $0x14] sm:$0xf]
        %v326 = vld [vmem:[%s229 + $0x18] sm:$0xf]
        %v327 = vld [vmem:[%s229 + $0x1c] sm:$0xf]
        %v332 = vunpack.c.l.b16 %v316
        %v333 = vunpack.c.l.b16 %v317
        %v334 = vunpack.c.l.b16 %v318
        %v335 = vunpack.c.l.b16 %v319
        %v336 = vpack.c.b16 %v333, %v332
        %v337 = vpack.c.b16 %v335, %v334
        %v346 = vunpack.c.l.b16 %v320
        %v347 = vunpack.c.l.b16 %v321
        %v348 = vunpack.c.l.b16 %v322
        %v349 = vunpack.c.l.b16 %v323
        %v350 = vunpack.c.l.b16 %v324
        %v351 = vunpack.c.l.b16 %v325
        %v352 = vunpack.c.l.b16 %v326
        %v353 = vunpack.c.l.b16 %v327
        %v354 = vpack.c.b16 %v347, %v346
        %v355 = vpack.c.b16 %v349, %v348
        %v356 = vpack.c.b16 %v351, %v350
        %v357 = vpack.c.b16 %v353, %v352
        %vm362 = vcmask 523264
        %v364 = vsel %vm362, %v336, 0
        %v367 = vsel %vm362, %v337, 0
        %369 = vmatprep.subr.bf16.mxu0 0
        %370 = vmatpush1.bf16.msra.mxu0 0
        %371 = vmatprep.subr.bf16.mxu0 0
        %372 = vmatpush1.bf16.msra.mxu0 0
        %373 = vmatprep.subr.bf16.mxu0 0
        %374 = vmatpush1.bf16.msra.mxu0 0
        %375 = vmatprep.subr.bf16.mxu0 0
        %376 = vmatpush1.bf16.msra.mxu0 0
        %377 = vmatprep.subr.bf16.mxu0 0
        %378 = vmatpush1.bf16.msra.mxu0 %v357
        %379 = vmatprep.subr.bf16.mxu0 0
        %380 = vmatpush1.bf16.msra.mxu0 %v356
        %381 = vmatprep.subr.bf16.mxu0 0
        %382 = vmatpush1.bf16.msra.mxu0 %v355
        %383 = vmatprep.subr.bf16.mxu0 0
        %384 = vmatpush1.bf16.msra.mxu0 %v354
        %385 = vmatprep.subr.bf16.mxu0 0
        %386 = vmatpush2.bf16.msra.mxu0 0
        %387 = vmatprep.subr.bf16.mxu0 0
        %388 = vmatpush2.bf16.msra.mxu0 0
        %389 = vmatprep.subr.bf16.mxu0 0
        %390 = vmatpush2.bf16.msra.mxu0 0
        %391 = vmatprep.subr.bf16.mxu0 0
        %392 = vmatpush2.bf16.msra.mxu0 0
        %393 = vmatprep.subr.bf16.mxu0 0
        %394 = vmatpush2.bf16.msra.mxu0 0
        %395 = vmatprep.subr.bf16.mxu0 0
        %396 = vmatpush2.bf16.msra.mxu0 0
        %397 = vmatprep.subr.bf16.mxu0 0
        %398 = vmatpush2.bf16.msra.mxu0 0
        %399 = vmatprep.subr.bf16.mxu0 0
        %400 = vmatpush2.bf16.msra.mxu0 0
        %401 = vmatprep.mubr.bf16.mxu0 0
        %402 = vmatmul.mubr.bf16.gmra.mxu0 %v364
        %v403 = vpop.f32.mrf.mxu0
        %v404 = vadd.f32 0.0, %v403
        %v405 = vpop.f32.mrf.mxu0
        %v406 = vpop.f32.mrf.mxu0
        %v407 = vadd.f32 0.0, %v406
        %v408 = vpop.f32.mrf.mxu0
        %409 = vmatprep.mubr.bf16.mxu0 0
        %410 = vmatmul.mubr.bf16.gmra.mxu0 %v367
        %v411 = vpop.f32.mrf.mxu0
        %v412 = vadd.f32 0.0, %v411
        %v413 = vpop.f32.mrf.mxu0
        %v414 = vpop.f32.mrf.mxu0
        %v415 = vadd.f32 0.0, %v414
        %v416 = vpop.f32.mrf.mxu0
        %417 = vdwg.mxu0
        %v418 = vadd.f32 %v312, %v404
        %v419 = vadd.f32 %v313, %v407
        %v420 = vadd.f32 %v314, %v412
        %v421 = vadd.f32 %v315, %v415
        %422 = vst.msk [vmem:[#allocation2] sm:$0xff] %vm362, %v418
        %423 = vst.msk [vmem:[#allocation2 + $0x8] sm:$0xff] %vm362, %v419
        %424 = vst.msk [vmem:[#allocation2 + $0x10] sm:$0xff] %vm362, %v420
        %425 = vst.msk [vmem:[#allocation2 + $0x18] sm:$0xff] %vm362, %v421
        // Predicated region
        $region41: #{gpt_layer_forward.12} parent=31 // pred_check
          %p426 = pneg %p303
        $region42: #{gpt_layer_forward.12} parent=31 // pred_check_branch
          %428 = sbr.rel (%p426) target = $region44
        $region43: #{gpt_layer_forward.12} parent=31 // pred_region
          %v429 = vld [vmem:[#allocation2] sm:$0xff]
          %v430 = vld [vmem:[#allocation2 + $0x8] sm:$0xff]
          %v431 = vld [vmem:[#allocation2 + $0x10] sm:$0xff]
          %v432 = vld [vmem:[#allocation2 + $0x18] sm:$0xff]
          %v433 = vld [vmem:[%s288] sm:$0x1]
          %v435 = vlaneseq
          %v436 = vshrl.u32 %v435, 7
          %v437 = vsub.s32 0, %v436
          %v438 = vrot.slane %v433, %v437
          %v440 = vadd.f32 %v429, %v438
          %v441 = vadd.f32 %v430, %v438
          %v442 = vadd.f32 %v431, %v438
          %v443 = vadd.f32 %v432, %v438
          %v444 = vpack.c.bf16 %v441, %v440
          %v445 = vpack.c.bf16 %v443, %v442
          %v448 = vunpack.c.l.b16 %v444
          %v449 = vunpack.c.h.b16 %v444
          %v450 = vunpack.c.l.b16 %v445
          %v451 = vunpack.c.h.b16 %v445
          %v452 = vpack.c.b16 %v448, %v448
          %v453 = vpack.c.b16 %v449, %v449
          %v454 = vpack.c.b16 %v450, %v450
          %v455 = vpack.c.b16 %v451, %v451
          %vm460 = vcmask 519168
          %461 = vst.msk [vmem:[%s300] sm:$0xf] %vm460, %v452
          %462 = vst.msk [vmem:[%s300 + $0x4] sm:$0xf] %vm460, %v453
          %463 = vst.msk [vmem:[%s300 + $0x8] sm:$0xf] %vm460, %v454
          %464 = vst.msk [vmem:[%s300 + $0xc] sm:$0xf] %vm460, %v455
        $region44: #{gpt_layer_forward.12} parent=31 // pred_fallthru
          _
        %s465 = smul.u32 4, %s24
        %p466 = scmp.lt.s32.totalorder %s23, 2
        %s467 = scalar_select %p466, %s23, 2
        %p468 = scmp.lt.s32.totalorder %s465, 3
        %s469 = scalar_select %p468, %s465, 3
        %p470 = scmp.lt.s32.totalorder %s25, 0
        %s471 = scalar_select %p470, %s25, 0
        %s472 = sadd.s32 %s471, %s469
        %s473 = smul.addr %s467, 4
        %s474 = sadd.s32 %s472, %s473
        %s475 = smul.addr %s474, 4
        %s476 = scalar_lea.vmem %s3, %s475
        // Predicated region
        $region45: #{gpt_layer_forward.12} parent=31 // pred_check
          %p477 = pneg %p151
        $region46: #{gpt_layer_forward.12} parent=31 // pred_check_branch
          %479 = sbr.rel (%p477) target = $region48
        $region47: #{gpt_layer_forward.12} parent=31 // pred_region
          %s480 = smul.u32 4, %s24
        $region48: #{gpt_layer_forward.12} parent=31 // pred_fallthru
          _
      $region32: #{gpt_layer_forward.12} parent=5 // pred_fallthru
        _
      %p481 = scmp.le.s32.totalorder 2, %s12
      // Predicated region
      $region49: #{gpt_layer_forward.12} parent=5 // pred_check
        %p482 = pneg %p481
      $region50: #{gpt_layer_forward.12} parent=5 // pred_check_branch
        %484 = sbr.rel (%p482) target = $region52
      $region51: #{gpt_layer_forward.12} parent=5 // pred_region
        %s485 = ssub.s32 %s12, 2
        // Predicated region
        $region53: #{gpt_layer_forward.12} parent=51 // pred_check
          %p486 = pneg %p157
        $region54: #{gpt_layer_forward.12} parent=51 // pred_check_branch
          %488 = sbr.rel (%p486) target = $region56
        $region55: #{gpt_layer_forward.12} parent=51 // pred_region
          %s489 = smul.u32 4, %s28
          %p490 = scmp.lt.s32.totalorder %s27, 2
          %s491 = scalar_select %p490, %s27, 2
          %p492 = scmp.lt.s32.totalorder %s489, 3
          %s493 = scalar_select %p492, %s489, 3
          %p494 = scmp.lt.s32.totalorder %s29, 0
          %s495 = scalar_select %p494, %s29, 0
          %s496 = sadd.s32 %s495, %s493
          %s497 = smul.addr %s491, 4
          %s498 = sadd.s32 %s496, %s497
          %s499 = smul.addr %s498, 4
          %s500 = scalar_lea.vmem %s3, %s499
        $region56: #{gpt_layer_forward.12} parent=51 // pred_fallthru
          _
      $region52: #{gpt_layer_forward.12} parent=5 // pred_fallthru
        _
    $region6: #{gpt_layer_forward.12} parent=1 // loop_footer
      %s16 = sadd.s32 1, %s12
    $region7: #{gpt_layer_forward.12} parent=1 // loop_footer_branch
      %11 = sbr.rel target = $region3
    $region8: #{gpt_layer_forward.12} parent=1 // loop_exit
      _
    %501 = vsyncpa [#allocation4], 1
    %s502 = scalar_lea.sflag [#allocation4], 1
    %503 = vsyncpa %s502, 1

// kernel: gpt_layer_forward.13
$region0: #{gpt_layer_forward.13}
  #allocation0 [shape = 'u32[]', space=smem, size = 0x4, offset = 0x4, fixed_abs, tag = 'smem constant byte address 0x4 - core index']
  #allocation1 [shape = 'u32[144,128]{1,0:T(1,128)}', space=vmem, size = 0x12000, scoped, tag = 'internal scratch']
  #allocation2 [shape = 'f32[16,1]{1,0:T(8,128)}', space=vmem, size = 0x2000, scoped, tag = 'scratch operand']
  #allocation3 [shape = 'f32[16,1]{1,0:T(8,128)}', space=vmem, size = 0x2000, scoped, tag = 'scratch operand']
  #allocation4 [shape = 'f32[16,16]{1,0:T(8,128)}', space=vmem, size = 0x2000, scoped, tag = 'scratch operand']
  #allocation5 [shape = 'f32[16,16]{1,0:T(8,128)}', space=vmem, size = 0x2000, scoped, tag = 'scratch operand']
  #allocation6 [shape = 's32[1]{0}', space=sflag, size = 0x4, scoped, tag = 'scoped memory for gpt_layer_forward.13']
  #allocation7 [shape = 'u8[512]{0}', space=smem, size = 0x200, scoped, tag = 'prefetched SMEM operand 0']
  %s0 = inlined_call_operand.vmem [shape: f32[4], index: 0, kind: input, shape index: {}]
  %s1 = inlined_call_operand.vmem [shape: bf16[3,2,4,16,16], index: 1, kind: input, shape index: {}, may-alias: {1,2,3}]
  %s2 = inlined_call_operand.vmem [shape: bf16[3,2,4,16,16], index: 2, kind: input, shape index: {}, may-alias: {1,2,3}]
  %s3 = inlined_call_operand.vmem [shape: bf16[3,2,4,16,16], index: 3, kind: input, shape index: {}, may-alias: {1,2,3}]
  %s4 = inlined_call_operand.vmem [shape: bf16[2,4,16,16], index: 4, kind: output, shape index: {}]
  %s5 = sld [smem:[#allocation0]]
  $region57: #{gpt_layer_forward.13} parent=0
    _
  %s7 = ssub.s32 1, %s5
  %s8 = scalar_select 0, %s7, %s5
  %s9 = sshll.u32 %s0, 4
  %s10 = int_to_ptr.vmem [resolvable:$true] %s9
  %12 = dma.vmem_to_smem %s10, 16, [#allocation7], [#allocation6]
  %13 = dma.done [#allocation6], 16
  %14 = sfence
  loop: start=0, step=1, limit=10
  $region2: #{gpt_layer_forward.13} parent=0 // loop_pre_header
    _
  $region3: #{gpt_layer_forward.13} parent=0 // loop_header
    %s16 = sphi 0, %s20
    %p17 = scmp.ge.s32.totalorder %s16, 10
    %s23 = sphi 0, %s49
    %s24 = sphi 0, %s45
    %s25 = sphi 0, %s41
    %s26 = sphi 0, %s37
    %s27 = sphi 0, %s23
    %s28 = sphi 0, %s24
    %s29 = sphi 0, %s25
    %s30 = sphi 0, %s26
    %s31 = sphi 0, %s27
    %s32 = sphi 0, %s28
    %s33 = sphi 0, %s29
    %s34 = sphi 0, %s30
    %s56 = sphi 0, %s58
    %s59 = sphi 0, %s56
    %s60 = sphi 0, %s59
    %s76 = sphi 0, %s60
    %s90 = sphi 0, %s92
    %s93 = sphi 0, %s90
    %s94 = sphi 0, %s93
    %s110 = sphi 0, %s94
    %s124 = sphi 0, %s126
    %s127 = sphi 0, %s124
    %s128 = sphi 0, %s127
    %s144 = sphi 0, %s128
    %s154 = sphi 0, %s156
    %s157 = sphi 0, %s154
    %s158 = sphi 0, %s157
    %s174 = sphi 0, %s158
  $region4: #{gpt_layer_forward.13} parent=0 // loop_header_branch
    %19 = sbr.rel (%p17) target = $region8
  $region5: #{gpt_layer_forward.13} parent=0 // loop_body
    %s21 = ssub.s32 %s16, 1
    %s22 = ssub.s32 %s16, 2
    %s35 = sadd.s32 1, %s26
    %p36 = scmp.ge.s32.totalorder %s35, 1
    %s37 = scalar_select %p36, 0, %s35
    %s38 = sadd.s32 1, %s25
    %s39 = scalar_select %p36, %s38, %s25
    %p40 = scmp.ge.s32.totalorder %s39, 1
    %s41 = scalar_select %p40, 0, %s39
    %s42 = sadd.s32 1, %s24
    %s43 = scalar_select %p40, %s42, %s24
    %p44 = scmp.ge.s32.totalorder %s43, 4
    %s45 = scalar_select %p44, 0, %s43
    %s46 = sadd.s32 1, %s23
    %s47 = scalar_select %p44, %s46, %s23
    %p48 = scmp.ge.s32.totalorder %s47, 2
    %s49 = scalar_select %p48, 0, %s47
    %s50 = ssub.s32 %s23, %s49
    %s51 = ssub.s32 %s24, %s45
    %s52 = sor.u32 %s50, %s51
    %s53 = ssub.s32 %s25, %s41
    %s54 = sor.u32 %s52, %s53
    %p55 = scmp.eq.s32.totalorder %s54, 0
    %s57 = sadd.s32 %s56, 1
    %s58 = scalar_select %p55, %s56, %s57
    %p61 = pneg %p55
    %p62 = scmp.eq.s32.totalorder %s16, 7
    %p63 = por %p61, %p62
    %p64 = scmp.ne.s32.totalorder %s56, %s59
    %p65 = scmp.eq.s32.totalorder %s16, 0
    %p66 = por %p64, %p65
    %p67 = scmp.ne.s32.totalorder %s56, %s59
    %p68 = scmp.eq.s32.totalorder %s21, 7
    %p69 = por %p67, %p68
    %p70 = scmp.ne.s32.totalorder %s59, %s60
    %p71 = scmp.eq.s32.totalorder %s21, 0
    %p72 = por %p70, %p71
    %p73 = scmp.ne.s32.totalorder %s59, %s60
    %p74 = scmp.eq.s32.totalorder %s22, 7
    %p75 = por %p73, %p74
    %p77 = scmp.ne.s32.totalorder %s60, %s76
    %p78 = scmp.eq.s32.totalorder %s22, 0
    %p79 = por %p77, %p78
    %p80 = scmp.lt.s32.totalorder %s26, %s25
    %s81 = scalar_select %p80, %s26, %s25
    %p82 = scmp.lt.s32.totalorder %s37, %s41
    %s83 = scalar_select %p82, %s37, %s41
    %s84 = ssub.s32 %s23, %s49
    %s85 = ssub.s32 %s24, %s45
    %s86 = sor.u32 %s84, %s85
    %s87 = ssub.s32 %s81, %s83
    %s88 = sor.u32 %s86, %s87
    %p89 = scmp.eq.s32.totalorder %s88, 0
    %s91 = sadd.s32 %s90, 1
    %s92 = scalar_select %p89, %s90, %s91
    %p95 = pneg %p89
    %p96 = scmp.eq.s32.totalorder %s16, 7
    %p97 = por %p95, %p96
    %p98 = scmp.ne.s32.totalorder %s90, %s93
    %p99 = scmp.eq.s32.totalorder %s16, 0
    %p100 = por %p98, %p99
    %p101 = scmp.ne.s32.totalorder %s90, %s93
    %p102 = scmp.eq.s32.totalorder %s21, 7
    %p103 = por %p101, %p102
    %p104 = scmp.ne.s32.totalorder %s93, %s94
    %p105 = scmp.eq.s32.totalorder %s21, 0
    %p106 = por %p104, %p105
    %p107 = scmp.ne.s32.totalorder %s93, %s94
    %p108 = scmp.eq.s32.totalorder %s22, 7
    %p109 = por %p107, %p108
    %p111 = scmp.ne.s32.totalorder %s94, %s110
    %p112 = scmp.eq.s32.totalorder %s22, 0
    %p113 = por %p111, %p112
    %p114 = scmp.lt.s32.totalorder %s26, %s25
    %s115 = scalar_select %p114, %s26, %s25
    %p116 = scmp.lt.s32.totalorder %s37, %s41
    %s117 = scalar_select %p116, %s37, %s41
    %s118 = ssub.s32 %s23, %s49
    %s119 = ssub.s32 %s24, %s45
    %s120 = sor.u32 %s118, %s119
    %s121 = ssub.s32 %s115, %s117
    %s122 = sor.u32 %s120, %s121
    %p123 = scmp.eq.s32.totalorder %s122, 0
    %s125 = sadd.s32 %s124, 1
    %s126 = scalar_select %p123, %s124, %s125
    %p129 = pneg %p123
    %p130 = scmp.eq.s32.totalorder %s16, 7
    %p131 = por %p129, %p130
    %p132 = scmp.ne.s32.totalorder %s124, %s127
    %p133 = scmp.eq.s32.totalorder %s16, 0
    %p134 = por %p132, %p133
    %p135 = scmp.ne.s32.totalorder %s124, %s127
    %p136 = scmp.eq.s32.totalorder %s21, 7
    %p137 = por %p135, %p136
    %p138 = scmp.ne.s32.totalorder %s127, %s128
    %p139 = scmp.eq.s32.totalorder %s21, 0
    %p140 = por %p138, %p139
    %p141 = scmp.ne.s32.totalorder %s127, %s128
    %p142 = scmp.eq.s32.totalorder %s22, 7
    %p143 = por %p141, %p142
    %p145 = scmp.ne.s32.totalorder %s128, %s144
    %p146 = scmp.eq.s32.totalorder %s22, 0
    %p147 = por %p145, %p146
    %s148 = ssub.s32 %s23, %s49
    %s149 = ssub.s32 %s24, %s45
    %s150 = sor.u32 %s148, %s149
    %s151 = ssub.s32 %s25, %s41
    %s152 = sor.u32 %s150, %s151
    %p153 = scmp.eq.s32.totalorder %s152, 0
    %s155 = sadd.s32 %s154, 1
    %s156 = scalar_select %p153, %s154, %s155
    %p159 = pneg %p153
    %p160 = scmp.eq.s32.totalorder %s16, 7
    %p161 = por %p159, %p160
    %p162 = scmp.ne.s32.totalorder %s154, %s157
    %p163 = scmp.eq.s32.totalorder %s16, 0
    %p164 = por %p162, %p163
    %p165 = scmp.ne.s32.totalorder %s154, %s157
    %p166 = scmp.eq.s32.totalorder %s21, 7
    %p167 = por %p165, %p166
    %p168 = scmp.ne.s32.totalorder %s157, %s158
    %p169 = scmp.eq.s32.totalorder %s21, 0
    %p170 = por %p168, %p169
    %p171 = scmp.ne.s32.totalorder %s157, %s158
    %p172 = scmp.eq.s32.totalorder %s22, 7
    %p173 = por %p171, %p172
    %p175 = scmp.ne.s32.totalorder %s158, %s174
    %p176 = scmp.eq.s32.totalorder %s22, 0
    %p177 = por %p175, %p176
    %p178 = scmp.le.s32.totalorder 1, %s16
    %p179 = scmp.lt.s32.totalorder %s16, 9
    %p180 = pnand %p178, %p179
    %p181 = pneg %p180
    // Predicated region
    $region9: #{gpt_layer_forward.13} parent=5 // pred_check
      _
    $region10: #{gpt_layer_forward.13} parent=5 // pred_check_branch
      %183 = sbr.rel (%p180) target = $region12
    $region11: #{gpt_layer_forward.13} parent=5 // pred_region
      %s184 = ssub.s32 %s16, 1
    $region12: #{gpt_layer_forward.13} parent=5 // pred_fallthru
      _
    %p185 = scmp.lt.s32.totalorder %s16, 8
    // Predicated region
    $region13: #{gpt_layer_forward.13} parent=5 // pred_check
      %p186 = pneg %p185
    $region14: #{gpt_layer_forward.13} parent=5 // pred_check_branch
      %188 = sbr.rel (%p186) target = $region16
    $region15: #{gpt_layer_forward.13} parent=5 // pred_region
      // Predicated region
      $region17: #{gpt_layer_forward.13} parent=15 // pred_check
        %p189 = pneg %p66
      $region18: #{gpt_layer_forward.13} parent=15 // pred_check_branch
        %191 = sbr.rel (%p189) target = $region20
      $region19: #{gpt_layer_forward.13} parent=15 // pred_region
        %s192 = smul.u32 2, %s25
        %p193 = scmp.lt.s32.totalorder %s23, 1
        %s194 = scalar_select %p193, %s23, 1
        %p195 = scmp.lt.s32.totalorder %s24, 3
        %s196 = scalar_select %p195, %s24, 3
        %p197 = scmp.lt.s32.totalorder %s192, 1
        %s198 = scalar_select %p197, %s192, 1
        %s199 = smul.addr %s196, 2
        %s200 = sadd.s32 %s198, %s199
        %s201 = smul.addr %s194, 8
        %s202 = sadd.s32 %s200, %s201
        %s203 = smul.addr %s202, 4
        %s204 = scalar_lea.vmem %s1, %s203
        %s205 = smul.u32 2, %s25
      $region20: #{gpt_layer_forward.13} parent=15 // pred_fallthru
        _
      // Predicated region
      $region21: #{gpt_layer_forward.13} parent=15 // pred_check
        %p206 = pneg %p100
      $region22: #{gpt_layer_forward.13} parent=15 // pred_check_branch
        %208 = sbr.rel (%p206) target = $region24
      $region23: #{gpt_layer_forward.13} parent=15 // pred_region
        %p209 = scmp.lt.s32.totalorder %s26, %s25
        %s210 = scalar_select %p209, %s26, %s25
        %s211 = smul.u32 2, %s210
        %p212 = scmp.lt.s32.totalorder %s23, 1
        %s213 = scalar_select %p212, %s23, 1
        %p214 = scmp.lt.s32.totalorder %s24, 3
        %s215 = scalar_select %p214, %s24, 3
        %p216 = scmp.lt.s32.totalorder %s211, 1
        %s217 = scalar_select %p216, %s211, 1
        %s218 = smul.addr %s215, 2
        %s219 = sadd.s32 %s217, %s218
        %s220 = smul.addr %s213, 8
        %s221 = sadd.s32 %s219, %s220
        %s222 = sadd.s32 %s221, 16
        %s223 = smul.addr %s222, 4
        %s224 = scalar_lea.vmem %s2, %s223
        %p225 = scmp.lt.s32.totalorder %s26, %s25
        %s226 = scalar_select %p225, %s26, %s25
        %s227 = smul.u32 2, %s226
      $region24: #{gpt_layer_forward.13} parent=15 // pred_fallthru
        _
      // Predicated region
      $region25: #{gpt_layer_forward.13} parent=15 // pred_check
        %p228 = pneg %p134
      $region26: #{gpt_layer_forward.13} parent=15 // pred_check_branch
        %230 = sbr.rel (%p228) target = $region28
      $region27: #{gpt_layer_forward.13} parent=15 // pred_region
        %p231 = scmp.lt.s32.totalorder %s26, %s25
        %s232 = scalar_select %p231, %s26, %s25
        %s233 = smul.u32 2, %s232
        %p234 = scmp.lt.s32.totalorder %s23, 1
        %s235 = scalar_select %p234, %s23, 1
        %p236 = scmp.lt.s32.totalorder %s24, 3
        %s237 = scalar_select %p236, %s24, 3
        %p238 = scmp.lt.s32.totalorder %s233, 1
        %s239 = scalar_select %p238, %s233, 1
        %s240 = smul.addr %s237, 2
        %s241 = sadd.s32 %s239, %s240
        %s242 = smul.addr %s235, 8
        %s243 = sadd.s32 %s241, %s242
        %s244 = sadd.s32 %s243, 32
        %s245 = smul.addr %s244, 4
        %s246 = scalar_lea.vmem %s3, %s245
        %p247 = scmp.lt.s32.totalorder %s26, %s25
        %s248 = scalar_select %p247, %s26, %s25
        %s249 = smul.u32 2, %s248
      $region28: #{gpt_layer_forward.13} parent=15 // pred_fallthru
        _
    $region16: #{gpt_layer_forward.13} parent=5 // pred_fallthru
      _
    %p250 = scmp.le.s32.totalorder 1, %s16
    %p251 = scmp.lt.s32.totalorder %s16, 9
    %p252 = pnand %p250, %p251
    %p253 = pneg %p252
    // Predicated region
    $region29: #{gpt_layer_forward.13} parent=5 // pred_check
      _
    $region30: #{gpt_layer_forward.13} parent=5 // pred_check_branch
      %255 = sbr.rel (%p252) target = $region32
    $region31: #{gpt_layer_forward.13} parent=5 // pred_region
      %s256 = ssub.s32 %s16, 1
      %s257 = smul.u32 2, %s29
      %p258 = scmp.lt.s32.totalorder %s27, 1
      %s259 = scalar_select %p258, %s27, 1
      %p260 = scmp.lt.s32.totalorder %s28, 3
      %s261 = scalar_select %p260, %s28, 3
      %p262 = scmp.lt.s32.totalorder %s257, 1
      %s263 = scalar_select %p262, %s257, 1
      %s264 = smul.addr %s261, 2
      %s265 = sadd.s32 %s263, %s264
      %s266 = smul.addr %s259, 8
      %s267 = sadd.s32 %s265, %s266
      %s268 = smul.addr %s267, 4
      %s269 = scalar_lea.vmem %s1, %s268
      %p270 = pneg %p72
      %p271 = pneg %p69
      %p272 = scmp.lt.s32.totalorder %s30, %s29
      %s273 = scalar_select %p272, %s30, %s29
      %s274 = smul.u32 2, %s273
      %p275 = scmp.lt.s32.totalorder %s27, 1
      %s276 = scalar_select %p275, %s27, 1
      %p277 = scmp.lt.s32.totalorder %s28, 3
      %s278 = scalar_select %p277, %s28, 3
      %p279 = scmp.lt.s32.totalorder %s274, 1
      %s280 = scalar_select %p279, %s274, 1
      %s281 = smul.addr %s278, 2
      %s282 = sadd.s32 %s280, %s281
      %s283 = smul.addr %s276, 8
      %s284 = sadd.s32 %s282, %s283
      %s285 = sadd.s32 %s284, 16
      %s286 = smul.addr %s285, 4
      %s287 = scalar_lea.vmem %s2, %s286
      %p288 = pneg %p106
      %p289 = pneg %p103
      %p290 = scmp.lt.s32.totalorder %s30, %s29
      %s291 = scalar_select %p290, %s30, %s29
      %s292 = smul.u32 2, %s291
      %p293 = scmp.lt.s32.totalorder %s27, 1
      %s294 = scalar_select %p293, %s27, 1
      %p295 = scmp.lt.s32.totalorder %s28, 3
      %s296 = scalar_select %p295, %s28, 3
      %p297 = scmp.lt.s32.totalorder %s292, 1
      %s298 = scalar_select %p297, %s292, 1
      %s299 = smul.addr %s296, 2
      %s300 = sadd.s32 %s298, %s299
      %s301 = smul.addr %s294, 8
      %s302 = sadd.s32 %s300, %s301
      %s303 = sadd.s32 %s302, 32
      %s304 = smul.addr %s303, 4
      %s305 = scalar_lea.vmem %s3, %s304
      %p306 = pneg %p140
      %p307 = pneg %p137
      %p308 = pneg %p170
      %p309 = pneg %p167
      %s310 = smul.u32 2, %s29
      %p311 = scmp.lt.s32.totalorder %s27, 1
      %s312 = scalar_select %p311, %s27, 1
      %p313 = scmp.lt.s32.totalorder %s28, 3
      %s314 = scalar_select %p313, %s28, 3
      %p315 = scmp.lt.s32.totalorder %s310, 1
      %s316 = scalar_select %p315, %s310, 1
      %s317 = smul.addr %s314, 2
      %s318 = sadd.s32 %s316, %s317
      %s319 = smul.addr %s312, 8
      %s320 = sadd.s32 %s318, %s319
      %s321 = smul.addr %s320, 4
      %s322 = scalar_lea.vmem %s4, %s321
      %s323 = smul.u32 2, %s29
      %p324 = scmp.lt.s32.totalorder %s27, 1
      %s325 = scalar_select %p324, %s27, 1
      %p326 = scmp.lt.s32.totalorder %s28, 3
      %s327 = scalar_select %p326, %s28, 3
      %p328 = scmp.lt.s32.totalorder %s323, 1
      %s329 = scalar_select %p328, %s323, 1
      %s330 = smul.addr %s327, 2
      %s331 = sadd.s32 %s329, %s330
      %s332 = smul.addr %s325, 8
      %s333 = sadd.s32 %s331, %s332
      %s334 = smul.addr %s333, 4
      %s335 = scalar_lea.vmem %s1, %s334
      %s336 = smul.u32 2, %s29
      %p337 = scmp.lt.s32.totalorder %s30, %s29
      %s338 = scalar_select %p337, %s30, %s29
      %s339 = smul.u32 2, %s338
      %p340 = scmp.lt.s32.totalorder %s27, 1
      %s341 = scalar_select %p340, %s27, 1
      %p342 = scmp.lt.s32.totalorder %s28, 3
      %s343 = scalar_select %p342, %s28, 3
      %p344 = scmp.lt.s32.totalorder %s339, 1
      %s345 = scalar_select %p344, %s339, 1
      %s346 = smul.addr %s343, 2
      %s347 = sadd.s32 %s345, %s346
      %s348 = smul.addr %s341, 8
      %s349 = sadd.s32 %s347, %s348
      %s350 = sadd.s32 %s349, 16
      %s351 = smul.addr %s350, 4
      %s352 = scalar_lea.vmem %s2, %s351
      %p353 = scmp.lt.s32.totalorder %s30, %s29
      %s354 = scalar_select %p353, %s30, %s29
      %s355 = smul.u32 2, %s354
      %p356 = scmp.lt.s32.totalorder %s30, %s29
      %s357 = scalar_select %p356, %s30, %s29
      %s358 = smul.u32 2, %s357
      %p359 = scmp.lt.s32.totalorder %s27, 1
      %s360 = scalar_select %p359, %s27, 1
      %p361 = scmp.lt.s32.totalorder %s28, 3
      %s362 = scalar_select %p361, %s28, 3
      %p363 = scmp.lt.s32.totalorder %s358, 1
      %s364 = scalar_select %p363, %s358, 1
      %s365 = smul.addr %s362, 2
      %s366 = sadd.s32 %s364, %s365
      %s367 = smul.addr %s360, 8
      %s368 = sadd.s32 %s366, %s367
      %s369 = sadd.s32 %s368, 32
      %s370 = smul.addr %s369, 4
      %s371 = scalar_lea.vmem %s3, %s370
      %p372 = scmp.lt.s32.totalorder %s30, %s29
      %s373 = scalar_select %p372, %s30, %s29
      %s374 = smul.u32 2, %s373
      %s375 = smul.u32 2, %s29
      %p376 = scmp.lt.s32.totalorder %s27, 1
      %s377 = scalar_select %p376, %s27, 1
      %p378 = scmp.lt.s32.totalorder %s28, 3
      %s379 = scalar_select %p378, %s28, 3
      %p380 = scmp.lt.s32.totalorder %s375, 1
      %s381 = scalar_select %p380, %s375, 1
      %s382 = smul.addr %s379, 2
      %s383 = sadd.s32 %s381, %s382
      %s384 = smul.addr %s377, 8
      %s385 = sadd.s32 %s383, %s384
      %s386 = smul.addr %s385, 4
      %s387 = scalar_lea.vmem %s4, %s386
      %s388 = smul.u32 2, %s29
      %s390 = sld [smem:[#allocation7 + %s28]]
      %p391 = scmp.eq.s32.totalorder %s30, 0
      // Predicated region
      $region33: #{gpt_layer_forward.13} parent=31 // pred_check
        %p392 = pneg %p391
      $region34: #{gpt_layer_forward.13} parent=31 // pred_check_branch
        %394 = sbr.rel (%p392) target = $region36
      $region35: #{gpt_layer_forward.13} parent=31 // pred_region
        %vm395 = vcmask 7168
        %396 = vst.msk [vmem:[#allocation2] sm:$0xff] %vm395, -1e+30
        %397 = vst.msk [vmem:[#allocation2 + $0x8] sm:$0xff] %vm395, -1e+30
        %398 = vst.msk [vmem:[#allocation3] sm:$0xff] %vm395, 0.0
        %399 = vst.msk [vmem:[#allocation3 + $0x8] sm:$0xff] %vm395, 0.0
        %vm400 = vcmask 130048
        %401 = vst.msk [vmem:[#allocation4] sm:$0xff] %vm400, 0.0
        %402 = vst.msk [vmem:[#allocation4 + $0x8] sm:$0xff] %vm400, 0.0
        %v403 = vlaneseq
        %v404 = vshrl.u32 %v403, 7
        %v405 = vadd.s32 %v404, 8
        %v406 = vlaneseq
        %v407 = vand.u32 %v406, 127
        %v408 = vsub.s32 %v404, %v407
        %v409 = vsub.s32 %v405, %v407
        %v410 = vcvt.s32.f32 %v408
        %v411 = vcvt.s32.f32 %v409
        %412 = vst.msk [vmem:[#allocation5] sm:$0xff] %vm400, %v410
        %413 = vst.msk [vmem:[#allocation5 + $0x8] sm:$0xff] %vm400, %v411
      $region36: #{gpt_layer_forward.13} parent=31 // pred_fallthru
        _
      %p414 = scmp.lt.s32.totalorder %s30, %s29
      // Predicated region
      $region37: #{gpt_layer_forward.13} parent=31 // pred_check
        %p415 = pneg %p414
      $region38: #{gpt_layer_forward.13} parent=31 // pred_check_branch
        %417 = sbr.rel (%p415) target = $region40
      $region39: #{gpt_layer_forward.13} parent=31 // pred_region
        %s418 = ssub.s32 %s29, %s30
        %s419 = smul.u32 %s418, 16
        %s420 = scvt.s32.f32 %s419
        %v421 = vld [vmem:[%s335] sm:$0xf]
        %v422 = vld [vmem:[%s335 + $0x4] sm:$0xf]
        %v423 = vld [vmem:[%s352] sm:$0xf]
        %v424 = vld [vmem:[%s352 + $0x4] sm:$0xf]
        %v427 = vunpack.c.l.b16 %v421
        %v428 = vunpack.c.l.b16 %v422
        %v429 = vpack.c.b16 %v428, %v427
        %v432 = vunpack.c.l.b16 %v423
        %v433 = vunpack.c.l.b16 %v424
        %v434 = vpack.c.b16 %v433, %v432
        %vm435 = vcmask 130048
        %v437 = vsel %vm435, %v429, 0
        %v440 = vsel %vm435, %v434, 0
        %442 = vmatprep.subr.bf16.mxu0 0
        %443 = vmatpush1.bf16.xpose.msra.mxu0 0
        %444 = vmatprep.subr.bf16.mxu0 0
        %445 = vmatpush1.bf16.xpose.msra.mxu0 0
        %446 = vmatprep.subr.bf16.mxu0 0
        %447 = vmatpush1.bf16.xpose.msra.mxu0 0
        %448 = vmatprep.subr.bf16.mxu0 0
        %449 = vmatpush1.bf16.xpose.msra.mxu0 0
        %450 = vmatprep.subr.bf16.mxu0 0
        %451 = vmatpush1.bf16.xpose.msra.mxu0 0
        %452 = vmatprep.subr.bf16.mxu0 0
        %453 = vmatpush1.bf16.xpose.msra.mxu0 0
        %454 = vmatprep.subr.bf16.mxu0 0
        %455 = vmatpush1.bf16.xpose.msra.mxu0 0
        %456 = vmatprep.subr.bf16.mxu0 0
        %457 = vmatpush1.bf16.xpose.msra.mxu0 %v440
        %458 = vmatprep.subr.bf16.mxu0 0
        %459 = vmatpush2.bf16.xpose.msra.mxu0 0
        %460 = vmatprep.subr.bf16.mxu0 0
        %461 = vmatpush2.bf16.xpose.msra.mxu0 0
        %462 = vmatprep.subr.bf16.mxu0 0
        %463 = vmatpush2.bf16.xpose.msra.mxu0 0
        %464 = vmatprep.subr.bf16.mxu0 0
        %465 = vmatpush2.bf16.xpose.msra.mxu0 0
        %466 = vmatprep.subr.bf16.mxu0 0
        %467 = vmatpush2.bf16.xpose.msra.mxu0 0
        %468 = vmatprep.subr.bf16.mxu0 0
        %469 = vmatpush2.bf16.xpose.msra.mxu0 0
        %470 = vmatprep.subr.bf16.mxu0 0
        %471 = vmatpush2.bf16.xpose.msra.mxu0 0
        %472 = vmatprep.subr.bf16.mxu0 0
        %473 = vmatpush2.bf16.xpose.msra.mxu0 0
        %474 = vmatprep.mubr.bf16.mxu0 0
        %475 = vmatmul.mubr.bf16.gmra.mxu0 %v437
        %v476 = vpop.f32.mrf.mxu0
        %v477 = vadd.f32 0.0, %v476
        %v478 = vpop.f32.mrf.mxu0
        %v479 = vpop.f32.mrf.mxu0
        %v480 = vadd.f32 0.0, %v479
        %v481 = vpop.f32.mrf.mxu0
        %482 = vdwg.mxu0
        %v483 = vld [vmem:[#allocation5] sm:$0xff]
        %v484 = vld [vmem:[#allocation5 + $0x8] sm:$0xff]
        %v485 = vstv %s420
        %v486 = vadd.f32 %v483, %v485
        %v487 = vadd.f32 %v484, %v485
        %v488 = vstv %s390
        %v489 = vmul.f32 %v488, %v486
        %v490 = vmul.f32 %v488, %v487
        %v491 = vsub.f32 %v477, %v489
        %v492 = vsub.f32 %v480, %v490
        %v493 = vld [vmem:[#allocation2] sm:$0xff]
        %v494 = vld [vmem:[#allocation2 + $0x8] sm:$0xff]
        %v495 = vsel %vm435, %v491, -inf
        %496 = vmax.xlane.f32.xlu0 %v495
        %v497 = vpop.xlane.xlu0 %496
        %v498 = vsel %vm435, %v492, -inf
        %499 = vmax.xlane.f32.xlu0 %v498
        %v500 = vpop.xlane.xlu0 %499
        %v501 = vmax.f32 %v493, %v497
        %v502 = vmax.f32 %v494, %v500
        %v503 = vsub.f32 %v493, %v501
        %v504 = vsub.f32 %v494, %v502
        %v505 = vmul.f32 %v503, 1.442695
        %v506 = vpow.pop %v505
        %v507 = vmul.f32 %v504, 1.442695
        %v508 = vpow.pop %v507
        %510 = vset.pattern.permute.xlu0 0
        %511 = vperm.xlu0 %510, %v501
        %v512 = vpop.permute.xlu0 %511
        %515 = vset.pattern.permute.xlu0 0
        %516 = vperm.xlu0 %515, %v502
        %v517 = vpop.permute.xlu0 %516
        %v519 = vsub.f32 %v491, %v512
        %v520 = vsub.f32 %v492, %v517
        %v521 = vmul.f32 %v519, 1.442695
        %v522 = vpow.pop %v521
        %v523 = vmul.f32 %v520, 1.442695
        %v524 = vpow.pop %v523
        %v525 = vld [vmem:[#allocation3] sm:$0xff]
        %v526 = vld [vmem:[#allocation3 + $0x8] sm:$0xff]
        %v527 = vmul.f32 %v506, %v525
        %v528 = vmul.f32 %v508, %v526
        %v529 = vsel %vm435, %v522, 0.0
        %530 = vadd.xlane.f32.xlu0 %v529
        %v531 = vpop.xlane.xlu0 %530
        %v532 = vsel %vm435, %v524, 0.0
        %533 = vadd.xlane.f32.xlu0 %v532
        %v534 = vpop.xlane.xlu0 %533
        %v535 = vadd.f32 %v527, %v531
        %v536 = vadd.f32 %v528, %v534
        %vm537 = vcmask 7168
        %538 = vst.msk [vmem:[#allocation3] sm:$0xff] %vm537, %v535
        %539 = vst.msk [vmem:[#allocation3 + $0x8] sm:$0xff] %vm537, %v536
        %v540 = vld [vmem:[#allocation4] sm:$0xff]
        %v541 = vld [vmem:[#allocation4 + $0x8] sm:$0xff]
        %543 = vset.pattern.permute.xlu0 0
        %544 = vperm.xlu0 %543, %v506
        %v545 = vpop.permute.xlu0 %544
        %548 = vset.pattern.permute.xlu0 0
        %549 = vperm.xlu0 %548, %v508
        %v550 = vpop.permute.xlu0 %549
        %v552 = vmul.f32 %v545, %v540
        %v553 = vmul.f32 %v550, %v541
        %v554 = vpack.c.bf16 %v524, %v522
        %v555 = vld [vmem:[%s371] sm:$0xf]
        %v556 = vld [vmem:[%s371 + $0x4] sm:$0xf]
        %v559 = vunpack.c.l.b16 %v555
        %v560 = vunpack.c.l.b16 %v556
        %v561 = vpack.c.b16 %v560, %v559
        %v564 = vsel %vm435, %v554, 0
        %566 = vmatprep.subr.bf16.mxu0 0
        %567 = vmatpush1.bf16.msra.mxu0 0
        %568 = vmatprep.subr.bf16.mxu0 0
        %569 = vmatpush1.bf16.msra.mxu0 0
        %570 = vmatprep.subr.bf16.mxu0 0
        %571 = vmatpush1.bf16.msra.mxu0 0
        %572 = vmatprep.subr.bf16.mxu0 0
        %573 = vmatpush1.bf16.msra.mxu0 0
        %574 = vmatprep.subr.bf16.mxu0 0
        %575 = vmatpush1.bf16.msra.mxu0 0
        %576 = vmatprep.subr.bf16.mxu0 0
        %577 = vmatpush1.bf16.msra.mxu0 0
        %578 = vmatprep.subr.bf16.mxu0 0
        %579 = vmatpush1.bf16.msra.mxu0 0
        %580 = vmatprep.subr.bf16.mxu0 0
        %581 = vmatpush1.bf16.msra.mxu0 %v561
        %582 = vmatprep.subr.bf16.mxu0 0
        %583 = vmatpush2.bf16.msra.mxu0 0
        %584 = vmatprep.subr.bf16.mxu0 0
        %585 = vmatpush2.bf16.msra.mxu0 0
        %586 = vmatprep.subr.bf16.mxu0 0
        %587 = vmatpush2.bf16.msra.mxu0 0
        %588 = vmatprep.subr.bf16.mxu0 0
        %589 = vmatpush2.bf16.msra.mxu0 0
        %590 = vmatprep.subr.bf16.mxu0 0
        %591 = vmatpush2.bf16.msra.mxu0 0
        %592 = vmatprep.subr.bf16.mxu0 0
        %593 = vmatpush2.bf16.msra.mxu0 0
        %594 = vmatprep.subr.bf16.mxu0 0
        %595 = vmatpush2.bf16.msra.mxu0 0
        %596 = vmatprep.subr.bf16.mxu0 0
        %597 = vmatpush2.bf16.msra.mxu0 0
        %598 = vmatprep.mubr.bf16.mxu0 0
        %599 = vmatmul.mubr.bf16.gmra.mxu0 %v564
        %v600 = vpop.f32.mrf.mxu0
        %v601 = vadd.f32 0.0, %v600
        %v602 = vpop.f32.mrf.mxu0
        %v603 = vpop.f32.mrf.mxu0
        %v604 = vadd.f32 0.0, %v603
        %v605 = vpop.f32.mrf.mxu0
        %606 = vdwg.mxu0
        %v607 = vadd.f32 %v552, %v601
        %v608 = vadd.f32 %v553, %v604
        %609 = vst.msk [vmem:[#allocation4] sm:$0xff] %vm435, %v607
        %610 = vst.msk [vmem:[#allocation4 + $0x8] sm:$0xff] %vm435, %v608
        %611 = vst.msk [vmem:[#allocation2] sm:$0xff] %vm537, %v501
        %612 = vst.msk [vmem:[#allocation2 + $0x8] sm:$0xff] %vm537, %v502
      $region40: #{gpt_layer_forward.13} parent=31 // pred_fallthru
        _
      %p613 = scmp.eq.s32.totalorder %s30, %s29
      // Predicated region
      $region41: #{gpt_layer_forward.13} parent=31 // pred_check
        %p614 = pneg %p613
      $region42: #{gpt_layer_forward.13} parent=31 // pred_check_branch
        %616 = sbr.rel (%p614) target = $region44
      $region43: #{gpt_layer_forward.13} parent=31 // pred_region
        %v617 = vld [vmem:[#allocation5] sm:$0xff]
        %v618 = vld [vmem:[#allocation5 + $0x8] sm:$0xff]
        %vm619 = vcmp.ge.f32.partialorder %v617, 0.0
        %vm620 = vcmp.ge.f32.partialorder %v618, 0.0
        %v621 = vld [vmem:[%s335] sm:$0xf]
        %v622 = vld [vmem:[%s335 + $0x4] sm:$0xf]
        %v623 = vld [vmem:[%s352] sm:$0xf]
        %v624 = vld [vmem:[%s352 + $0x4] sm:$0xf]
        %v627 = vunpack.c.l.b16 %v621
        %v628 = vunpack.c.l.b16 %v622
        %v629 = vpack.c.b16 %v628, %v627
        %v632 = vunpack.c.l.b16 %v623
        %v633 = vunpack.c.l.b16 %v624
        %v634 = vpack.c.b16 %v633, %v632
        %vm635 = vcmask 130048
        %v637 = vsel %vm635, %v629, 0
        %v640 = vsel %vm635, %v634, 0
        %642 = vmatprep.subr.bf16.mxu0 0
        %643 = vmatpush1.bf16.xpose.msra.mxu0 0
        %644 = vmatprep.subr.bf16.mxu0 0
        %645 = vmatpush1.bf16.xpose.msra.mxu0 0
        %646 = vmatprep.subr.bf16.mxu0 0
        %647 = vmatpush1.bf16.xpose.msra.mxu0 0
        %648 = vmatprep.subr.bf16.mxu0 0
        %649 = vmatpush1.bf16.xpose.msra.mxu0 0
        %650 = vmatprep.subr.bf16.mxu0 0
        %651 = vmatpush1.bf16.xpose.msra.mxu0 0
        %652 = vmatprep.subr.bf16.mxu0 0
        %653 = vmatpush1.bf16.xpose.msra.mxu0 0
        %654 = vmatprep.subr.bf16.mxu0 0
        %655 = vmatpush1.bf16.xpose.msra.mxu0 0
        %656 = vmatprep.subr.bf16.mxu0 0
        %657 = vmatpush1.bf16.xpose.msra.mxu0 %v640
        %658 = vmatprep.subr.bf16.mxu0 0
        %659 = vmatpush2.bf16.xpose.msra.mxu0 0
        %660 = vmatprep.subr.bf16.mxu0 0
        %661 = vmatpush2.bf16.xpose.msra.mxu0 0
        %662 = vmatprep.subr.bf16.mxu0 0
        %663 = vmatpush2.bf16.xpose.msra.mxu0 0
        %664 = vmatprep.subr.bf16.mxu0 0
        %665 = vmatpush2.bf16.xpose.msra.mxu0 0
        %666 = vmatprep.subr.bf16.mxu0 0
        %667 = vmatpush2.bf16.xpose.msra.mxu0 0
        %668 = vmatprep.subr.bf16.mxu0 0
        %669 = vmatpush2.bf16.xpose.msra.mxu0 0
        %670 = vmatprep.subr.bf16.mxu0 0
        %671 = vmatpush2.bf16.xpose.msra.mxu0 0
        %672 = vmatprep.subr.bf16.mxu0 0
        %673 = vmatpush2.bf16.xpose.msra.mxu0 0
        %674 = vmatprep.mubr.bf16.mxu0 0
        %675 = vmatmul.mubr.bf16.gmra.mxu0 %v637
        %v676 = vpop.f32.mrf.mxu0
        %v677 = vadd.f32 0.0, %v676
        %v678 = vpop.f32.mrf.mxu0
        %v679 = vpop.f32.mrf.mxu0
        %v680 = vadd.f32 0.0, %v679
        %v681 = vpop.f32.mrf.mxu0
        %682 = vdwg.mxu0
        %v683 = vstv %s390
        %v684 = vmul.f32 %v683, %v617
        %v685 = vmul.f32 %v683, %v618
        %v686 = vsub.f32 %v677, %v684
        %v687 = vsub.f32 %v680, %v685
        %v688 = vsel %vm619, %v686, -1e+30
        %v689 = vsel %vm620, %v687, -1e+30
        %v690 = vld [vmem:[#allocation2] sm:$0xff]
        %v691 = vld [vmem:[#allocation2 + $0x8] sm:$0xff]
        %v692 = vsel %vm635, %v688, -inf
        %693 = vmax.xlane.f32.xlu0 %v692
        %v694 = vpop.xlane.xlu0 %693
        %v695 = vsel %vm635, %v689, -inf
        %696 = vmax.xlane.f32.xlu0 %v695
        %v697 = vpop.xlane.xlu0 %696
        %v698 = vmax.f32 %v690, %v694
        %v699 = vmax.f32 %v691, %v697
        %v700 = vsub.f32 %v690, %v698
        %v701 = vsub.f32 %v691, %v699
        %v702 = vmul.f32 %v700, 1.442695
        %v703 = vpow.pop %v702
        %v704 = vmul.f32 %v701, 1.442695
        %v705 = vpow.pop %v704
        %707 = vset.pattern.permute.xlu0 0
        %708 = vperm.xlu0 %707, %v698
        %v709 = vpop.permute.xlu0 %708
        %712 = vset.pattern.permute.xlu0 0
        %713 = vperm.xlu0 %712, %v699
        %v714 = vpop.permute.xlu0 %713
        %v716 = vsub.f32 %v688, %v709
        %v717 = vsub.f32 %v689, %v714
        %v718 = vmul.f32 %v716, 1.442695
        %v719 = vpow.pop %v718
        %v720 = vmul.f32 %v717, 1.442695
        %v721 = vpow.pop %v720
        %v722 = vld [vmem:[#allocation3] sm:$0xff]
        %v723 = vld [vmem:[#allocation3 + $0x8] sm:$0xff]
        %v724 = vmul.f32 %v703, %v722
        %v725 = vmul.f32 %v705, %v723
        %v726 = vsel %vm635, %v719, 0.0
        %727 = vadd.xlane.f32.xlu0 %v726
        %v728 = vpop.xlane.xlu0 %727
        %v729 = vsel %vm635, %v721, 0.0
        %730 = vadd.xlane.f32.xlu0 %v729
        %v731 = vpop.xlane.xlu0 %730
        %v732 = vadd.f32 %v724, %v728
        %v733 = vadd.f32 %v725, %v731
        %vm734 = vcmask 7168
        %735 = vst.msk [vmem:[#allocation3] sm:$0xff] %vm734, %v732
        %736 = vst.msk [vmem:[#allocation3 + $0x8] sm:$0xff] %vm734, %v733
        %v737 = vld [vmem:[#allocation4] sm:$0xff]
        %v738 = vld [vmem:[#allocation4 + $0x8] sm:$0xff]
        %740 = vset.pattern.permute.xlu0 0
        %741 = vperm.xlu0 %740, %v703
        %v742 = vpop.permute.xlu0 %741
        %745 = vset.pattern.permute.xlu0 0
        %746 = vperm.xlu0 %745, %v705
        %v747 = vpop.permute.xlu0 %746
        %v749 = vmul.f32 %v742, %v737
        %v750 = vmul.f32 %v747, %v738
        %v751 = vpack.c.bf16 %v721, %v719
        %v752 = vld [vmem:[%s371] sm:$0xf]
        %v753 = vld [vmem:[%s371 + $0x4] sm:$0xf]
        %v756 = vunpack.c.l.b16 %v752
        %v757 = vunpack.c.l.b16 %v753
        %v758 = vpack.c.b16 %v757, %v756
        %v761 = vsel %vm635, %v751, 0
        %763 = vmatprep.subr.bf16.mxu0 0
        %764 = vmatpush1.bf16.msra.mxu0 0
        %765 = vmatprep.subr.bf16.mxu0 0
        %766 = vmatpush1.bf16.msra.mxu0 0
        %767 = vmatprep.subr.bf16.mxu0 0
        %768 = vmatpush1.bf16.msra.mxu0 0
        %769 = vmatprep.subr.bf16.mxu0 0
        %770 = vmatpush1.bf16.msra.mxu0 0
        %771 = vmatprep.subr.bf16.mxu0 0
        %772 = vmatpush1.bf16.msra.mxu0 0
        %773 = vmatprep.subr.bf16.mxu0 0
        %774 = vmatpush1.bf16.msra.mxu0 0
        %775 = vmatprep.subr.bf16.mxu0 0
        %776 = vmatpush1.bf16.msra.mxu0 0
        %777 = vmatprep.subr.bf16.mxu0 0
        %778 = vmatpush1.bf16.msra.mxu0 %v758
        %779 = vmatprep.subr.bf16.mxu0 0
        %780 = vmatpush2.bf16.msra.mxu0 0
        %781 = vmatprep.subr.bf16.mxu0 0
        %782 = vmatpush2.bf16.msra.mxu0 0
        %783 = vmatprep.subr.bf16.mxu0 0
        %784 = vmatpush2.bf16.msra.mxu0 0
        %785 = vmatprep.subr.bf16.mxu0 0
        %786 = vmatpush2.bf16.msra.mxu0 0
        %787 = vmatprep.subr.bf16.mxu0 0
        %788 = vmatpush2.bf16.msra.mxu0 0
        %789 = vmatprep.subr.bf16.mxu0 0
        %790 = vmatpush2.bf16.msra.mxu0 0
        %791 = vmatprep.subr.bf16.mxu0 0
        %792 = vmatpush2.bf16.msra.mxu0 0
        %793 = vmatprep.subr.bf16.mxu0 0
        %794 = vmatpush2.bf16.msra.mxu0 0
        %795 = vmatprep.mubr.bf16.mxu0 0
        %796 = vmatmul.mubr.bf16.gmra.mxu0 %v761
        %v797 = vpop.f32.mrf.mxu0
        %v798 = vadd.f32 0.0, %v797
        %v799 = vpop.f32.mrf.mxu0
        %v800 = vpop.f32.mrf.mxu0
        %v801 = vadd.f32 0.0, %v800
        %v802 = vpop.f32.mrf.mxu0
        %803 = vdwg.mxu0
        %v804 = vadd.f32 %v749, %v798
        %v805 = vadd.f32 %v750, %v801
        %806 = vst.msk [vmem:[#allocation4] sm:$0xff] %vm635, %v804
        %807 = vst.msk [vmem:[#allocation4 + $0x8] sm:$0xff] %vm635, %v805
        %808 = vst.msk [vmem:[#allocation2] sm:$0xff] %vm734, %v698
        %809 = vst.msk [vmem:[#allocation2 + $0x8] sm:$0xff] %vm734, %v699
        %v810 = vld [vmem:[#allocation3] sm:$0xff]
        %v811 = vld [vmem:[#allocation3 + $0x8] sm:$0xff]
        %v812 = vrcp.pop %v810
        %v813 = vrcp.pop %v811
        %v814 = vld [vmem:[#allocation4] sm:$0xff]
        %v815 = vld [vmem:[#allocation4 + $0x8] sm:$0xff]
        %817 = vset.pattern.permute.xlu0 0
        %818 = vperm.xlu0 %817, %v812
        %v819 = vpop.permute.xlu0 %818
        %822 = vset.pattern.permute.xlu0 0
        %823 = vperm.xlu0 %822, %v813
        %v824 = vpop.permute.xlu0 %823
        %v826 = vmul.f32 %v814, %v819
        %v827 = vmul.f32 %v815, %v824
        %v828 = vpack.c.bf16 %v827, %v826
        %v830 = vunpack.c.l.b16 %v828
        %v831 = vunpack.c.h.b16 %v828
        %v832 = vpack.c.b16 %v830, %v830
        %v833 = vpack.c.b16 %v831, %v831
        %vm836 = vcmask 125952
        %837 = vst.msk [vmem:[%s387] sm:$0xf] %vm836, %v832
        %838 = vst.msk [vmem:[%s387 + $0x4] sm:$0xf] %vm836, %v833
      $region44: #{gpt_layer_forward.13} parent=31 // pred_fallthru
        _
      %s839 = smul.u32 2, %s29
      %p840 = scmp.lt.s32.totalorder %s27, 1
      %s841 = scalar_select %p840, %s27, 1
      %p842 = scmp.lt.s32.totalorder %s28, 3
      %s843 = scalar_select %p842, %s28, 3
      %p844 = scmp.lt.s32.totalorder %s839, 1
      %s845 = scalar_select %p844, %s839, 1
      %s846 = smul.addr %s843, 2
      %s847 = sadd.s32 %s845, %s846
      %s848 = smul.addr %s841, 8
      %s849 = sadd.s32 %s847, %s848
      %s850 = smul.addr %s849, 4
      %s851 = scalar_lea.vmem %s4, %s850
      // Predicated region
      $region45: #{gpt_layer_forward.13} parent=31 // pred_check
        %p852 = pneg %p167
      $region46: #{gpt_layer_forward.13} parent=31 // pred_check_branch
        %854 = sbr.rel (%p852) target = $region48
      $region47: #{gpt_layer_forward.13} parent=31 // pred_region
        %s855 = smul.u32 2, %s29
      $region48: #{gpt_layer_forward.13} parent=31 // pred_fallthru
        _
    $region32: #{gpt_layer_forward.13} parent=5 // pred_fallthru
      _
    %p856 = scmp.le.s32.totalorder 2, %s16
    // Predicated region
    $region49: #{gpt_layer_forward.13} parent=5 // pred_check
      %p857 = pneg %p856
    $region50: #{gpt_layer_forward.13} parent=5 // pred_check_branch
      %859 = sbr.rel (%p857) target = $region52
    $region51: #{gpt_layer_forward.13} parent=5 // pred_region
      %s860 = ssub.s32 %s16, 2
      // Predicated region
      $region53: #{gpt_layer_forward.13} parent=51 // pred_check
        %p861 = pneg %p173
      $region54: #{gpt_layer_forward.13} parent=51 // pred_check_branch
        %863 = sbr.rel (%p861) target = $region56
      $region55: #{gpt_layer_forward.13} parent=51 // pred_region
        %s864 = smul.u32 2, %s33
        %p865 = scmp.lt.s32.totalorder %s31, 1
        %s866 = scalar_select %p865, %s31, 1
        %p867 = scmp.lt.s32.totalorder %s32, 3
        %s868 = scalar_select %p867, %s32, 3
        %p869 = scmp.lt.s32.totalorder %s864, 1
        %s870 = scalar_select %p869, %s864, 1
        %s871 = smul.addr %s868, 2
        %s872 = sadd.s32 %s870, %s871
        %s873 = smul.addr %s866, 8
        %s874 = sadd.s32 %s872, %s873
        %s875 = smul.addr %s874, 4
        %s876 = scalar_lea.vmem %s4, %s875
      $region56: #{gpt_layer_forward.13} parent=51 // pred_fallthru
        _
    $region52: #{gpt_layer_forward.13} parent=5 // pred_fallthru
      _
  $region6: #{gpt_layer_forward.13} parent=0 // loop_footer
    %s20 = sadd.s32 1, %s16
  $region7: #{gpt_layer_forward.13} parent=0 // loop_footer_branch
    %15 = sbr.rel target = $region3
  $region8: #{gpt_layer_forward.13} parent=0 // loop_exit
    _

// kernel: gpt_layer_forward.15
$region0: #{gpt_layer_forward.15}
  #allocation0 [shape = 'u32[]', space=smem, size = 0x4, offset = 0x4, fixed_abs, tag = 'smem constant byte address 0x4 - core index']
  #allocation1 [shape = 'u32[144,128]{1,0:T(1,128)}', space=vmem, size = 0x12000, scoped, tag = 'internal scratch']
  #allocation2 [shape = 'f32[32,256]{1,0:T(8,128)}', space=vmem, size = 0x8000, scoped, tag = 'scratch operand']
  %s0 = inlined_call_operand.vmem [shape: bf16[32,64], index: 0, kind: input, shape index: {}]
  %s1 = inlined_call_operand.vmem [shape: bf16[1,64,256], index: 1, kind: input, shape index: {}]
  %s2 = inlined_call_operand.vmem [shape: f32[1,1,256], index: 2, kind: input, shape index: {}]
  %s3 = inlined_call_operand.vmem [shape: bf16[1,32,256], index: 3, kind: output, shape index: {}]
  %s4 = sld [smem:[#allocation0]]
  $region30: #{gpt_layer_forward.15} parent=0
    _
  %s6 = ssub.s32 1, %s4
  %s7 = scalar_select 0, %s6, %s4
  // Predicated region
  $region2: #{gpt_layer_forward.15} parent=0 // pred_check
    _
  $region3: #{gpt_layer_forward.15} parent=0 // pred_check_branch
    %9 = sbr.rel (0) target = $region5
  $region4: #{gpt_layer_forward.15} parent=0 // pred_region
    _
  $region5: #{gpt_layer_forward.15} parent=0 // pred_fallthru
    _
  // Predicated region
  $region6: #{gpt_layer_forward.15} parent=0 // pred_check
    _
  $region7: #{gpt_layer_forward.15} parent=0 // pred_check_branch
    %11 = sbr.rel (0) target = $region9
  $region8: #{gpt_layer_forward.15} parent=0 // pred_region
    _
  $region9: #{gpt_layer_forward.15} parent=0 // pred_fallthru
    _
  // Predicated region
  $region10: #{gpt_layer_forward.15} parent=0 // pred_check
    _
  $region11: #{gpt_layer_forward.15} parent=0 // pred_check_branch
    %13 = sbr.rel (0) target = $region13
  $region12: #{gpt_layer_forward.15} parent=0 // pred_region
    _
  $region13: #{gpt_layer_forward.15} parent=0 // pred_fallthru
    _
  %p15 = scmp.eq.s32.totalorder 0, 0
  // Predicated region
  $region14: #{gpt_layer_forward.15} parent=0 // pred_check
    %p16 = pneg %p15
  $region15: #{gpt_layer_forward.15} parent=0 // pred_check_branch
    %18 = sbr.rel (%p16) target = $region17
  $region16: #{gpt_layer_forward.15} parent=0 // pred_region
    %19 = vst [vmem:[#allocation2] sm:$0xff] 0.0
    %20 = vst [vmem:[#allocation2 + $0x8] sm:$0xff] 0.0
    %21 = vst [vmem:[#allocation2 + $0x10] sm:$0xff] 0.0
    %22 = vst [vmem:[#allocation2 + $0x18] sm:$0xff] 0.0
    %23 = vst [vmem:[#allocation2 + $0x20] sm:$0xff] 0.0
    %24 = vst [vmem:[#allocation2 + $0x28] sm:$0xff] 0.0
    %25 = vst [vmem:[#allocation2 + $0x30] sm:$0xff] 0.0
    %26 = vst [vmem:[#allocation2 + $0x38] sm:$0xff] 0.0
  $region17: #{gpt_layer_forward.15} parent=0 // pred_fallthru
    _
  %v27 = vld [vmem:[#allocation2] sm:$0xff]
  %v28 = vld [vmem:[#allocation2 + $0x8] sm:$0xff]
  %v29 = vld [vmem:[#allocation2 + $0x10] sm:$0xff]
  %v30 = vld [vmem:[#allocation2 + $0x18] sm:$0xff]
  %v31 = vld [vmem:[#allocation2 + $0x20] sm:$0xff]
  %v32 = vld [vmem:[#allocation2 + $0x28] sm:$0xff]
  %v33 = vld [vmem:[#allocation2 + $0x30] sm:$0xff]
  %v34 = vld [vmem:[#allocation2 + $0x38] sm:$0xff]
  %v35 = vld [vmem:[%s0] sm:$0xf]
  %v36 = vld [vmem:[%s0 + $0x4] sm:$0xf]
  %v37 = vld [vmem:[%s0 + $0x8] sm:$0xf]
  %v38 = vld [vmem:[%s0 + $0xc] sm:$0xf]
  %v39 = vld [vmem:[%s1] sm:$0xff]
  %v40 = vld [vmem:[%s1 + $0x8] sm:$0xff]
  %v41 = vld [vmem:[%s1 + $0x10] sm:$0xff]
  %v42 = vld [vmem:[%s1 + $0x18] sm:$0xff]
  %v43 = vld [vmem:[%s1 + $0x20] sm:$0xff]
  %v44 = vld [vmem:[%s1 + $0x28] sm:$0xff]
  %v45 = vld [vmem:[%s1 + $0x30] sm:$0xff]
  %v46 = vld [vmem:[%s1 + $0x38] sm:$0xff]
  %v51 = vunpack.c.l.b16 %v35
  %v52 = vunpack.c.l.b16 %v36
  %v53 = vunpack.c.l.b16 %v37
  %v54 = vunpack.c.l.b16 %v38
  %v55 = vpack.c.b16 %v52, %v51
  %v56 = vpack.c.b16 %v54, %v53
  %v65 = vunpack.c.l.b16 %v39
  %v66 = vunpack.c.h.b16 %v39
  %v67 = vunpack.c.l.b16 %v40
  %v68 = vunpack.c.h.b16 %v40
  %v69 = vunpack.c.l.b16 %v41
  %v70 = vunpack.c.h.b16 %v41
  %v71 = vunpack.c.l.b16 %v42
  %v72 = vunpack.c.h.b16 %v42
  %v73 = vunpack.c.l.b16 %v43
  %v74 = vunpack.c.h.b16 %v43
  %v75 = vunpack.c.l.b16 %v44
  %v76 = vunpack.c.h.b16 %v44
  %v77 = vunpack.c.l.b16 %v45
  %v78 = vunpack.c.h.b16 %v45
  %v79 = vunpack.c.l.b16 %v46
  %v80 = vunpack.c.h.b16 %v46
  %v81 = vpack.c.b16 %v67, %v65
  %v82 = vpack.c.b16 %v68, %v66
  %v83 = vpack.c.b16 %v71, %v69
  %v84 = vpack.c.b16 %v72, %v70
  %v85 = vpack.c.b16 %v75, %v73
  %v86 = vpack.c.b16 %v76, %v74
  %v87 = vpack.c.b16 %v79, %v77
  %v88 = vpack.c.b16 %v80, %v78
  %vm97 = vcmask 523264
  %v99 = vsel %vm97, %v55, 0
  %v102 = vsel %vm97, %v56, 0
  %104 = vmatprep.subr.bf16.mxu0 0
  %105 = vmatpush1.bf16.msra.mxu0 0
  %106 = vmatprep.subr.bf16.mxu0 0
  %107 = vmatpush1.bf16.msra.mxu0 0
  %108 = vmatprep.subr.bf16.mxu0 0
  %109 = vmatpush1.bf16.msra.mxu0 0
  %110 = vmatprep.subr.bf16.mxu0 0
  %111 = vmatpush1.bf16.msra.mxu0 0
  %112 = vmatprep.subr.bf16.mxu0 %v88
  %113 = vmatpush1.bf16.msra.mxu0 %v87
  %114 = vmatprep.subr.bf16.mxu0 %v86
  %115 = vmatpush1.bf16.msra.mxu0 %v85
  %116 = vmatprep.subr.bf16.mxu0 %v84
  %117 = vmatpush1.bf16.msra.mxu0 %v83
  %118 = vmatprep.subr.bf16.mxu0 %v82
  %119 = vmatpush1.bf16.msra.mxu0 %v81
  %120 = vmatprep.subr.bf16.mxu0 0
  %121 = vmatpush2.bf16.msra.mxu0 0
  %122 = vmatprep.subr.bf16.mxu0 0
  %123 = vmatpush2.bf16.msra.mxu0 0
  %124 = vmatprep.subr.bf16.mxu0 0
  %125 = vmatpush2.bf16.msra.mxu0 0
  %126 = vmatprep.subr.bf16.mxu0 0
  %127 = vmatpush2.bf16.msra.mxu0 0
  %128 = vmatprep.subr.bf16.mxu0 0
  %129 = vmatpush2.bf16.msra.mxu0 0
  %130 = vmatprep.subr.bf16.mxu0 0
  %131 = vmatpush2.bf16.msra.mxu0 0
  %132 = vmatprep.subr.bf16.mxu0 0
  %133 = vmatpush2.bf16.msra.mxu0 0
  %134 = vmatprep.subr.bf16.mxu0 0
  %135 = vmatpush2.bf16.msra.mxu0 0
  %136 = vmatprep.mubr.bf16.mxu0 0
  %137 = vmatmul.mubr.bf16.gmra.mxu0 %v99
  %v138 = vpop.f32.mrf.mxu0
  %v139 = vadd.f32 0.0, %v138
  %v140 = vpop.f32.mrf.mxu0
  %v141 = vadd.f32 0.0, %v140
  %v142 = vpop.f32.mrf.mxu0
  %v143 = vadd.f32 0.0, %v142
  %v144 = vpop.f32.mrf.mxu0
  %v145 = vadd.f32 0.0, %v144
  %146 = vmatprep.mubr.bf16.mxu0 0
  %147 = vmatmul.mubr.bf16.gmra.mxu0 %v102
  %v148 = vpop.f32.mrf.mxu0
  %v149 = vadd.f32 0.0, %v148
  %v150 = vpop.f32.mrf.mxu0
  %v151 = vadd.f32 0.0, %v150
  %v152 = vpop.f32.mrf.mxu0
  %v153 = vadd.f32 0.0, %v152
  %v154 = vpop.f32.mrf.mxu0
  %v155 = vadd.f32 0.0, %v154
  %156 = vdwg.mxu0
  %v157 = vadd.f32 %v27, %v139
  %v158 = vadd.f32 %v28, %v141
  %v159 = vadd.f32 %v29, %v143
  %v160 = vadd.f32 %v30, %v145
  %v161 = vadd.f32 %v31, %v149
  %v162 = vadd.f32 %v32, %v151
  %v163 = vadd.f32 %v33, %v153
  %v164 = vadd.f32 %v34, %v155
  %165 = vst [vmem:[#allocation2] sm:$0xff] %v157
  %166 = vst [vmem:[#allocation2 + $0x8] sm:$0xff] %v158
  %167 = vst [vmem:[#allocation2 + $0x10] sm:$0xff] %v159
  %168 = vst [vmem:[#allocation2 + $0x18] sm:$0xff] %v160
  %169 = vst [vmem:[#allocation2 + $0x20] sm:$0xff] %v161
  %170 = vst [vmem:[#allocation2 + $0x28] sm:$0xff] %v162
  %171 = vst [vmem:[#allocation2 + $0x30] sm:$0xff] %v163
  %172 = vst [vmem:[#allocation2 + $0x38] sm:$0xff] %v164
  // Predicated region
  $region18: #{gpt_layer_forward.15} parent=0 // pred_check
    %p173 = pneg %p15
  $region19: #{gpt_layer_forward.15} parent=0 // pred_check_branch
    %175 = sbr.rel (%p173) target = $region21
  $region20: #{gpt_layer_forward.15} parent=0 // pred_region
    %v176 = vld [vmem:[#allocation2] sm:$0xff]
    %v177 = vld [vmem:[#allocation2 + $0x8] sm:$0xff]
    %v178 = vld [vmem:[#allocation2 + $0x10] sm:$0xff]
    %v179 = vld [vmem:[#allocation2 + $0x18] sm:$0xff]
    %v180 = vld [vmem:[#allocation2 + $0x20] sm:$0xff]
    %v181 = vld [vmem:[#allocation2 + $0x28] sm:$0xff]
    %v182 = vld [vmem:[#allocation2 + $0x30] sm:$0xff]
    %v183 = vld [vmem:[#allocation2 + $0x38] sm:$0xff]
    %v184 = vld [vmem:[%s2] sm:$0x3]
    %v186 = vlaneseq
    %v187 = vshrl.u32 %v186, 7
    %v188 = vsub.s32 0, %v187
    %v189 = vrot.slane %v184, %v188
    %v190 = vlaneseq
    %v191 = vshrl.u32 %v190, 7
    %v192 = vsub.s32 1, %v191
    %v193 = vrot.slane %v184, %v192
    %v196 = vadd.f32 %v176, %v189
    %v197 = vadd.f32 %v177, %v193
    %v198 = vadd.f32 %v178, %v189
    %v199 = vadd.f32 %v179, %v193
    %v200 = vadd.f32 %v180, %v189
    %v201 = vadd.f32 %v181, %v193
    %v202 = vadd.f32 %v182, %v189
    %v203 = vadd.f32 %v183, %v193
    %v204 = vmul.f32 %v196, %v196
    %v205 = vmul.f32 %v197, %v197
    %v206 = vmul.f32 %v198, %v198
    %v207 = vmul.f32 %v199, %v199
    %v208 = vmul.f32 %v200, %v200
    %v209 = vmul.f32 %v201, %v201
    %v210 = vmul.f32 %v202, %v202
    %v211 = vmul.f32 %v203, %v203
    %v212 = vmul.f32 %v196, %v204
    %v213 = vmul.f32 %v197, %v205
    %v214 = vmul.f32 %v198, %v206
    %v215 = vmul.f32 %v199, %v207
    %v216 = vmul.f32 %v200, %v208
    %v217 = vmul.f32 %v201, %v209
    %v218 = vmul.f32 %v202, %v210
    %v219 = vmul.f32 %v203, %v211
    %v220 = vmul.f32 %v212, 0.044715
    %v221 = vmul.f32 %v213, 0.044715
    %v222 = vmul.f32 %v214, 0.044715
    %v223 = vmul.f32 %v215, 0.044715
    %v224 = vmul.f32 %v216, 0.044715
    %v225 = vmul.f32 %v217, 0.044715
    %v226 = vmul.f32 %v218, 0.044715
    %v227 = vmul.f32 %v219, 0.044715
    %v228 = vadd.f32 %v196, %v220
    %v229 = vadd.f32 %v197, %v221
    %v230 = vadd.f32 %v198, %v222
    %v231 = vadd.f32 %v199, %v223
    %v232 = vadd.f32 %v200, %v224
    %v233 = vadd.f32 %v201, %v225
    %v234 = vadd.f32 %v202, %v226
    %v235 = vadd.f32 %v203, %v227
    %v236 = vmul.f32 %v228, 0.7978846
    %v237 = vmul.f32 %v229, 0.7978846
    %v238 = vmul.f32 %v230, 0.7978846
    %v239 = vmul.f32 %v231, 0.7978846
    %v240 = vmul.f32 %v232, 0.7978846
    %v241 = vmul.f32 %v233, 0.7978846
    %v242 = vmul.f32 %v234, 0.7978846
    %v243 = vmul.f32 %v235, 0.7978846
    %v244 = vtanh.pop %v236
    %v245 = vtanh.pop %v237
    %v246 = vtanh.pop %v238
    %v247 = vtanh.pop %v239
    %v248 = vtanh.pop %v240
    %v249 = vtanh.pop %v241
    %v250 = vtanh.pop %v242
    %v251 = vtanh.pop %v243
    %v252 = vadd.f32 %v244, 1.0
    %v253 = vadd.f32 %v245, 1.0
    %v254 = vadd.f32 %v246, 1.0
    %v255 = vadd.f32 %v247, 1.0
    %v256 = vadd.f32 %v248, 1.0
    %v257 = vadd.f32 %v249, 1.0
    %v258 = vadd.f32 %v250, 1.0
    %v259 = vadd.f32 %v251, 1.0
    %v260 = vmul.f32 %v252, 0.5
    %v261 = vmul.f32 %v253, 0.5
    %v262 = vmul.f32 %v254, 0.5
    %v263 = vmul.f32 %v255, 0.5
    %v264 = vmul.f32 %v256, 0.5
    %v265 = vmul.f32 %v257, 0.5
    %v266 = vmul.f32 %v258, 0.5
    %v267 = vmul.f32 %v259, 0.5
    %v268 = vmul.f32 %v196, %v260
    %v269 = vmul.f32 %v197, %v261
    %v270 = vmul.f32 %v198, %v262
    %v271 = vmul.f32 %v199, %v263
    %v272 = vmul.f32 %v200, %v264
    %v273 = vmul.f32 %v201, %v265
    %v274 = vmul.f32 %v202, %v266
    %v275 = vmul.f32 %v203, %v267
    %v276 = vpack.c.bf16 %v270, %v268
    %v277 = vpack.c.bf16 %v271, %v269
    %v278 = vpack.c.bf16 %v274, %v272
    %v279 = vpack.c.bf16 %v275, %v273
    %v284 = vunpack.c.l.b16 %v276
    %v285 = vunpack.c.l.b16 %v277
    %v286 = vunpack.c.h.b16 %v276
    %v287 = vunpack.c.h.b16 %v277
    %v288 = vunpack.c.l.b16 %v278
    %v289 = vunpack.c.l.b16 %v279
    %v290 = vunpack.c.h.b16 %v278
    %v291 = vunpack.c.h.b16 %v279
    %v292 = vpack.c.b16 %v285, %v284
    %v293 = vpack.c.b16 %v287, %v286
    %v294 = vpack.c.b16 %v289, %v288
    %v295 = vpack.c.b16 %v291, %v290
    %300 = vst [vmem:[%s3] sm:$0xff] %v292
    %301 = vst [vmem:[%s3 + $0x8] sm:$0xff] %v293
    %302 = vst [vmem:[%s3 + $0x10] sm:$0xff] %v294
    %303 = vst [vmem:[%s3 + $0x18] sm:$0xff] %v295
  $region21: #{gpt_layer_forward.15} parent=0 // pred_fallthru
    _
  // Predicated region
  $region22: #{gpt_layer_forward.15} parent=0 // pred_check
    _
  $region23: #{gpt_layer_forward.15} parent=0 // pred_check_branch
    %305 = sbr.rel (0) target = $region25
  $region24: #{gpt_layer_forward.15} parent=0 // pred_region
    _
  $region25: #{gpt_layer_forward.15} parent=0 // pred_fallthru
    _
  // Predicated region
  $region26: #{gpt_layer_forward.15} parent=0 // pred_check
    _
  $region27: #{gpt_layer_forward.15} parent=0 // pred_check_branch
    %307 = sbr.rel (0) target = $region29
  $region28: #{gpt_layer_forward.15} parent=0 // pred_region
    _
  $region29: #{gpt_layer_forward.15} parent=0 // pred_fallthru
    _

// kernel: gpt_layer_forward.14
$region0: #{gpt_layer_forward.14}
  #allocation0 [shape = 'u32[]', space=smem, size = 0x4, offset = 0x4, fixed_abs, tag = 'smem constant byte address 0x4 - core index']
  #allocation1 [shape = 'u32[144,128]{1,0:T(1,128)}', space=vmem, size = 0x12000, scoped, tag = 'internal scratch']
  #allocation2 [shape = 'f32[32,64]{1,0:T(8,128)}', space=vmem, size = 0x4000, scoped, tag = 'scratch operand']
  %s0 = inlined_call_operand.vmem [shape: bf16[32,64], index: 0, kind: input, shape index: {}]
  %s1 = inlined_call_operand.vmem [shape: bf16[1,64,64], index: 1, kind: input, shape index: {}]
  %s2 = inlined_call_operand.vmem [shape: f32[1,1,64], index: 2, kind: input, shape index: {}]
  %s3 = inlined_call_operand.vmem [shape: f32[32,64], index: 3, kind: input, shape index: {}]
  %s4 = inlined_call_operand.vmem [shape: f32[1,64], index: 4, kind: input, shape index: {}]
  %s5 = inlined_call_operand.vmem [shape: f32[32,64], index: 5, kind: output, shape index: {0}]
  %s6 = inlined_call_operand.vmem [shape: bf16[32,64], index: 6, kind: output, shape index: {1}]
  %7 = xla_tuple %s5, %s6
  %s8 = sld [smem:[#allocation0]]
  $region46: #{gpt_layer_forward.14} parent=0
    _
  %s10 = ssub.s32 1, %s8
  %s11 = scalar_select 0, %s10, %s8
  // Predicated region
  $region2: #{gpt_layer_forward.14} parent=0 // pred_check
    _
  $region3: #{gpt_layer_forward.14} parent=0 // pred_check_branch
    %13 = sbr.rel (0) target = $region5
  $region4: #{gpt_layer_forward.14} parent=0 // pred_region
    _
  $region5: #{gpt_layer_forward.14} parent=0 // pred_fallthru
    _
  // Predicated region
  $region6: #{gpt_layer_forward.14} parent=0 // pred_check
    _
  $region7: #{gpt_layer_forward.14} parent=0 // pred_check_branch
    %15 = sbr.rel (0) target = $region9
  $region8: #{gpt_layer_forward.14} parent=0 // pred_region
    _
  $region9: #{gpt_layer_forward.14} parent=0 // pred_fallthru
    _
  // Predicated region
  $region10: #{gpt_layer_forward.14} parent=0 // pred_check
    _
  $region11: #{gpt_layer_forward.14} parent=0 // pred_check_branch
    %17 = sbr.rel (0) target = $region13
  $region12: #{gpt_layer_forward.14} parent=0 // pred_region
    _
  $region13: #{gpt_layer_forward.14} parent=0 // pred_fallthru
    _
  // Predicated region
  $region14: #{gpt_layer_forward.14} parent=0 // pred_check
    _
  $region15: #{gpt_layer_forward.14} parent=0 // pred_check_branch
    %19 = sbr.rel (0) target = $region17
  $region16: #{gpt_layer_forward.14} parent=0 // pred_region
    _
  $region17: #{gpt_layer_forward.14} parent=0 // pred_fallthru
    _
  // Predicated region
  $region18: #{gpt_layer_forward.14} parent=0 // pred_check
    _
  $region19: #{gpt_layer_forward.14} parent=0 // pred_check_branch
    %21 = sbr.rel (0) target = $region21
  $region20: #{gpt_layer_forward.14} parent=0 // pred_region
    _
  $region21: #{gpt_layer_forward.14} parent=0 // pred_fallthru
    _
  %p23 = scmp.eq.s32.totalorder 0, 0
  // Predicated region
  $region22: #{gpt_layer_forward.14} parent=0 // pred_check
    %p24 = pneg %p23
  $region23: #{gpt_layer_forward.14} parent=0 // pred_check_branch
    %26 = sbr.rel (%p24) target = $region25
  $region24: #{gpt_layer_forward.14} parent=0 // pred_region
    %vm27 = vcmask 523264
    %28 = vst.msk [vmem:[#allocation2] sm:$0xff] %vm27, 0.0
    %29 = vst.msk [vmem:[#allocation2 + $0x8] sm:$0xff] %vm27, 0.0
    %30 = vst.msk [vmem:[#allocation2 + $0x10] sm:$0xff] %vm27, 0.0
    %31 = vst.msk [vmem:[#allocation2 + $0x18] sm:$0xff] %vm27, 0.0
  $region25: #{gpt_layer_forward.14} parent=0 // pred_fallthru
    _
  %v32 = vld [vmem:[#allocation2] sm:$0xff]
  %v33 = vld [vmem:[#allocation2 + $0x8] sm:$0xff]
  %v34 = vld [vmem:[#allocation2 + $0x10] sm:$0xff]
  %v35 = vld [vmem:[#allocation2 + $0x18] sm:$0xff]
  %v36 = vld [vmem:[%s0] sm:$0xf]
  %v37 = vld [vmem:[%s0 + $0x4] sm:$0xf]
  %v38 = vld [vmem:[%s0 + $0x8] sm:$0xf]
  %v39 = vld [vmem:[%s0 + $0xc] sm:$0xf]
  %v40 = vld [vmem:[%s1] sm:$0xf]
  %v41 = vld [vmem:[%s1 + $0x4] sm:$0xf]
  %v42 = vld [vmem:[%s1 + $0x8] sm:$0xf]
  %v43 = vld [vmem:[%s1 + $0xc] sm:$0xf]
  %v44 = vld [vmem:[%s1 + $0x10] sm:$0xf]
  %v45 = vld [vmem:[%s1 + $0x14] sm:$0xf]
  %v46 = vld [vmem:[%s1 + $0x18] sm:$0xf]
  %v47 = vld [vmem:[%s1 + $0x1c] sm:$0xf]
  %v52 = vunpack.c.l.b16 %v36
  %v53 = vunpack.c.l.b16 %v37
  %v54 = vunpack.c.l.b16 %v38
  %v55 = vunpack.c.l.b16 %v39
  %v56 = vpack.c.b16 %v53, %v52
  %v57 = vpack.c.b16 %v55, %v54
  %v66 = vunpack.c.l.b16 %v40
  %v67 = vunpack.c.l.b16 %v41
  %v68 = vunpack.c.l.b16 %v42
  %v69 = vunpack.c.l.b16 %v43
  %v70 = vunpack.c.l.b16 %v44
  %v71 = vunpack.c.l.b16 %v45
  %v72 = vunpack.c.l.b16 %v46
  %v73 = vunpack.c.l.b16 %v47
  %v74 = vpack.c.b16 %v67, %v66
  %v75 = vpack.c.b16 %v69, %v68
  %v76 = vpack.c.b16 %v71, %v70
  %v77 = vpack.c.b16 %v73, %v72
  %vm82 = vcmask 523264
  %v84 = vsel %vm82, %v56, 0
  %v87 = vsel %vm82, %v57, 0
  %89 = vmatprep.subr.bf16.mxu0 0
  %90 = vmatpush1.bf16.msra.mxu0 0
  %91 = vmatprep.subr.bf16.mxu0 0
  %92 = vmatpush1.bf16.msra.mxu0 0
  %93 = vmatprep.subr.bf16.mxu0 0
  %94 = vmatpush1.bf16.msra.mxu0 0
  %95 = vmatprep.subr.bf16.mxu0 0
  %96 = vmatpush1.bf16.msra.mxu0 0
  %97 = vmatprep.subr.bf16.mxu0 0
  %98 = vmatpush1.bf16.msra.mxu0 %v77
  %99 = vmatprep.subr.bf16.mxu0 0
  %100 = vmatpush1.bf16.msra.mxu0 %v76
  %101 = vmatprep.subr.bf16.mxu0 0
  %102 = vmatpush1.bf16.msra.mxu0 %v75
  %103 = vmatprep.subr.bf16.mxu0 0
  %104 = vmatpush1.bf16.msra.mxu0 %v74
  %105 = vmatprep.subr.bf16.mxu0 0
  %106 = vmatpush2.bf16.msra.mxu0 0
  %107 = vmatprep.subr.bf16.mxu0 0
  %108 = vmatpush2.bf16.msra.mxu0 0
  %109 = vmatprep.subr.bf16.mxu0 0
  %110 = vmatpush2.bf16.msra.mxu0 0
  %111 = vmatprep.subr.bf16.mxu0 0
  %112 = vmatpush2.bf16.msra.mxu0 0
  %113 = vmatprep.subr.bf16.mxu0 0
  %114 = vmatpush2.bf16.msra.mxu0 0
  %115 = vmatprep.subr.bf16.mxu0 0
  %116 = vmatpush2.bf16.msra.mxu0 0
  %117 = vmatprep.subr.bf16.mxu0 0
  %118 = vmatpush2.bf16.msra.mxu0 0
  %119 = vmatprep.subr.bf16.mxu0 0
  %120 = vmatpush2.bf16.msra.mxu0 0
  %121 = vmatprep.mubr.bf16.mxu0 0
  %122 = vmatmul.mubr.bf16.gmra.mxu0 %v84
  %v123 = vpop.f32.mrf.mxu0
  %v124 = vadd.f32 0.0, %v123
  %v125 = vpop.f32.mrf.mxu0
  %v126 = vpop.f32.mrf.mxu0
  %v127 = vadd.f32 0.0, %v126
  %v128 = vpop.f32.mrf.mxu0
  %129 = vmatprep.mubr.bf16.mxu0 0
  %130 = vmatmul.mubr.bf16.gmra.mxu0 %v87
  %v131 = vpop.f32.mrf.mxu0
  %v132 = vadd.f32 0.0, %v131
  %v133 = vpop.f32.mrf.mxu0
  %v134 = vpop.f32.mrf.mxu0
  %v135 = vadd.f32 0.0, %v134
  %v136 = vpop.f32.mrf.mxu0
  %137 = vdwg.mxu0
  %v138 = vadd.f32 %v32, %v124
  %v139 = vadd.f32 %v33, %v127
  %v140 = vadd.f32 %v34, %v132
  %v141 = vadd.f32 %v35, %v135
  %142 = vst.msk [vmem:[#allocation2] sm:$0xff] %vm82, %v138
  %143 = vst.msk [vmem:[#allocation2 + $0x8] sm:$0xff] %vm82, %v139
  %144 = vst.msk [vmem:[#allocation2 + $0x10] sm:$0xff] %vm82, %v140
  %145 = vst.msk [vmem:[#allocation2 + $0x18] sm:$0xff] %vm82, %v141
  // Predicated region
  $region26: #{gpt_layer_forward.14} parent=0 // pred_check
    %p146 = pneg %p23
  $region27: #{gpt_layer_forward.14} parent=0 // pred_check_branch
    %148 = sbr.rel (%p146) target = $region29
  $region28: #{gpt_layer_forward.14} parent=0 // pred_region
    %v149 = vld [vmem:[#allocation2] sm:$0xff]
    %v150 = vld [vmem:[#allocation2 + $0x8] sm:$0xff]
    %v151 = vld [vmem:[#allocation2 + $0x10] sm:$0xff]
    %v152 = vld [vmem:[#allocation2 + $0x18] sm:$0xff]
    %v153 = vld [vmem:[%s2] sm:$0x1]
    %v155 = vlaneseq
    %v156 = vshrl.u32 %v155, 7
    %v157 = vsub.s32 0, %v156
    %v158 = vrot.slane %v153, %v157
    %v160 = vadd.f32 %v149, %v158
    %v161 = vadd.f32 %v150, %v158
    %v162 = vadd.f32 %v151, %v158
    %v163 = vadd.f32 %v152, %v158
    %v164 = vld [vmem:[%s3] sm:$0xff]
    %v165 = vld [vmem:[%s3 + $0x8] sm:$0xff]
    %v166 = vld [vmem:[%s3 + $0x10] sm:$0xff]
    %v167 = vld [vmem:[%s3 + $0x18] sm:$0xff]
    %v168 = vadd.f32 %v160, %v164
    %v169 = vadd.f32 %v161, %v165
    %v170 = vadd.f32 %v162, %v166
    %v171 = vadd.f32 %v163, %v167
    %172 = vst.msk [vmem:[%s5] sm:$0xff] %vm82, %v168
    %173 = vst.msk [vmem:[%s5 + $0x8] sm:$0xff] %vm82, %v169
    %174 = vst.msk [vmem:[%s5 + $0x10] sm:$0xff] %vm82, %v170
    %175 = vst.msk [vmem:[%s5 + $0x18] sm:$0xff] %vm82, %v171
    %v176 = vmul.f32 %v168, %v168
    %v177 = vmul.f32 %v169, %v169
    %v178 = vmul.f32 %v170, %v170
    %v179 = vmul.f32 %v171, %v171
    %v180 = vsel %vm82, %v176, 0.0
    %181 = vadd.xlane.f32.xlu0 %v180
    %v182 = vpop.xlane.xlu0 %181
    %v183 = vsel %vm82, %v177, 0.0
    %184 = vadd.xlane.f32.xlu0 %v183
    %v185 = vpop.xlane.xlu0 %184
    %v186 = vsel %vm82, %v178, 0.0
    %187 = vadd.xlane.f32.xlu0 %v186
    %v188 = vpop.xlane.xlu0 %187
    %v189 = vsel %vm82, %v179, 0.0
    %190 = vadd.xlane.f32.xlu0 %v189
    %v191 = vpop.xlane.xlu0 %190
    %v192 = vrcp.pop 64.0
    %v193 = vmul.f32 %v182, %v192
    %v194 = vmul.f32 %v185, %v192
    %v195 = vmul.f32 %v188, %v192
    %v196 = vmul.f32 %v191, %v192
    %v197 = vadd.f32 %v193, 1e-05
    %v198 = vadd.f32 %v194, 1e-05
    %v199 = vadd.f32 %v195, 1e-05
    %v200 = vadd.f32 %v196, 1e-05
    %v201 = vrsqrt.pop %v197
    %v202 = vrsqrt.pop %v198
    %v203 = vrsqrt.pop %v199
    %v204 = vrsqrt.pop %v200
    %v205 = vmul.f32 %v168, %v201
    %v206 = vmul.f32 %v169, %v202
    %v207 = vmul.f32 %v170, %v203
    %v208 = vmul.f32 %v171, %v204
    %v209 = vld [vmem:[%s4] sm:$0x1]
    %v211 = vlaneseq
    %v212 = vshrl.u32 %v211, 7
    %v213 = vsub.s32 0, %v212
    %v214 = vrot.slane %v209, %v213
    %v216 = vmul.f32 %v205, %v214
    %v217 = vmul.f32 %v206, %v214
    %v218 = vmul.f32 %v207, %v214
    %v219 = vmul.f32 %v208, %v214
    %v220 = vpack.c.bf16 %v217, %v216
    %v221 = vpack.c.bf16 %v219, %v218
    %v224 = vunpack.c.l.b16 %v220
    %v225 = vunpack.c.h.b16 %v220
    %v226 = vunpack.c.l.b16 %v221
    %v227 = vunpack.c.h.b16 %v221
    %v228 = vpack.c.b16 %v224, %v224
    %v229 = vpack.c.b16 %v225, %v225
    %v230 = vpack.c.b16 %v226, %v226
    %v231 = vpack.c.b16 %v227, %v227
    %vm236 = vcmask 519168
    %237 = vst.msk [vmem:[%s6] sm:$0xf] %vm236, %v228
    %238 = vst.msk [vmem:[%s6 + $0x4] sm:$0xf] %vm236, %v229
    %239 = vst.msk [vmem:[%s6 + $0x8] sm:$0xf] %vm236, %v230
    %240 = vst.msk [vmem:[%s6 + $0xc] sm:$0xf] %vm236, %v231
  $region29: #{gpt_layer_forward.14} parent=0 // pred_fallthru
    _
  // Predicated region
  $region30: #{gpt_layer_forward.14} parent=0 // pred_check
    _
  $region31: #{gpt_layer_forward.14} parent=0 // pred_check_branch
    %242 = sbr.rel (0) target = $region33
  $region32: #{gpt_layer_forward.14} parent=0 // pred_region
    _
  $region33: #{gpt_layer_forward.14} parent=0 // pred_fallthru
    _
  // Predicated region
  $region34: #{gpt_layer_forward.14} parent=0 // pred_check
    _
  $region35: #{gpt_layer_forward.14} parent=0 // pred_check_branch
    %244 = sbr.rel (0) target = $region37
  $region36: #{gpt_layer_forward.14} parent=0 // pred_region
    _
  $region37: #{gpt_layer_forward.14} parent=0 // pred_fallthru
    _
  // Predicated region
  $region38: #{gpt_layer_forward.14} parent=0 // pred_check
    _
  $region39: #{gpt_layer_forward.14} parent=0 // pred_check_branch
    %246 = sbr.rel (0) target = $region41
  $region40: #{gpt_layer_forward.14} parent=0 // pred_region
    _
  $region41: #{gpt_layer_forward.14} parent=0 // pred_fallthru
    _
  // Predicated region
  $region42: #{gpt_layer_forward.14} parent=0 // pred_check
    _
  $region43: #{gpt_layer_forward.14} parent=0 // pred_check_branch
    %248 = sbr.rel (0) target = $region45
  $region44: #{gpt_layer_forward.14} parent=0 // pred_region
    _
  $region45: #{gpt_layer_forward.14} parent=0 // pred_fallthru
    _

// kernel: gpt_layer_forward.16
$region0: #{gpt_layer_forward.16}
  #allocation0 [shape = 'u32[]', space=smem, size = 0x4, offset = 0x4, fixed_abs, tag = 'smem constant byte address 0x4 - core index']
  #allocation1 [shape = 'u32[144,128]{1,0:T(1,128)}', space=vmem, size = 0x12000, scoped, tag = 'internal scratch']
  #allocation2 [shape = 'f32[32,64]{1,0:T(8,128)}', space=vmem, size = 0x4000, scoped, tag = 'scratch operand']
  %s0 = inlined_call_operand.vmem [shape: bf16[32,256], index: 0, kind: input, shape index: {}]
  %s1 = inlined_call_operand.vmem [shape: bf16[1,256,64], index: 1, kind: input, shape index: {}]
  %s2 = inlined_call_operand.vmem [shape: f32[1,1,64], index: 2, kind: input, shape index: {}]
  %s3 = inlined_call_operand.vmem [shape: f32[32,64], index: 3, kind: input, shape index: {}]
  %s4 = inlined_call_operand.vmem [shape: f32[1,64], index: 4, kind: input, shape index: {}]
  %s5 = inlined_call_operand.vmem [shape: f32[32,64], index: 5, kind: output, shape index: {0}]
  %s6 = inlined_call_operand.vmem [shape: bf16[32,64], index: 6, kind: output, shape index: {1}]
  %7 = xla_tuple %s5, %s6
  %s8 = sld [smem:[#allocation0]]
  $region46: #{gpt_layer_forward.16} parent=0
    _
  %s10 = ssub.s32 1, %s8
  %s11 = scalar_select 0, %s10, %s8
  // Predicated region
  $region2: #{gpt_layer_forward.16} parent=0 // pred_check
    _
  $region3: #{gpt_layer_forward.16} parent=0 // pred_check_branch
    %13 = sbr.rel (0) target = $region5
  $region4: #{gpt_layer_forward.16} parent=0 // pred_region
    _
  $region5: #{gpt_layer_forward.16} parent=0 // pred_fallthru
    _
  // Predicated region
  $region6: #{gpt_layer_forward.16} parent=0 // pred_check
    _
  $region7: #{gpt_layer_forward.16} parent=0 // pred_check_branch
    %15 = sbr.rel (0) target = $region9
  $region8: #{gpt_layer_forward.16} parent=0 // pred_region
    _
  $region9: #{gpt_layer_forward.16} parent=0 // pred_fallthru
    _
  // Predicated region
  $region10: #{gpt_layer_forward.16} parent=0 // pred_check
    _
  $region11: #{gpt_layer_forward.16} parent=0 // pred_check_branch
    %17 = sbr.rel (0) target = $region13
  $region12: #{gpt_layer_forward.16} parent=0 // pred_region
    _
  $region13: #{gpt_layer_forward.16} parent=0 // pred_fallthru
    _
  // Predicated region
  $region14: #{gpt_layer_forward.16} parent=0 // pred_check
    _
  $region15: #{gpt_layer_forward.16} parent=0 // pred_check_branch
    %19 = sbr.rel (0) target = $region17
  $region16: #{gpt_layer_forward.16} parent=0 // pred_region
    _
  $region17: #{gpt_layer_forward.16} parent=0 // pred_fallthru
    _
  // Predicated region
  $region18: #{gpt_layer_forward.16} parent=0 // pred_check
    _
  $region19: #{gpt_layer_forward.16} parent=0 // pred_check_branch
    %21 = sbr.rel (0) target = $region21
  $region20: #{gpt_layer_forward.16} parent=0 // pred_region
    _
  $region21: #{gpt_layer_forward.16} parent=0 // pred_fallthru
    _
  %p23 = scmp.eq.s32.totalorder 0, 0
  // Predicated region
  $region22: #{gpt_layer_forward.16} parent=0 // pred_check
    %p24 = pneg %p23
  $region23: #{gpt_layer_forward.16} parent=0 // pred_check_branch
    %26 = sbr.rel (%p24) target = $region25
  $region24: #{gpt_layer_forward.16} parent=0 // pred_region
    %vm27 = vcmask 523264
    %28 = vst.msk [vmem:[#allocation2] sm:$0xff] %vm27, 0.0
    %29 = vst.msk [vmem:[#allocation2 + $0x8] sm:$0xff] %vm27, 0.0
    %30 = vst.msk [vmem:[#allocation2 + $0x10] sm:$0xff] %vm27, 0.0
    %31 = vst.msk [vmem:[#allocation2 + $0x18] sm:$0xff] %vm27, 0.0
  $region25: #{gpt_layer_forward.16} parent=0 // pred_fallthru
    _
  %v32 = vld [vmem:[#allocation2] sm:$0xff]
  %v33 = vld [vmem:[#allocation2 + $0x8] sm:$0xff]
  %v34 = vld [vmem:[#allocation2 + $0x10] sm:$0xff]
  %v35 = vld [vmem:[#allocation2 + $0x18] sm:$0xff]
  %v36 = vld [vmem:[%s0] sm:$0xff]
  %v37 = vld [vmem:[%s0 + $0x8] sm:$0xff]
  %v38 = vld [vmem:[%s0 + $0x10] sm:$0xff]
  %v39 = vld [vmem:[%s0 + $0x18] sm:$0xff]
  %v40 = vld [vmem:[%s1] sm:$0xf]
  %v41 = vld [vmem:[%s1 + $0x4] sm:$0xf]
  %v42 = vld [vmem:[%s1 + $0x8] sm:$0xf]
  %v43 = vld [vmem:[%s1 + $0xc] sm:$0xf]
  %v44 = vld [vmem:[%s1 + $0x10] sm:$0xf]
  %v45 = vld [vmem:[%s1 + $0x14] sm:$0xf]
  %v46 = vld [vmem:[%s1 + $0x18] sm:$0xf]
  %v47 = vld [vmem:[%s1 + $0x1c] sm:$0xf]
  %v48 = vld [vmem:[%s1 + $0x20] sm:$0xf]
  %v49 = vld [vmem:[%s1 + $0x24] sm:$0xf]
  %v50 = vld [vmem:[%s1 + $0x28] sm:$0xf]
  %v51 = vld [vmem:[%s1 + $0x2c] sm:$0xf]
  %v52 = vld [vmem:[%s1 + $0x30] sm:$0xf]
  %v53 = vld [vmem:[%s1 + $0x34] sm:$0xf]
  %v54 = vld [vmem:[%s1 + $0x38] sm:$0xf]
  %v55 = vld [vmem:[%s1 + $0x3c] sm:$0xf]
  %v56 = vld [vmem:[%s1 + $0x40] sm:$0xf]
  %v57 = vld [vmem:[%s1 + $0x44] sm:$0xf]
  %v58 = vld [vmem:[%s1 + $0x48] sm:$0xf]
  %v59 = vld [vmem:[%s1 + $0x4c] sm:$0xf]
  %v60 = vld [vmem:[%s1 + $0x50] sm:$0xf]
  %v61 = vld [vmem:[%s1 + $0x54] sm:$0xf]
  %v62 = vld [vmem:[%s1 + $0x58] sm:$0xf]
  %v63 = vld [vmem:[%s1 + $0x5c] sm:$0xf]
  %v64 = vld [vmem:[%s1 + $0x60] sm:$0xf]
  %v65 = vld [vmem:[%s1 + $0x64] sm:$0xf]
  %v66 = vld [vmem:[%s1 + $0x68] sm:$0xf]
  %v67 = vld [vmem:[%s1 + $0x6c] sm:$0xf]
  %v68 = vld [vmem:[%s1 + $0x70] sm:$0xf]
  %v69 = vld [vmem:[%s1 + $0x74] sm:$0xf]
  %v70 = vld [vmem:[%s1 + $0x78] sm:$0xf]
  %v71 = vld [vmem:[%s1 + $0x7c] sm:$0xf]
  %v76 = vunpack.c.l.b16 %v36
  %v77 = vunpack.c.h.b16 %v36
  %v78 = vunpack.c.l.b16 %v37
  %v79 = vunpack.c.h.b16 %v37
  %v80 = vunpack.c.l.b16 %v38
  %v81 = vunpack.c.h.b16 %v38
  %v82 = vunpack.c.l.b16 %v39
  %v83 = vunpack.c.h.b16 %v39
  %v84 = vpack.c.b16 %v78, %v76
  %v85 = vpack.c.b16 %v79, %v77
  %v86 = vpack.c.b16 %v82, %v80
  %v87 = vpack.c.b16 %v83, %v81
  %v124 = vunpack.c.l.b16 %v40
  %v125 = vunpack.c.l.b16 %v41
  %v126 = vunpack.c.l.b16 %v42
  %v127 = vunpack.c.l.b16 %v43
  %v128 = vunpack.c.l.b16 %v44
  %v129 = vunpack.c.l.b16 %v45
  %v130 = vunpack.c.l.b16 %v46
  %v131 = vunpack.c.l.b16 %v47
  %v132 = vunpack.c.l.b16 %v48
  %v133 = vunpack.c.l.b16 %v49
  %v134 = vunpack.c.l.b16 %v50
  %v135 = vunpack.c.l.b16 %v51
  %v136 = vunpack.c.l.b16 %v52
  %v137 = vunpack.c.l.b16 %v53
  %v138 = vunpack.c.l.b16 %v54
  %v139 = vunpack.c.l.b16 %v55
  %v140 = vunpack.c.l.b16 %v56
  %v141 = vunpack.c.l.b16 %v57
  %v142 = vunpack.c.l.b16 %v58
  %v143 = vunpack.c.l.b16 %v59
  %v144 = vunpack.c.l.b16 %v60
  %v145 = vunpack.c.l.b16 %v61
  %v146 = vunpack.c.l.b16 %v62
  %v147 = vunpack.c.l.b16 %v63
  %v148 = vunpack.c.l.b16 %v64
  %v149 = vunpack.c.l.b16 %v65
  %v150 = vunpack.c.l.b16 %v66
  %v151 = vunpack.c.l.b16 %v67
  %v152 = vunpack.c.l.b16 %v68
  %v153 = vunpack.c.l.b16 %v69
  %v154 = vunpack.c.l.b16 %v70
  %v155 = vunpack.c.l.b16 %v71
  %v156 = vpack.c.b16 %v125, %v124
  %v157 = vpack.c.b16 %v127, %v126
  %v158 = vpack.c.b16 %v129, %v128
  %v159 = vpack.c.b16 %v131, %v130
  %v160 = vpack.c.b16 %v133, %v132
  %v161 = vpack.c.b16 %v135, %v134
  %v162 = vpack.c.b16 %v137, %v136
  %v163 = vpack.c.b16 %v139, %v138
  %v164 = vpack.c.b16 %v141, %v140
  %v165 = vpack.c.b16 %v143, %v142
  %v166 = vpack.c.b16 %v145, %v144
  %v167 = vpack.c.b16 %v147, %v146
  %v168 = vpack.c.b16 %v149, %v148
  %v169 = vpack.c.b16 %v151, %v150
  %v170 = vpack.c.b16 %v153, %v152
  %v171 = vpack.c.b16 %v155, %v154
  %188 = vmatprep.subr.bf16.mxu0 0
  %189 = vmatpush1.bf16.msra.mxu0 %v163
  %190 = vmatprep.subr.bf16.mxu0 0
  %191 = vmatpush1.bf16.msra.mxu0 %v162
  %192 = vmatprep.subr.bf16.mxu0 0
  %193 = vmatpush1.bf16.msra.mxu0 %v161
  %194 = vmatprep.subr.bf16.mxu0 0
  %195 = vmatpush1.bf16.msra.mxu0 %v160
  %196 = vmatprep.subr.bf16.mxu0 0
  %197 = vmatpush1.bf16.msra.mxu0 %v159
  %198 = vmatprep.subr.bf16.mxu0 0
  %199 = vmatpush1.bf16.msra.mxu0 %v158
  %200 = vmatprep.subr.bf16.mxu0 0
  %201 = vmatpush1.bf16.msra.mxu0 %v157
  %202 = vmatprep.subr.bf16.mxu0 0
  %203 = vmatpush1.bf16.msra.mxu0 %v156
  %204 = vmatprep.subr.bf16.mxu0 0
  %205 = vmatpush2.bf16.msra.mxu0 %v171
  %206 = vmatprep.subr.bf16.mxu0 0
  %207 = vmatpush2.bf16.msra.mxu0 %v170
  %208 = vmatprep.subr.bf16.mxu0 0
  %209 = vmatpush2.bf16.msra.mxu0 %v169
  %210 = vmatprep.subr.bf16.mxu0 0
  %211 = vmatpush2.bf16.msra.mxu0 %v168
  %212 = vmatprep.subr.bf16.mxu0 0
  %213 = vmatpush2.bf16.msra.mxu0 %v167
  %214 = vmatprep.subr.bf16.mxu0 0
  %215 = vmatpush2.bf16.msra.mxu0 %v166
  %216 = vmatprep.subr.bf16.mxu0 0
  %217 = vmatpush2.bf16.msra.mxu0 %v165
  %218 = vmatprep.subr.bf16.mxu0 0
  %219 = vmatpush2.bf16.msra.mxu0 %v164
  %220 = vmatprep.mubr.bf16.mxu0 %v85
  %221 = vmatmul.mubr.bf16.gmra.mxu0 %v84
  %v222 = vpop.f32.mrf.mxu0
  %v223 = vadd.f32 0.0, %v222
  %v224 = vpop.f32.mrf.mxu0
  %v225 = vpop.f32.mrf.mxu0
  %v226 = vadd.f32 0.0, %v225
  %v227 = vpop.f32.mrf.mxu0
  %228 = vmatprep.mubr.bf16.mxu0 %v87
  %229 = vmatmul.mubr.bf16.gmra.mxu0 %v86
  %v230 = vpop.f32.mrf.mxu0
  %v231 = vadd.f32 0.0, %v230
  %v232 = vpop.f32.mrf.mxu0
  %v233 = vpop.f32.mrf.mxu0
  %v234 = vadd.f32 0.0, %v233
  %v235 = vpop.f32.mrf.mxu0
  %236 = vdwg.mxu0
  %v237 = vadd.f32 %v32, %v223
  %v238 = vadd.f32 %v33, %v226
  %v239 = vadd.f32 %v34, %v231
  %v240 = vadd.f32 %v35, %v234
  %vm241 = vcmask 523264
  %242 = vst.msk [vmem:[#allocation2] sm:$0xff] %vm241, %v237
  %243 = vst.msk [vmem:[#allocation2 + $0x8] sm:$0xff] %vm241, %v238
  %244 = vst.msk [vmem:[#allocation2 + $0x10] sm:$0xff] %vm241, %v239
  %245 = vst.msk [vmem:[#allocation2 + $0x18] sm:$0xff] %vm241, %v240
  // Predicated region
  $region26: #{gpt_layer_forward.16} parent=0 // pred_check
    %p246 = pneg %p23
  $region27: #{gpt_layer_forward.16} parent=0 // pred_check_branch
    %248 = sbr.rel (%p246) target = $region29
  $region28: #{gpt_layer_forward.16} parent=0 // pred_region
    %v249 = vld [vmem:[#allocation2] sm:$0xff]
    %v250 = vld [vmem:[#allocation2 + $0x8] sm:$0xff]
    %v251 = vld [vmem:[#allocation2 + $0x10] sm:$0xff]
    %v252 = vld [vmem:[#allocation2 + $0x18] sm:$0xff]
    %v253 = vld [vmem:[%s2] sm:$0x1]
    %v255 = vlaneseq
    %v256 = vshrl.u32 %v255, 7
    %v257 = vsub.s32 0, %v256
    %v258 = vrot.slane %v253, %v257
    %v260 = vadd.f32 %v249, %v258
    %v261 = vadd.f32 %v250, %v258
    %v262 = vadd.f32 %v251, %v258
    %v263 = vadd.f32 %v252, %v258
    %v264 = vld [vmem:[%s3] sm:$0xff]
    %v265 = vld [vmem:[%s3 + $0x8] sm:$0xff]
    %v266 = vld [vmem:[%s3 + $0x10] sm:$0xff]
    %v267 = vld [vmem:[%s3 + $0x18] sm:$0xff]
    %v268 = vadd.f32 %v260, %v264
    %v269 = vadd.f32 %v261, %v265
    %v270 = vadd.f32 %v262, %v266
    %v271 = vadd.f32 %v263, %v267
    %272 = vst.msk [vmem:[%s5] sm:$0xff] %vm241, %v268
    %273 = vst.msk [vmem:[%s5 + $0x8] sm:$0xff] %vm241, %v269
    %274 = vst.msk [vmem:[%s5 + $0x10] sm:$0xff] %vm241, %v270
    %275 = vst.msk [vmem:[%s5 + $0x18] sm:$0xff] %vm241, %v271
    %v276 = vmul.f32 %v268, %v268
    %v277 = vmul.f32 %v269, %v269
    %v278 = vmul.f32 %v270, %v270
    %v279 = vmul.f32 %v271, %v271
    %v280 = vsel %vm241, %v276, 0.0
    %281 = vadd.xlane.f32.xlu0 %v280
    %v282 = vpop.xlane.xlu0 %281
    %v283 = vsel %vm241, %v277, 0.0
    %284 = vadd.xlane.f32.xlu0 %v283
    %v285 = vpop.xlane.xlu0 %284
    %v286 = vsel %vm241, %v278, 0.0
    %287 = vadd.xlane.f32.xlu0 %v286
    %v288 = vpop.xlane.xlu0 %287
    %v289 = vsel %vm241, %v279, 0.0
    %290 = vadd.xlane.f32.xlu0 %v289
    %v291 = vpop.xlane.xlu0 %290
    %v292 = vrcp.pop 64.0
    %v293 = vmul.f32 %v282, %v292
    %v294 = vmul.f32 %v285, %v292
    %v295 = vmul.f32 %v288, %v292
    %v296 = vmul.f32 %v291, %v292
    %v297 = vadd.f32 %v293, 1e-05
    %v298 = vadd.f32 %v294, 1e-05
    %v299 = vadd.f32 %v295, 1e-05
    %v300 = vadd.f32 %v296, 1e-05
    %v301 = vrsqrt.pop %v297
    %v302 = vrsqrt.pop %v298
    %v303 = vrsqrt.pop %v299
    %v304 = vrsqrt.pop %v300
    %v305 = vmul.f32 %v268, %v301
    %v306 = vmul.f32 %v269, %v302
    %v307 = vmul.f32 %v270, %v303
    %v308 = vmul.f32 %v271, %v304
    %v309 = vld [vmem:[%s4] sm:$0x1]
    %v311 = vlaneseq
    %v312 = vshrl.u32 %v311, 7
    %v313 = vsub.s32 0, %v312
    %v314 = vrot.slane %v309, %v313
    %v316 = vmul.f32 %v305, %v314
    %v317 = vmul.f32 %v306, %v314
    %v318 = vmul.f32 %v307, %v314
    %v319 = vmul.f32 %v308, %v314
    %v320 = vpack.c.bf16 %v317, %v316
    %v321 = vpack.c.bf16 %v319, %v318
    %v324 = vunpack.c.l.b16 %v320
    %v325 = vunpack.c.h.b16 %v320
    %v326 = vunpack.c.l.b16 %v321
    %v327 = vunpack.c.h.b16 %v321
    %v328 = vpack.c.b16 %v324, %v324
    %v329 = vpack.c.b16 %v325, %v325
    %v330 = vpack.c.b16 %v326, %v326
    %v331 = vpack.c.b16 %v327, %v327
    %vm336 = vcmask 519168
    %337 = vst.msk [vmem:[%s6] sm:$0xf] %vm336, %v328
    %338 = vst.msk [vmem:[%s6 + $0x4] sm:$0xf] %vm336, %v329
    %339 = vst.msk [vmem:[%s6 + $0x8] sm:$0xf] %vm336, %v330
    %340 = vst.msk [vmem:[%s6 + $0xc] sm:$0xf] %vm336, %v331
  $region29: #{gpt_layer_forward.16} parent=0 // pred_fallthru
    _
  // Predicated region
  $region30: #{gpt_layer_forward.16} parent=0 // pred_check
    _
  $region31: #{gpt_layer_forward.16} parent=0 // pred_check_branch
    %342 = sbr.rel (0) target = $region33
  $region32: #{gpt_layer_forward.16} parent=0 // pred_region
    _
  $region33: #{gpt_layer_forward.16} parent=0 // pred_fallthru
    _
  // Predicated region
  $region34: #{gpt_layer_forward.16} parent=0 // pred_check
    _
  $region35: #{gpt_layer_forward.16} parent=0 // pred_check_branch
    %344 = sbr.rel (0) target = $region37
  $region36: #{gpt_layer_forward.16} parent=0 // pred_region
    _
  $region37: #{gpt_layer_forward.16} parent=0 // pred_fallthru
    _
  // Predicated region
  $region38: #{gpt_layer_forward.16} parent=0 // pred_check
    _
  $region39: #{gpt_layer_forward.16} parent=0 // pred_check_branch
    %346 = sbr.rel (0) target = $region41
  $region40: #{gpt_layer_forward.16} parent=0 // pred_region
    _
  $region41: #{gpt_layer_forward.16} parent=0 // pred_fallthru
    _
  // Predicated region
  $region42: #{gpt_layer_forward.16} parent=0 // pred_check
    _
  $region43: #{gpt_layer_forward.16} parent=0 // pred_check_branch
    %348 = sbr.rel (0) target = $region45
  $region44: #{gpt_layer_forward.16} parent=0 // pred_region
    _
  $region45: #{gpt_layer_forward.16} parent=0 // pred_fallthru
    _

// kernel: gpt_layer_forward.17
$region0: #{gpt_layer_forward.17}
  #allocation0 [shape = 'u32[]', space=smem, size = 0x4, offset = 0x4, fixed_abs, tag = 'smem constant byte address 0x4 - core index']
  #allocation1 [shape = 'u32[144,128]{1,0:T(1,128)}', space=vmem, size = 0x12000, scoped, tag = 'internal scratch']
  #allocation2 [shape = 'f32[32,64]{1,0:T(8,128)}', space=vmem, size = 0x4000, scoped, tag = 'scratch operand']
  %s0 = inlined_call_operand.vmem [shape: bf16[32,64], index: 0, kind: input, shape index: {}]
  %s1 = inlined_call_operand.vmem [shape: bf16[3,64,64], index: 1, kind: input, shape index: {}]
  %s2 = inlined_call_operand.vmem [shape: f32[3,1,64], index: 2, kind: input, shape index: {}]
  %s3 = inlined_call_operand.vmem [shape: bf16[3,32,64], index: 3, kind: output, shape index: {}]
  %s4 = sld [smem:[#allocation0]]
  $region53: #{gpt_layer_forward.17} parent=0
    _
  %s6 = ssub.s32 1, %s4
  %s7 = scalar_select 0, %s6, %s4
  loop: start=0, step=1, limit=5
  $region2: #{gpt_layer_forward.17} parent=0 // loop_pre_header
    _
  $region3: #{gpt_layer_forward.17} parent=0 // loop_header
    %s9 = sphi 0, %s13
    %p10 = scmp.ge.s32.totalorder %s9, 5
    %s16 = sphi 0, %s42
    %s17 = sphi 0, %s38
    %s18 = sphi 0, %s34
    %s19 = sphi 0, %s30
    %s20 = sphi 0, %s16
    %s21 = sphi 0, %s17
    %s22 = sphi 0, %s18
    %s23 = sphi 0, %s19
    %s24 = sphi 0, %s20
    %s25 = sphi 0, %s21
    %s26 = sphi 0, %s22
    %s27 = sphi 0, %s23
    %s47 = sphi 0, %s49
    %s50 = sphi 0, %s47
    %s51 = sphi 0, %s50
    %s67 = sphi 0, %s51
    %s77 = sphi 0, %s79
    %s80 = sphi 0, %s77
    %s81 = sphi 0, %s80
    %s97 = sphi 0, %s81
    %s105 = sphi 0, %s107
    %s108 = sphi 0, %s105
    %s109 = sphi 0, %s108
    %s125 = sphi 0, %s109
    %s135 = sphi 0, %s137
    %s138 = sphi 0, %s135
    %s139 = sphi 0, %s138
    %s155 = sphi 0, %s139
  $region4: #{gpt_layer_forward.17} parent=0 // loop_header_branch
    %12 = sbr.rel (%p10) target = $region8
  $region5: #{gpt_layer_forward.17} parent=0 // loop_body
    %s14 = ssub.s32 %s9, 1
    %s15 = ssub.s32 %s9, 2
    %s28 = sadd.s32 1, %s19
    %p29 = scmp.ge.s32.totalorder %s28, 1
    %s30 = scalar_select %p29, 0, %s28
    %s31 = sadd.s32 1, %s18
    %s32 = scalar_select %p29, %s31, %s18
    %p33 = scmp.ge.s32.totalorder %s32, 1
    %s34 = scalar_select %p33, 0, %s32
    %s35 = sadd.s32 1, %s17
    %s36 = scalar_select %p33, %s35, %s17
    %p37 = scmp.ge.s32.totalorder %s36, 1
    %s38 = scalar_select %p37, 0, %s36
    %s39 = sadd.s32 1, %s16
    %s40 = scalar_select %p37, %s39, %s16
    %p41 = scmp.ge.s32.totalorder %s40, 3
    %s42 = scalar_select %p41, 0, %s40
    %s43 = ssub.s32 %s17, %s38
    %s44 = ssub.s32 %s19, %s30
    %s45 = sor.u32 %s43, %s44
    %p46 = scmp.eq.s32.totalorder %s45, 0
    %s48 = sadd.s32 %s47, 1
    %s49 = scalar_select %p46, %s47, %s48
    %p52 = pneg %p46
    %p53 = scmp.eq.s32.totalorder %s9, 2
    %p54 = por %p52, %p53
    %p55 = scmp.ne.s32.totalorder %s47, %s50
    %p56 = scmp.eq.s32.totalorder %s9, 0
    %p57 = por %p55, %p56
    %p58 = scmp.ne.s32.totalorder %s47, %s50
    %p59 = scmp.eq.s32.totalorder %s14, 2
    %p60 = por %p58, %p59
    %p61 = scmp.ne.s32.totalorder %s50, %s51
    %p62 = scmp.eq.s32.totalorder %s14, 0
    %p63 = por %p61, %p62
    %p64 = scmp.ne.s32.totalorder %s50, %s51
    %p65 = scmp.eq.s32.totalorder %s15, 2
    %p66 = por %p64, %p65
    %p68 = scmp.ne.s32.totalorder %s51, %s67
    %p69 = scmp.eq.s32.totalorder %s15, 0
    %p70 = por %p68, %p69
    %s71 = ssub.s32 %s16, %s42
    %s72 = ssub.s32 %s19, %s30
    %s73 = sor.u32 %s71, %s72
    %s74 = ssub.s32 %s18, %s34
    %s75 = sor.u32 %s73, %s74
    %p76 = scmp.eq.s32.totalorder %s75, 0
    %s78 = sadd.s32 %s77, 1
    %s79 = scalar_select %p76, %s77, %s78
    %p82 = pneg %p76
    %p83 = scmp.eq.s32.totalorder %s9, 2
    %p84 = por %p82, %p83
    %p85 = scmp.ne.s32.totalorder %s77, %s80
    %p86 = scmp.eq.s32.totalorder %s9, 0
    %p87 = por %p85, %p86
    %p88 = scmp.ne.s32.totalorder %s77, %s80
    %p89 = scmp.eq.s32.totalorder %s14, 2
    %p90 = por %p88, %p89
    %p91 = scmp.ne.s32.totalorder %s80, %s81
    %p92 = scmp.eq.s32.totalorder %s14, 0
    %p93 = por %p91, %p92
    %p94 = scmp.ne.s32.totalorder %s80, %s81
    %p95 = scmp.eq.s32.totalorder %s15, 2
    %p96 = por %p94, %p95
    %p98 = scmp.ne.s32.totalorder %s81, %s97
    %p99 = scmp.eq.s32.totalorder %s15, 0
    %p100 = por %p98, %p99
    %s101 = ssub.s32 %s16, %s42
    %s102 = ssub.s32 %s18, %s34
    %s103 = sor.u32 %s101, %s102
    %p104 = scmp.eq.s32.totalorder %s103, 0
    %s106 = sadd.s32 %s105, 1
    %s107 = scalar_select %p104, %s105, %s106
    %p110 = pneg %p104
    %p111 = scmp.eq.s32.totalorder %s9, 2
    %p112 = por %p110, %p111
    %p113 = scmp.ne.s32.totalorder %s105, %s108
    %p114 = scmp.eq.s32.totalorder %s9, 0
    %p115 = por %p113, %p114
    %p116 = scmp.ne.s32.totalorder %s105, %s108
    %p117 = scmp.eq.s32.totalorder %s14, 2
    %p118 = por %p116, %p117
    %p119 = scmp.ne.s32.totalorder %s108, %s109
    %p120 = scmp.eq.s32.totalorder %s14, 0
    %p121 = por %p119, %p120
    %p122 = scmp.ne.s32.totalorder %s108, %s109
    %p123 = scmp.eq.s32.totalorder %s15, 2
    %p124 = por %p122, %p123
    %p126 = scmp.ne.s32.totalorder %s109, %s125
    %p127 = scmp.eq.s32.totalorder %s15, 0
    %p128 = por %p126, %p127
    %s129 = ssub.s32 %s16, %s42
    %s130 = ssub.s32 %s17, %s38
    %s131 = sor.u32 %s129, %s130
    %s132 = ssub.s32 %s18, %s34
    %s133 = sor.u32 %s131, %s132
    %p134 = scmp.eq.s32.totalorder %s133, 0
    %s136 = sadd.s32 %s135, 1
    %s137 = scalar_select %p134, %s135, %s136
    %p140 = pneg %p134
    %p141 = scmp.eq.s32.totalorder %s9, 2
    %p142 = por %p140, %p141
    %p143 = scmp.ne.s32.totalorder %s135, %s138
    %p144 = scmp.eq.s32.totalorder %s9, 0
    %p145 = por %p143, %p144
    %p146 = scmp.ne.s32.totalorder %s135, %s138
    %p147 = scmp.eq.s32.totalorder %s14, 2
    %p148 = por %p146, %p147
    %p149 = scmp.ne.s32.totalorder %s138, %s139
    %p150 = scmp.eq.s32.totalorder %s14, 0
    %p151 = por %p149, %p150
    %p152 = scmp.ne.s32.totalorder %s138, %s139
    %p153 = scmp.eq.s32.totalorder %s15, 2
    %p154 = por %p152, %p153
    %p156 = scmp.ne.s32.totalorder %s139, %s155
    %p157 = scmp.eq.s32.totalorder %s15, 0
    %p158 = por %p156, %p157
    %p159 = scmp.le.s32.totalorder 1, %s9
    %p160 = scmp.lt.s32.totalorder %s9, 4
    %p161 = pnand %p159, %p160
    %p162 = pneg %p161
    // Predicated region
    $region9: #{gpt_layer_forward.17} parent=5 // pred_check
      _
    $region10: #{gpt_layer_forward.17} parent=5 // pred_check_branch
      %164 = sbr.rel (%p161) target = $region12
    $region11: #{gpt_layer_forward.17} parent=5 // pred_region
      %s165 = ssub.s32 %s9, 1
      // Predicated region
      $region13: #{gpt_layer_forward.17} parent=11 // pred_check
        %p166 = pneg %p63
      $region14: #{gpt_layer_forward.17} parent=11 // pred_check_branch
        %168 = sbr.rel (%p166) target = $region16
      $region15: #{gpt_layer_forward.17} parent=11 // pred_region
        %s169 = smul.u32 4, %s21
        %p170 = scmp.lt.s32.totalorder %s169, 3
        %s171 = scalar_select %p170, %s169, 3
        %p172 = scmp.lt.s32.totalorder %s23, 0
        %s173 = scalar_select %p172, %s23, 0
        %s174 = sadd.s32 %s173, %s171
        %s175 = smul.addr %s174, 4
        %s176 = scalar_lea.vmem %s0, %s175
        %s177 = smul.u32 4, %s21
      $region16: #{gpt_layer_forward.17} parent=11 // pred_fallthru
        _
    $region12: #{gpt_layer_forward.17} parent=5 // pred_fallthru
      _
    %p178 = scmp.lt.s32.totalorder %s9, 3
    // Predicated region
    $region17: #{gpt_layer_forward.17} parent=5 // pred_check
      %p179 = pneg %p178
    $region18: #{gpt_layer_forward.17} parent=5 // pred_check_branch
      %181 = sbr.rel (%p179) target = $region20
    $region19: #{gpt_layer_forward.17} parent=5 // pred_region
      // Predicated region
      $region21: #{gpt_layer_forward.17} parent=19 // pred_check
        %p182 = pneg %p87
      $region22: #{gpt_layer_forward.17} parent=19 // pred_check_branch
        %184 = sbr.rel (%p182) target = $region24
      $region23: #{gpt_layer_forward.17} parent=19 // pred_region
        %s185 = smul.u32 8, %s19
        %p186 = scmp.lt.s32.totalorder %s16, 2
        %s187 = scalar_select %p186, %s16, 2
        %p188 = scmp.lt.s32.totalorder %s185, 7
        %s189 = scalar_select %p188, %s185, 7
        %p190 = scmp.lt.s32.totalorder %s18, 0
        %s191 = scalar_select %p190, %s18, 0
        %s192 = sadd.s32 %s191, %s189
        %s193 = smul.addr %s187, 8
        %s194 = sadd.s32 %s192, %s193
        %s195 = smul.addr %s194, 4
        %s196 = scalar_lea.vmem %s1, %s195
        %s197 = smul.u32 8, %s19
      $region24: #{gpt_layer_forward.17} parent=19 // pred_fallthru
        _
      // Predicated region
      $region25: #{gpt_layer_forward.17} parent=19 // pred_check
        %p198 = pneg %p115
      $region26: #{gpt_layer_forward.17} parent=19 // pred_check_branch
        %200 = sbr.rel (%p198) target = $region28
      $region27: #{gpt_layer_forward.17} parent=19 // pred_region
        %p201 = scmp.lt.s32.totalorder %s16, 2
        %s202 = scalar_select %p201, %s16, 2
        %p203 = scmp.lt.s32.totalorder %s18, 0
        %s204 = scalar_select %p203, %s18, 0
        %s205 = sadd.s32 %s204, %s202
        %s206 = scalar_lea.vmem %s2, %s205
      $region28: #{gpt_layer_forward.17} parent=19 // pred_fallthru
        _
    $region20: #{gpt_layer_forward.17} parent=5 // pred_fallthru
      _
    %p207 = scmp.le.s32.totalorder 1, %s9
    %p208 = scmp.lt.s32.totalorder %s9, 4
    %p209 = pnand %p207, %p208
    %p210 = pneg %p209
    // Predicated region
    $region29: #{gpt_layer_forward.17} parent=5 // pred_check
      _
    $region30: #{gpt_layer_forward.17} parent=5 // pred_check_branch
      %212 = sbr.rel (%p209) target = $region32
    $region31: #{gpt_layer_forward.17} parent=5 // pred_region
      %s213 = ssub.s32 %s9, 1
      %s214 = smul.u32 4, %s21
      %p215 = scmp.lt.s32.totalorder %s214, 3
      %s216 = scalar_select %p215, %s214, 3
      %p217 = scmp.lt.s32.totalorder %s23, 0
      %s218 = scalar_select %p217, %s23, 0
      %s219 = sadd.s32 %s218, %s216
      %s220 = smul.addr %s219, 4
      %s221 = scalar_lea.vmem %s0, %s220
      %p222 = pneg %p63
      %p223 = pneg %p60
      %s224 = smul.u32 8, %s23
      %p225 = scmp.lt.s32.totalorder %s20, 2
      %s226 = scalar_select %p225, %s20, 2
      %p227 = scmp.lt.s32.totalorder %s224, 7
      %s228 = scalar_select %p227, %s224, 7
      %p229 = scmp.lt.s32.totalorder %s22, 0
      %s230 = scalar_select %p229, %s22, 0
      %s231 = sadd.s32 %s230, %s228
      %s232 = smul.addr %s226, 8
      %s233 = sadd.s32 %s231, %s232
      %s234 = smul.addr %s233, 4
      %s235 = scalar_lea.vmem %s1, %s234
      %p236 = pneg %p93
      %p237 = pneg %p90
      %p238 = scmp.lt.s32.totalorder %s20, 2
      %s239 = scalar_select %p238, %s20, 2
      %p240 = scmp.lt.s32.totalorder %s22, 0
      %s241 = scalar_select %p240, %s22, 0
      %s242 = sadd.s32 %s241, %s239
      %s243 = scalar_lea.vmem %s2, %s242
      %p244 = pneg %p121
      %p245 = pneg %p118
      %p246 = pneg %p151
      %p247 = pneg %p148
      %s248 = smul.u32 4, %s21
      %p249 = scmp.lt.s32.totalorder %s20, 2
      %s250 = scalar_select %p249, %s20, 2
      %p251 = scmp.lt.s32.totalorder %s248, 3
      %s252 = scalar_select %p251, %s248, 3
      %p253 = scmp.lt.s32.totalorder %s22, 0
      %s254 = scalar_select %p253, %s22, 0
      %s255 = sadd.s32 %s254, %s252
      %s256 = smul.addr %s250, 4
      %s257 = sadd.s32 %s255, %s256
      %s258 = smul.addr %s257, 4
      %s259 = scalar_lea.vmem %s3, %s258
      %s260 = smul.u32 4, %s21
      %p261 = scmp.lt.s32.totalorder %s260, 3
      %s262 = scalar_select %p261, %s260, 3
      %p263 = scmp.lt.s32.totalorder %s23, 0
      %s264 = scalar_select %p263, %s23, 0
      %s265 = sadd.s32 %s264, %s262
      %s266 = smul.addr %s265, 4
      %s267 = scalar_lea.vmem %s0, %s266
      %s268 = smul.u32 4, %s21
      %s269 = smul.u32 8, %s23
      %p270 = scmp.lt.s32.totalorder %s20, 2
      %s271 = scalar_select %p270, %s20, 2
      %p272 = scmp.lt.s32.totalorder %s269, 7
      %s273 = scalar_select %p272, %s269, 7
      %p274 = scmp.lt.s32.totalorder %s22, 0
      %s275 = scalar_select %p274, %s22, 0
      %s276 = sadd.s32 %s275, %s273
      %s277 = smul.addr %s271, 8
      %s278 = sadd.s32 %s276, %s277
      %s279 = smul.addr %s278, 4
      %s280 = scalar_lea.vmem %s1, %s279
      %s281 = smul.u32 8, %s23
      %p282 = scmp.lt.s32.totalorder %s20, 2
      %s283 = scalar_select %p282, %s20, 2
      %p284 = scmp.lt.s32.totalorder %s22, 0
      %s285 = scalar_select %p284, %s22, 0
      %s286 = sadd.s32 %s285, %s283
      %s287 = scalar_lea.vmem %s2, %s286
      %s288 = smul.u32 4, %s21
      %p289 = scmp.lt.s32.totalorder %s20, 2
      %s290 = scalar_select %p289, %s20, 2
      %p291 = scmp.lt.s32.totalorder %s288, 3
      %s292 = scalar_select %p291, %s288, 3
      %p293 = scmp.lt.s32.totalorder %s22, 0
      %s294 = scalar_select %p293, %s22, 0
      %s295 = sadd.s32 %s294, %s292
      %s296 = smul.addr %s290, 4
      %s297 = sadd.s32 %s295, %s296
      %s298 = smul.addr %s297, 4
      %s299 = scalar_lea.vmem %s3, %s298
      %s300 = smul.u32 4, %s21
      %p302 = scmp.eq.s32.totalorder %s23, 0
      // Predicated region
      $region33: #{gpt_layer_forward.17} parent=31 // pred_check
        %p303 = pneg %p302
      $region34: #{gpt_layer_forward.17} parent=31 // pred_check_branch
        %305 = sbr.rel (%p303) target = $region36
      $region35: #{gpt_layer_forward.17} parent=31 // pred_region
        %vm306 = vcmask 523264
        %307 = vst.msk [vmem:[#allocation2] sm:$0xff] %vm306, 0.0
        %308 = vst.msk [vmem:[#allocation2 + $0x8] sm:$0xff] %vm306, 0.0
        %309 = vst.msk [vmem:[#allocation2 + $0x10] sm:$0xff] %vm306, 0.0
        %310 = vst.msk [vmem:[#allocation2 + $0x18] sm:$0xff] %vm306, 0.0
      $region36: #{gpt_layer_forward.17} parent=31 // pred_fallthru
        _
      %v311 = vld [vmem:[#allocation2] sm:$0xff]
      %v312 = vld [vmem:[#allocation2 + $0x8] sm:$0xff]
      %v313 = vld [vmem:[#allocation2 + $0x10] sm:$0xff]
      %v314 = vld [vmem:[#allocation2 + $0x18] sm:$0xff]
      %v315 = vld [vmem:[%s267] sm:$0xf]
      %v316 = vld [vmem:[%s267 + $0x4] sm:$0xf]
      %v317 = vld [vmem:[%s267 + $0x8] sm:$0xf]
      %v318 = vld [vmem:[%s267 + $0xc] sm:$0xf]
      %v319 = vld [vmem:[%s280] sm:$0xf]
      %v320 = vld [vmem:[%s280 + $0x4] sm:$0xf]
      %v321 = vld [vmem:[%s280 + $0x8] sm:$0xf]
      %v322 = vld [vmem:[%s280 + $0xc] sm:$0xf]
      %v323 = vld [vmem:[%s280 + $0x10] sm:$0xf]
      %v324 = vld [vmem:[%s280 + $0x14] sm:$0xf]
      %v325 = vld [vmem:[%s280 + $0x18] sm:$0xf]
      %v326 = vld [vmem:[%s280 + $0x1c] sm:$0xf]
      %v331 = vunpack.c.l.b16 %v315
      %v332 = vunpack.c.l.b16 %v316
      %v333 = vunpack.c.l.b16 %v317
      %v334 = vunpack.c.l.b16 %v318
      %v335 = vpack.c.b16 %v332, %v331
      %v336 = vpack.c.b16 %v334, %v333
      %v345 = vunpack.c.l.b16 %v319
      %v346 = vunpack.c.l.b16 %v320
      %v347 = vunpack.c.l.b16 %v321
      %v348 = vunpack.c.l.b16 %v322
      %v349 = vunpack.c.l.b16 %v323
      %v350 = vunpack.c.l.b16 %v324
      %v351 = vunpack.c.l.b16 %v325
      %v352 = vunpack.c.l.b16 %v326
      %v353 = vpack.c.b16 %v346, %v345
      %v354 = vpack.c.b16 %v348, %v347
      %v355 = vpack.c.b16 %v350, %v349
      %v356 = vpack.c.b16 %v352, %v351
      %vm361 = vcmask 523264
      %v363 = vsel %vm361, %v335, 0
      %v366 = vsel %vm361, %v336, 0
      %368 = vmatprep.subr.bf16.mxu0 0
      %369 = vmatpush1.bf16.msra.mxu0 0
      %370 = vmatprep.subr.bf16.mxu0 0
      %371 = vmatpush1.bf16.msra.mxu0 0
      %372 = vmatprep.subr.bf16.mxu0 0
      %373 = vmatpush1.bf16.msra.mxu0 0
      %374 = vmatprep.subr.bf16.mxu0 0
      %375 = vmatpush1.bf16.msra.mxu0 0
      %376 = vmatprep.subr.bf16.mxu0 0
      %377 = vmatpush1.bf16.msra.mxu0 %v356
      %378 = vmatprep.subr.bf16.mxu0 0
      %379 = vmatpush1.bf16.msra.mxu0 %v355
      %380 = vmatprep.subr.bf16.mxu0 0
      %381 = vmatpush1.bf16.msra.mxu0 %v354
      %382 = vmatprep.subr.bf16.mxu0 0
      %383 = vmatpush1.bf16.msra.mxu0 %v353
      %384 = vmatprep.subr.bf16.mxu0 0
      %385 = vmatpush2.bf16.msra.mxu0 0
      %386 = vmatprep.subr.bf16.mxu0 0
      %387 = vmatpush2.bf16.msra.mxu0 0
      %388 = vmatprep.subr.bf16.mxu0 0
      %389 = vmatpush2.bf16.msra.mxu0 0
      %390 = vmatprep.subr.bf16.mxu0 0
      %391 = vmatpush2.bf16.msra.mxu0 0
      %392 = vmatprep.subr.bf16.mxu0 0
      %393 = vmatpush2.bf16.msra.mxu0 0
      %394 = vmatprep.subr.bf16.mxu0 0
      %395 = vmatpush2.bf16.msra.mxu0 0
      %396 = vmatprep.subr.bf16.mxu0 0
      %397 = vmatpush2.bf16.msra.mxu0 0
      %398 = vmatprep.subr.bf16.mxu0 0
      %399 = vmatpush2.bf16.msra.mxu0 0
      %400 = vmatprep.mubr.bf16.mxu0 0
      %401 = vmatmul.mubr.bf16.gmra.mxu0 %v363
      %v402 = vpop.f32.mrf.mxu0
      %v403 = vadd.f32 0.0, %v402
      %v404 = vpop.f32.mrf.mxu0
      %v405 = vpop.f32.mrf.mxu0
      %v406 = vadd.f32 0.0, %v405
      %v407 = vpop.f32.mrf.mxu0
      %408 = vmatprep.mubr.bf16.mxu0 0
      %409 = vmatmul.mubr.bf16.gmra.mxu0 %v366
      %v410 = vpop.f32.mrf.mxu0
      %v411 = vadd.f32 0.0, %v410
      %v412 = vpop.f32.mrf.mxu0
      %v413 = vpop.f32.mrf.mxu0
      %v414 = vadd.f32 0.0, %v413
      %v415 = vpop.f32.mrf.mxu0
      %416 = vdwg.mxu0
      %v417 = vadd.f32 %v311, %v403
      %v418 = vadd.f32 %v312, %v406
      %v419 = vadd.f32 %v313, %v411
      %v420 = vadd.f32 %v314, %v414
      %421 = vst.msk [vmem:[#allocation2] sm:$0xff] %vm361, %v417
      %422 = vst.msk [vmem:[#allocation2 + $0x8] sm:$0xff] %vm361, %v418
      %423 = vst.msk [vmem:[#allocation2 + $0x10] sm:$0xff] %vm361, %v419
      %424 = vst.msk [vmem:[#allocation2 + $0x18] sm:$0xff] %vm361, %v420
      // Predicated region
      $region37: #{gpt_layer_forward.17} parent=31 // pred_check
        %p425 = pneg %p302
      $region38: #{gpt_layer_forward.17} parent=31 // pred_check_branch
        %427 = sbr.rel (%p425) target = $region40
      $region39: #{gpt_layer_forward.17} parent=31 // pred_region
        %v428 = vld [vmem:[#allocation2] sm:$0xff]
        %v429 = vld [vmem:[#allocation2 + $0x8] sm:$0xff]
        %v430 = vld [vmem:[#allocation2 + $0x10] sm:$0xff]
        %v431 = vld [vmem:[#allocation2 + $0x18] sm:$0xff]
        %v432 = vld [vmem:[%s287] sm:$0x1]
        %v434 = vlaneseq
        %v435 = vshrl.u32 %v434, 7
        %v436 = vsub.s32 0, %v435
        %v437 = vrot.slane %v432, %v436
        %v439 = vadd.f32 %v428, %v437
        %v440 = vadd.f32 %v429, %v437
        %v441 = vadd.f32 %v430, %v437
        %v442 = vadd.f32 %v431, %v437
        %v443 = vpack.c.bf16 %v440, %v439
        %v444 = vpack.c.bf16 %v442, %v441
        %v447 = vunpack.c.l.b16 %v443
        %v448 = vunpack.c.h.b16 %v443
        %v449 = vunpack.c.l.b16 %v444
        %v450 = vunpack.c.h.b16 %v444
        %v451 = vpack.c.b16 %v447, %v447
        %v452 = vpack.c.b16 %v448, %v448
        %v453 = vpack.c.b16 %v449, %v449
        %v454 = vpack.c.b16 %v450, %v450
        %vm459 = vcmask 519168
        %460 = vst.msk [vmem:[%s299] sm:$0xf] %vm459, %v451
        %461 = vst.msk [vmem:[%s299 + $0x4] sm:$0xf] %vm459, %v452
        %462 = vst.msk [vmem:[%s299 + $0x8] sm:$0xf] %vm459, %v453
        %463 = vst.msk [vmem:[%s299 + $0xc] sm:$0xf] %vm459, %v454
      $region40: #{gpt_layer_forward.17} parent=31 // pred_fallthru
        _
      %s464 = smul.u32 4, %s21
      %p465 = scmp.lt.s32.totalorder %s20, 2
      %s466 = scalar_select %p465, %s20, 2
      %p467 = scmp.lt.s32.totalorder %s464, 3
      %s468 = scalar_select %p467, %s464, 3
      %p469 = scmp.lt.s32.totalorder %s22, 0
      %s470 = scalar_select %p469, %s22, 0
      %s471 = sadd.s32 %s470, %s468
      %s472 = smul.addr %s466, 4
      %s473 = sadd.s32 %s471, %s472
      %s474 = smul.addr %s473, 4
      %s475 = scalar_lea.vmem %s3, %s474
      // Predicated region
      $region41: #{gpt_layer_forward.17} parent=31 // pred_check
        %p476 = pneg %p148
      $region42: #{gpt_layer_forward.17} parent=31 // pred_check_branch
        %478 = sbr.rel (%p476) target = $region44
      $region43: #{gpt_layer_forward.17} parent=31 // pred_region
        %s479 = smul.u32 4, %s21
      $region44: #{gpt_layer_forward.17} parent=31 // pred_fallthru
        _
    $region32: #{gpt_layer_forward.17} parent=5 // pred_fallthru
      _
    %p480 = scmp.le.s32.totalorder 2, %s9
    // Predicated region
    $region45: #{gpt_layer_forward.17} parent=5 // pred_check
      %p481 = pneg %p480
    $region46: #{gpt_layer_forward.17} parent=5 // pred_check_branch
      %483 = sbr.rel (%p481) target = $region48
    $region47: #{gpt_layer_forward.17} parent=5 // pred_region
      %s484 = ssub.s32 %s9, 2
      // Predicated region
      $region49: #{gpt_layer_forward.17} parent=47 // pred_check
        %p485 = pneg %p154
      $region50: #{gpt_layer_forward.17} parent=47 // pred_check_branch
        %487 = sbr.rel (%p485) target = $region52
      $region51: #{gpt_layer_forward.17} parent=47 // pred_region
        %s488 = smul.u32 4, %s25
        %p489 = scmp.lt.s32.totalorder %s24, 2
        %s490 = scalar_select %p489, %s24, 2
        %p491 = scmp.lt.s32.totalorder %s488, 3
        %s492 = scalar_select %p491, %s488, 3
        %p493 = scmp.lt.s32.totalorder %s26, 0
        %s494 = scalar_select %p493, %s26, 0
        %s495 = sadd.s32 %s494, %s492
        %s496 = smul.addr %s490, 4
        %s497 = sadd.s32 %s495, %s496
        %s498 = smul.addr %s497, 4
        %s499 = scalar_lea.vmem %s3, %s498
      $region52: #{gpt_layer_forward.17} parent=47 // pred_fallthru
        _
    $region48: #{gpt_layer_forward.17} parent=5 // pred_fallthru
      _
  $region6: #{gpt_layer_forward.17} parent=0 // loop_footer
    %s13 = sadd.s32 1, %s9
  $region7: #{gpt_layer_forward.17} parent=0 // loop_footer_branch
    %8 = sbr.rel target = $region3
  $region8: #{gpt_layer_forward.17} parent=0 // loop_exit
    _

// kernel: gpt_layer_forward.21
$region0: #{gpt_layer_forward.21}
  #allocation0 [shape = 'u32[]', space=smem, size = 0x4, offset = 0x4, fixed_abs, tag = 'smem constant byte address 0x4 - core index']
  #allocation1 [shape = 'u32[144,128]{1,0:T(1,128)}', space=vmem, size = 0x12000, scoped, tag = 'internal scratch']
  #allocation2 [shape = 'f32[32,64]{1,0:T(8,128)}', space=vmem, size = 0x4000, scoped, tag = 'scratch operand']
  %s0 = inlined_call_operand.vmem [shape: bf16[32,256], index: 0, kind: input, shape index: {}]
  %s1 = inlined_call_operand.vmem [shape: bf16[1,256,64], index: 1, kind: input, shape index: {}]
  %s2 = inlined_call_operand.vmem [shape: f32[1,1,64], index: 2, kind: input, shape index: {}]
  %s3 = inlined_call_operand.vmem [shape: f32[32,64], index: 3, kind: input, shape index: {}]
  %s4 = inlined_call_operand.vmem [shape: f32[1,64], index: 4, kind: input, shape index: {}]
  %s5 = inlined_call_operand.hbm [shape: f32[32,64], index: 5, kind: output, shape index: {0}]
  %s6 = inlined_call_operand.hbm [shape: f32[32,64], index: 6, kind: output, shape index: {1}]
  %7 = xla_tuple %s5, %s6
  %s8 = sld [smem:[#allocation0]]
  $region46: #{gpt_layer_forward.21} parent=0
    _
  %s10 = ssub.s32 1, %s8
  %s11 = scalar_select 0, %s10, %s8
  $region1: #{gpt_layer_forward.21} parent=0
    #allocation3 [shape = 'u8[16384]{0}', space=vmem, size = 0x4000, scoped, tag = 'output window, operand 0, single buffered']
    #allocation4 [shape = 's32[1]{0}', space=sflag, size = 0x4, scoped, tag = 'scoped memory for gpt_layer_forward.21']
    #allocation5 [shape = 'u8[16384]{0}', space=vmem, size = 0x4000, scoped, tag = 'output window, operand 1, single buffered']
    #allocation6 [shape = 's32[1]{0}', space=sflag, size = 0x4, scoped, tag = 'scoped memory for gpt_layer_forward.21']
    %12 = vsyncpa [#allocation4], 0
    %13 = vsyncpa [#allocation6], 0
    // Predicated region
    $region2: #{gpt_layer_forward.21} parent=1 // pred_check
      _
    $region3: #{gpt_layer_forward.21} parent=1 // pred_check_branch
      %15 = sbr.rel (0) target = $region5
    $region4: #{gpt_layer_forward.21} parent=1 // pred_region
      _
    $region5: #{gpt_layer_forward.21} parent=1 // pred_fallthru
      _
    // Predicated region
    $region6: #{gpt_layer_forward.21} parent=1 // pred_check
      _
    $region7: #{gpt_layer_forward.21} parent=1 // pred_check_branch
      %17 = sbr.rel (0) target = $region9
    $region8: #{gpt_layer_forward.21} parent=1 // pred_region
      _
    $region9: #{gpt_layer_forward.21} parent=1 // pred_fallthru
      _
    // Predicated region
    $region10: #{gpt_layer_forward.21} parent=1 // pred_check
      _
    $region11: #{gpt_layer_forward.21} parent=1 // pred_check_branch
      %19 = sbr.rel (0) target = $region13
    $region12: #{gpt_layer_forward.21} parent=1 // pred_region
      _
    $region13: #{gpt_layer_forward.21} parent=1 // pred_fallthru
      _
    // Predicated region
    $region14: #{gpt_layer_forward.21} parent=1 // pred_check
      _
    $region15: #{gpt_layer_forward.21} parent=1 // pred_check_branch
      %21 = sbr.rel (0) target = $region17
    $region16: #{gpt_layer_forward.21} parent=1 // pred_region
      _
    $region17: #{gpt_layer_forward.21} parent=1 // pred_fallthru
      _
    // Predicated region
    $region18: #{gpt_layer_forward.21} parent=1 // pred_check
      _
    $region19: #{gpt_layer_forward.21} parent=1 // pred_check_branch
      %23 = sbr.rel (0) target = $region21
    $region20: #{gpt_layer_forward.21} parent=1 // pred_region
      _
    $region21: #{gpt_layer_forward.21} parent=1 // pred_fallthru
      _
    %p25 = scmp.eq.s32.totalorder 0, 0
    // Predicated region
    $region22: #{gpt_layer_forward.21} parent=1 // pred_check
      %p26 = pneg %p25
    $region23: #{gpt_layer_forward.21} parent=1 // pred_check_branch
      %28 = sbr.rel (%p26) target = $region25
    $region24: #{gpt_layer_forward.21} parent=1 // pred_region
      %vm29 = vcmask 523264
      %30 = vst.msk [vmem:[#allocation2] sm:$0xff] %vm29, 0.0
      %31 = vst.msk [vmem:[#allocation2 + $0x8] sm:$0xff] %vm29, 0.0
      %32 = vst.msk [vmem:[#allocation2 + $0x10] sm:$0xff] %vm29, 0.0
      %33 = vst.msk [vmem:[#allocation2 + $0x18] sm:$0xff] %vm29, 0.0
    $region25: #{gpt_layer_forward.21} parent=1 // pred_fallthru
      _
    %v34 = vld [vmem:[#allocation2] sm:$0xff]
    %v35 = vld [vmem:[#allocation2 + $0x8] sm:$0xff]
    %v36 = vld [vmem:[#allocation2 + $0x10] sm:$0xff]
    %v37 = vld [vmem:[#allocation2 + $0x18] sm:$0xff]
    %v38 = vld [vmem:[%s0] sm:$0xff]
    %v39 = vld [vmem:[%s0 + $0x8] sm:$0xff]
    %v40 = vld [vmem:[%s0 + $0x10] sm:$0xff]
    %v41 = vld [vmem:[%s0 + $0x18] sm:$0xff]
    %v42 = vld [vmem:[%s1] sm:$0xf]
    %v43 = vld [vmem:[%s1 + $0x4] sm:$0xf]
    %v44 = vld [vmem:[%s1 + $0x8] sm:$0xf]
    %v45 = vld [vmem:[%s1 + $0xc] sm:$0xf]
    %v46 = vld [vmem:[%s1 + $0x10] sm:$0xf]
    %v47 = vld [vmem:[%s1 + $0x14] sm:$0xf]
    %v48 = vld [vmem:[%s1 + $0x18] sm:$0xf]
    %v49 = vld [vmem:[%s1 + $0x1c] sm:$0xf]
    %v50 = vld [vmem:[%s1 + $0x20] sm:$0xf]
    %v51 = vld [vmem:[%s1 + $0x24] sm:$0xf]
    %v52 = vld [vmem:[%s1 + $0x28] sm:$0xf]
    %v53 = vld [vmem:[%s1 + $0x2c] sm:$0xf]
    %v54 = vld [vmem:[%s1 + $0x30] sm:$0xf]
    %v55 = vld [vmem:[%s1 + $0x34] sm:$0xf]
    %v56 = vld [vmem:[%s1 + $0x38] sm:$0xf]
    %v57 = vld [vmem:[%s1 + $0x3c] sm:$0xf]
    %v58 = vld [vmem:[%s1 + $0x40] sm:$0xf]
    %v59 = vld [vmem:[%s1 + $0x44] sm:$0xf]
    %v60 = vld [vmem:[%s1 + $0x48] sm:$0xf]
    %v61 = vld [vmem:[%s1 + $0x4c] sm:$0xf]
    %v62 = vld [vmem:[%s1 + $0x50] sm:$0xf]
    %v63 = vld [vmem:[%s1 + $0x54] sm:$0xf]
    %v64 = vld [vmem:[%s1 + $0x58] sm:$0xf]
    %v65 = vld [vmem:[%s1 + $0x5c] sm:$0xf]
    %v66 = vld [vmem:[%s1 + $0x60] sm:$0xf]
    %v67 = vld [vmem:[%s1 + $0x64] sm:$0xf]
    %v68 = vld [vmem:[%s1 + $0x68] sm:$0xf]
    %v69 = vld [vmem:[%s1 + $0x6c] sm:$0xf]
    %v70 = vld [vmem:[%s1 + $0x70] sm:$0xf]
    %v71 = vld [vmem:[%s1 + $0x74] sm:$0xf]
    %v72 = vld [vmem:[%s1 + $0x78] sm:$0xf]
    %v73 = vld [vmem:[%s1 + $0x7c] sm:$0xf]
    %v78 = vunpack.c.l.b16 %v38
    %v79 = vunpack.c.h.b16 %v38
    %v80 = vunpack.c.l.b16 %v39
    %v81 = vunpack.c.h.b16 %v39
    %v82 = vunpack.c.l.b16 %v40
    %v83 = vunpack.c.h.b16 %v40
    %v84 = vunpack.c.l.b16 %v41
    %v85 = vunpack.c.h.b16 %v41
    %v86 = vpack.c.b16 %v80, %v78
    %v87 = vpack.c.b16 %v81, %v79
    %v88 = vpack.c.b16 %v84, %v82
    %v89 = vpack.c.b16 %v85, %v83
    %v126 = vunpack.c.l.b16 %v42
    %v127 = vunpack.c.l.b16 %v43
    %v128 = vunpack.c.l.b16 %v44
    %v129 = vunpack.c.l.b16 %v45
    %v130 = vunpack.c.l.b16 %v46
    %v131 = vunpack.c.l.b16 %v47
    %v132 = vunpack.c.l.b16 %v48
    %v133 = vunpack.c.l.b16 %v49
    %v134 = vunpack.c.l.b16 %v50
    %v135 = vunpack.c.l.b16 %v51
    %v136 = vunpack.c.l.b16 %v52
    %v137 = vunpack.c.l.b16 %v53
    %v138 = vunpack.c.l.b16 %v54
    %v139 = vunpack.c.l.b16 %v55
    %v140 = vunpack.c.l.b16 %v56
    %v141 = vunpack.c.l.b16 %v57
    %v142 = vunpack.c.l.b16 %v58
    %v143 = vunpack.c.l.b16 %v59
    %v144 = vunpack.c.l.b16 %v60
    %v145 = vunpack.c.l.b16 %v61
    %v146 = vunpack.c.l.b16 %v62
    %v147 = vunpack.c.l.b16 %v63
    %v148 = vunpack.c.l.b16 %v64
    %v149 = vunpack.c.l.b16 %v65
    %v150 = vunpack.c.l.b16 %v66
    %v151 = vunpack.c.l.b16 %v67
    %v152 = vunpack.c.l.b16 %v68
    %v153 = vunpack.c.l.b16 %v69
    %v154 = vunpack.c.l.b16 %v70
    %v155 = vunpack.c.l.b16 %v71
    %v156 = vunpack.c.l.b16 %v72
    %v157 = vunpack.c.l.b16 %v73
    %v158 = vpack.c.b16 %v127, %v126
    %v159 = vpack.c.b16 %v129, %v128
    %v160 = vpack.c.b16 %v131, %v130
    %v161 = vpack.c.b16 %v133, %v132
    %v162 = vpack.c.b16 %v135, %v134
    %v163 = vpack.c.b16 %v137, %v136
    %v164 = vpack.c.b16 %v139, %v138
    %v165 = vpack.c.b16 %v141, %v140
    %v166 = vpack.c.b16 %v143, %v142
    %v167 = vpack.c.b16 %v145, %v144
    %v168 = vpack.c.b16 %v147, %v146
    %v169 = vpack.c.b16 %v149, %v148
    %v170 = vpack.c.b16 %v151, %v150
    %v171 = vpack.c.b16 %v153, %v152
    %v172 = vpack.c.b16 %v155, %v154
    %v173 = vpack.c.b16 %v157, %v156
    %190 = vmatprep.subr.bf16.mxu0 0
    %191 = vmatpush1.bf16.msra.mxu0 %v165
    %192 = vmatprep.subr.bf16.mxu0 0
    %193 = vmatpush1.bf16.msra.mxu0 %v164
    %194 = vmatprep.subr.bf16.mxu0 0
    %195 = vmatpush1.bf16.msra.mxu0 %v163
    %196 = vmatprep.subr.bf16.mxu0 0
    %197 = vmatpush1.bf16.msra.mxu0 %v162
    %198 = vmatprep.subr.bf16.mxu0 0
    %199 = vmatpush1.bf16.msra.mxu0 %v161
    %200 = vmatprep.subr.bf16.mxu0 0
    %201 = vmatpush1.bf16.msra.mxu0 %v160
    %202 = vmatprep.subr.bf16.mxu0 0
    %203 = vmatpush1.bf16.msra.mxu0 %v159
    %204 = vmatprep.subr.bf16.mxu0 0
    %205 = vmatpush1.bf16.msra.mxu0 %v158
    %206 = vmatprep.subr.bf16.mxu0 0
    %207 = vmatpush2.bf16.msra.mxu0 %v173
    %208 = vmatprep.subr.bf16.mxu0 0
    %209 = vmatpush2.bf16.msra.mxu0 %v172
    %210 = vmatprep.subr.bf16.mxu0 0
    %211 = vmatpush2.bf16.msra.mxu0 %v171
    %212 = vmatprep.subr.bf16.mxu0 0
    %213 = vmatpush2.bf16.msra.mxu0 %v170
    %214 = vmatprep.subr.bf16.mxu0 0
    %215 = vmatpush2.bf16.msra.mxu0 %v169
    %216 = vmatprep.subr.bf16.mxu0 0
    %217 = vmatpush2.bf16.msra.mxu0 %v168
    %218 = vmatprep.subr.bf16.mxu0 0
    %219 = vmatpush2.bf16.msra.mxu0 %v167
    %220 = vmatprep.subr.bf16.mxu0 0
    %221 = vmatpush2.bf16.msra.mxu0 %v166
    %222 = vmatprep.mubr.bf16.mxu0 %v87
    %223 = vmatmul.mubr.bf16.gmra.mxu0 %v86
    %v224 = vpop.f32.mrf.mxu0
    %v225 = vadd.f32 0.0, %v224
    %v226 = vpop.f32.mrf.mxu0
    %v227 = vpop.f32.mrf.mxu0
    %v228 = vadd.f32 0.0, %v227
    %v229 = vpop.f32.mrf.mxu0
    %230 = vmatprep.mubr.bf16.mxu0 %v89
    %231 = vmatmul.mubr.bf16.gmra.mxu0 %v88
    %v232 = vpop.f32.mrf.mxu0
    %v233 = vadd.f32 0.0, %v232
    %v234 = vpop.f32.mrf.mxu0
    %v235 = vpop.f32.mrf.mxu0
    %v236 = vadd.f32 0.0, %v235
    %v237 = vpop.f32.mrf.mxu0
    %238 = vdwg.mxu0
    %v239 = vadd.f32 %v34, %v225
    %v240 = vadd.f32 %v35, %v228
    %v241 = vadd.f32 %v36, %v233
    %v242 = vadd.f32 %v37, %v236
    %vm243 = vcmask 523264
    %244 = vst.msk [vmem:[#allocation2] sm:$0xff] %vm243, %v239
    %245 = vst.msk [vmem:[#allocation2 + $0x8] sm:$0xff] %vm243, %v240
    %246 = vst.msk [vmem:[#allocation2 + $0x10] sm:$0xff] %vm243, %v241
    %247 = vst.msk [vmem:[#allocation2 + $0x18] sm:$0xff] %vm243, %v242
    // Predicated region
    $region26: #{gpt_layer_forward.21} parent=1 // pred_check
      %p248 = pneg %p25
    $region27: #{gpt_layer_forward.21} parent=1 // pred_check_branch
      %250 = sbr.rel (%p248) target = $region29
    $region28: #{gpt_layer_forward.21} parent=1 // pred_region
      %v251 = vld [vmem:[#allocation2] sm:$0xff]
      %v252 = vld [vmem:[#allocation2 + $0x8] sm:$0xff]
      %v253 = vld [vmem:[#allocation2 + $0x10] sm:$0xff]
      %v254 = vld [vmem:[#allocation2 + $0x18] sm:$0xff]
      %v255 = vld [vmem:[%s2] sm:$0x1]
      %v257 = vlaneseq
      %v258 = vshrl.u32 %v257, 7
      %v259 = vsub.s32 0, %v258
      %v260 = vrot.slane %v255, %v259
      %v262 = vadd.f32 %v251, %v260
      %v263 = vadd.f32 %v252, %v260
      %v264 = vadd.f32 %v253, %v260
      %v265 = vadd.f32 %v254, %v260
      %v266 = vld [vmem:[%s3] sm:$0xff]
      %v267 = vld [vmem:[%s3 + $0x8] sm:$0xff]
      %v268 = vld [vmem:[%s3 + $0x10] sm:$0xff]
      %v269 = vld [vmem:[%s3 + $0x18] sm:$0xff]
      %v270 = vadd.f32 %v262, %v266
      %v271 = vadd.f32 %v263, %v267
      %v272 = vadd.f32 %v264, %v268
      %v273 = vadd.f32 %v265, %v269
      %274 = vst.msk [vmem:[#allocation3] sm:$0xff] %vm243, %v270
      %275 = vst.msk [vmem:[#allocation3 + $0x8] sm:$0xff] %vm243, %v271
      %276 = vst.msk [vmem:[#allocation3 + $0x10] sm:$0xff] %vm243, %v272
      %277 = vst.msk [vmem:[#allocation3 + $0x18] sm:$0xff] %vm243, %v273
      %v278 = vmul.f32 %v270, %v270
      %v279 = vmul.f32 %v271, %v271
      %v280 = vmul.f32 %v272, %v272
      %v281 = vmul.f32 %v273, %v273
      %v282 = vsel %vm243, %v278, 0.0
      %283 = vadd.xlane.f32.xlu0 %v282
      %v284 = vpop.xlane.xlu0 %283
      %v285 = vsel %vm243, %v279, 0.0
      %286 = vadd.xlane.f32.xlu0 %v285
      %v287 = vpop.xlane.xlu0 %286
      %v288 = vsel %vm243, %v280, 0.0
      %289 = vadd.xlane.f32.xlu0 %v288
      %v290 = vpop.xlane.xlu0 %289
      %v291 = vsel %vm243, %v281, 0.0
      %292 = vadd.xlane.f32.xlu0 %v291
      %v293 = vpop.xlane.xlu0 %292
      %v294 = vrcp.pop 64.0
      %v295 = vmul.f32 %v284, %v294
      %v296 = vmul.f32 %v287, %v294
      %v297 = vmul.f32 %v290, %v294
      %v298 = vmul.f32 %v293, %v294
      %v299 = vadd.f32 %v295, 1e-05
      %v300 = vadd.f32 %v296, 1e-05
      %v301 = vadd.f32 %v297, 1e-05
      %v302 = vadd.f32 %v298, 1e-05
      %v303 = vrsqrt.pop %v299
      %v304 = vrsqrt.pop %v300
      %v305 = vrsqrt.pop %v301
      %v306 = vrsqrt.pop %v302
      %v307 = vmul.f32 %v270, %v303
      %v308 = vmul.f32 %v271, %v304
      %v309 = vmul.f32 %v272, %v305
      %v310 = vmul.f32 %v273, %v306
      %v311 = vld [vmem:[%s4] sm:$0x1]
      %v313 = vlaneseq
      %v314 = vshrl.u32 %v313, 7
      %v315 = vsub.s32 0, %v314
      %v316 = vrot.slane %v311, %v315
      %v318 = vmul.f32 %v307, %v316
      %v319 = vmul.f32 %v308, %v316
      %v320 = vmul.f32 %v309, %v316
      %v321 = vmul.f32 %v310, %v316
      %322 = vst.msk [vmem:[#allocation5] sm:$0xff] %vm243, %v318
      %323 = vst.msk [vmem:[#allocation5 + $0x8] sm:$0xff] %vm243, %v319
      %324 = vst.msk [vmem:[#allocation5 + $0x10] sm:$0xff] %vm243, %v320
      %325 = vst.msk [vmem:[#allocation5 + $0x18] sm:$0xff] %vm243, %v321
    $region29: #{gpt_layer_forward.21} parent=1 // pred_fallthru
      _
    // Predicated region
    $region30: #{gpt_layer_forward.21} parent=1 // pred_check
      _
    $region31: #{gpt_layer_forward.21} parent=1 // pred_check_branch
      %327 = sbr.rel (0) target = $region33
    $region32: #{gpt_layer_forward.21} parent=1 // pred_region
      %s329 = ssub.s32 512, 512
      %330 = vsyncadd [#allocation4], %s329
      %s331 = sshll.u32 [#allocation3], 4
      %s332 = int_to_ptr.vmem [resolvable:$true] %s331
      %337 = dma.vmem_to_hbm [thread:$0]  %s332, 512, %s5, [#allocation4], 128, 128, 8
    $region33: #{gpt_layer_forward.21} parent=1 // pred_fallthru
      _
    // Predicated region
    $region34: #{gpt_layer_forward.21} parent=1 // pred_check
      _
    $region35: #{gpt_layer_forward.21} parent=1 // pred_check_branch
      %339 = sbr.rel (0) target = $region37
    $region36: #{gpt_layer_forward.21} parent=1 // pred_region
      %s341 = ssub.s32 512, 512
      %342 = vsyncadd [#allocation6], %s341
      %s343 = sshll.u32 [#allocation5], 4
      %s344 = int_to_ptr.vmem [resolvable:$true] %s343
      %349 = dma.vmem_to_hbm [thread:$0]  %s344, 512, %s6, [#allocation6], 128, 128, 8
    $region37: #{gpt_layer_forward.21} parent=1 // pred_fallthru
      _
    // Predicated region
    $region38: #{gpt_layer_forward.21} parent=1 // pred_check
      _
    $region39: #{gpt_layer_forward.21} parent=1 // pred_check_branch
      %351 = sbr.rel (0) target = $region41
    $region40: #{gpt_layer_forward.21} parent=1 // pred_region
      %352 = dma.done [#allocation4], 512
    $region41: #{gpt_layer_forward.21} parent=1 // pred_fallthru
      _
    // Predicated region
    $region42: #{gpt_layer_forward.21} parent=1 // pred_check
      _
    $region43: #{gpt_layer_forward.21} parent=1 // pred_check_branch
      %354 = sbr.rel (0) target = $region45
    $region44: #{gpt_layer_forward.21} parent=1 // pred_region
      %355 = dma.done [#allocation6], 512
    $region45: #{gpt_layer_forward.21} parent=1 // pred_fallthru
      _
    %356 = vsyncpa [#allocation4], 1
    %357 = vsyncpa [#allocation6], 1

</llo_original>
